<compile_context>
chip_gen: v5e
topology: v5e:2x2
jax: 0.10.0
libtpu: 0.0.40
codegen_flags: <defaults>
</compile_context>

<pallas_src>
import numpy as np
import jax
import jax.numpy as jnp
from jax import lax
from jax.experimental import pallas as pl
from jax.experimental.pallas import tpu as pltpu

# ---- problem dimensions (fixed by the PyTorch module: fc1 expects 3*4*4 = 48) ----
N = 2                        # batch
C_IN, C1, C2 = 4, 2, 3       # channels
H_IN = W_IN = 26             # input spatial size  -> final feature map 3*4*4
K1, K2 = 3, 4                # conv kernel sizes
H1 = H_IN - K1 + 1           # 24, conv1 output spatial
P1 = H1 // 2                 # 12, after first 2x2 pool
H2 = P1 - K2 + 1             # 9,  conv2 output spatial
P2 = (H2 - 2) // 2 + 1       # 4,  after second 2x2 pool (floor)
FLAT = C2 * P2 * P2          # 48
FC1_OUT, FC3_OUT = 8, 10
BN_EPS = 1e-5

PACK1 = C_IN * W_IN          # 104 : conv1 input channels packed along lanes
SL1 = PACK1 - (K1 - 1)       # 102 : width of one shifted conv1 slab
PACK2 = C1 * P1              # 24  : conv2 input channels packed along lanes
SL2 = PACK2 - (K2 - 1)       # 21  : width of one shifted conv2 slab


# ------------------------------- fused kernel ------------------------------- #

def _convbn_fused_kernel(
        x_ref,          # (N, C_IN, 26, 26)       VMEM
        w1row_ref,      # (C1*K1*K1, SL1)         VMEM  packed conv1 weight rows
        sum1_ref,       # (SL1, H1)               VMEM  cross-channel-block sum selector
        r12_ref,        # (P1, H1-1)              VMEM  pool1 row selector
        c12l_ref,       # (H1-1, PACK2)           VMEM  pool1 col selector (channel 0)
        c12r_ref,       # (H1-1, PACK2)           VMEM  pool1 col selector (channel 1)
        w2row_ref,      # (C2*K2*K2, SL2)         VMEM  packed conv2 weight rows
        sum2_ref,       # (SL2, H2)               VMEM
        c4_ref,         # (H2-1, P2)              VMEM  pool2 col selector
        wfc1_ref,       # (FLAT, FC1_OUT)         VMEM  (pre-transposed)
        bfc1_ref,       # (1, FC1_OUT)            VMEM
        wfc3_ref,       # (FC1_OUT, FC3_OUT)      VMEM  (pre-transposed)
        bfc3_ref,       # (1, FC3_OUT)            VMEM
        b1_ref,         # (C1,)  SMEM
        gamma_ref,      # (C1,)  SMEM
        beta_ref,       # (C1,)  SMEM
        b2_ref,         # (C2,)  SMEM
        o_ref,          # (N, FC3_OUT)            VMEM  output
        xp_scr,         # (N, H_IN, PACK1)        VMEM  scratch: lane-packed input
        feat_scr,       # (N, FLAT)               VMEM  scratch: flattened features
):
    f32 = jnp.float32
    # hoist small constant loads out of all loops
    w1r = w1row_ref[...]          # (18, 102)
    w2r = w2row_ref[...]          # (48, 21)
    sum1 = sum1_ref[...]
    sum2 = sum2_ref[...]
    r12 = r12_ref[...]
    c12l = c12l_ref[...]
    c12r = c12r_ref[...]
    c4 = c4_ref[...]

    # ---------------- conv1 (input channels packed along lanes) ----------------
    y1 = [[None] * C1 for _ in range(N)]
    for n in range(N):
        # pack x[n] as (26, C_IN*26): block ci occupies lanes [26*ci, 26*ci+26)
        for ci in range(C_IN):
            xp_scr[n, :, W_IN * ci:W_IN * (ci + 1)] = x_ref[n, ci, :, :]
        xp = xp_scr[n, :, :]                                    # (26, 104)

        accs = [jnp.zeros((H1, SL1), f32) for _ in range(C1)]
        for ki in range(K1):
            for kj in range(K1):
                # one shifted slab per tap, shared by BOTH output channels
                slab = xp[ki:ki + H1, kj:kj + SL1]              # (24, 102)
                for co in range(C1):
                    row = co * K1 * K1 + ki * K1 + kj
                    accs[co] = accs[co] + slab * w1r[row:row + 1, :]
        for co in range(C1):
            # sum the C_IN lane blocks with a tiny MXU matmul, add bias
            y1[n][co] = (jnp.dot(accs[co], sum1, preferred_element_type=f32)
                         + b1_ref[co])                          # (24, 24)

    # ------------- BatchNorm2d, training-mode batch stats (two-pass) -----------
    inv_cnt = 1.0 / float(N * H1 * H1)
    yb = [[None] * C1 for _ in range(N)]
    for co in range(C1):
        mean = sum(jnp.sum(y1[n][co]) for n in range(N)) * inv_cnt
        var = 0.0
        for n in range(N):
            d = y1[n][co] - mean
            var = var + jnp.sum(d * d)
        var = var * inv_cnt                                     # biased variance
        scale = gamma_ref[co] * lax.rsqrt(var + BN_EPS)
        shift = beta_ref[co] - mean * scale
        for n in range(N):
            yb[n][co] = y1[n][co] * scale + shift

    # -------- 2x2/2 max-pool + ReLU, producing a lane-packed (12, 24) map ------
    pp = [None] * N
    for n in range(N):
        m2 = []
        for ci in range(C1):
            a = yb[n][ci]
            mr = jnp.maximum(a[0:H1 - 1, :], a[1:H1, :])            # (23, 24)
            m2.append(jnp.maximum(mr[:, 0:H1 - 1], mr[:, 1:H1]))    # (23, 23)
        # pick even rows/cols + pack both channels along lanes via selection matmuls
        t = (jnp.dot(m2[0], c12l, preferred_element_type=f32)
             + jnp.dot(m2[1], c12r, preferred_element_type=f32))    # (23, 24)
        pp[n] = jnp.maximum(jnp.dot(r12, t, preferred_element_type=f32), 0.0)  # (12,24)

    # ------- conv2 (packed) + ReLU + 2x2/2 max-pool (floor) + flatten ----------
    for n in range(N):
        accs2 = [jnp.zeros((H2, SL2), f32) for _ in range(C2)]
        for ki in range(K2):
            for kj in range(K2):
                slab = pp[n][ki:ki + H2, kj:kj + SL2]               # (9, 21)
                for co in range(C2):
                    row = co * K2 * K2 + ki * K2 + kj
                    accs2[co] = accs2[co] + slab * w2r[row:row + 1, :]
        for co in range(C2):
            z = jnp.maximum(
                jnp.dot(accs2[co], sum2, preferred_element_type=f32) + b2_ref[co],
                0.0)                                                # (9, 9)
            mr = jnp.maximum(z[0:H2 - 1, :], z[1:H2, :])            # (8, 9)
            mz = jnp.maximum(mr[:, 0:H2 - 1], mr[:, 1:H2])          # (8, 8)
            mc = jnp.dot(mz, c4, preferred_element_type=f32)        # (8, 4)
            for p in range(P2):
                col = co * (P2 * P2) + p * P2                       # torch view(-1,48) order
                feat_scr[n:n + 1, col:col + P2] = mc[2 * p:2 * p + 1, :]

    # ----------------------------- fc1 + ReLU + fc3 ----------------------------
    feat = feat_scr[...]                                            # (N, 48)
    h = jnp.maximum(
        jnp.dot(feat, wfc1_ref[...], preferred_element_type=f32) + bfc1_ref[...], 0.0)
    o_ref[...] = jnp.dot(h, wfc3_ref[...], preferred_element_type=f32) + bfc3_ref[...]


# --------------------------------- wrapper ---------------------------------- #

_VMEM = pl.BlockSpec(memory_space=pltpu.MemorySpace.VMEM)
_SMEM = pl.BlockSpec(memory_space=pltpu.MemorySpace.SMEM)


@jax.jit
def convbn_forward(x, kp):
    return pl.pallas_call(
        _convbn_fused_kernel,
        out_shape=jax.ShapeDtypeStruct((N, FC3_OUT), jnp.float32),
        in_specs=[_VMEM] * 13 + [_SMEM] * 4,
        out_specs=_VMEM,
        scratch_shapes=[
            pltpu.VMEM((N, H_IN, PACK1), jnp.float32),   # lane-packed input
            pltpu.VMEM((N, FLAT), jnp.float32),          # flattened features
        ],
    )(x, kp["w1row"], kp["sum1"], kp["r12"], kp["c12l"], kp["c12r"],
      kp["w2row"], kp["sum2"], kp["c4"],
      kp["wfc1t"], kp["bfc1"], kp["wfc3t"], kp["bfc3"],
      kp["b1"], kp["gamma"], kp["beta"], kp["b2"])


# ---------------- one-time parameter packing (outside per-call path) ---------------- #

def prepare_kernel_params(params):
    w1 = np.asarray(params["w1"], dtype=np.float32)      # (C1, C_IN, K1, K1)
    w2 = np.asarray(params["w2"], dtype=np.float32)      # (C2, C1, K2, K2)

    # lane-packed per-tap weight rows: w1row[co*9+ki*3+kj, s] = w1[co, s//26, ki, kj]
    ci1 = np.arange(SL1) // W_IN
    w1row = np.transpose(w1[:, ci1, :, :], (0, 2, 3, 1)).reshape(C1 * K1 * K1, SL1)
    ci2 = np.arange(SL2) // P1
    w2row = np.transpose(w2[:, ci2, :, :], (0, 2, 3, 1)).reshape(C2 * K2 * K2, SL2)

    # cross-channel-block sum selectors (acc @ sum -> conv output)
    sum1 = np.zeros((SL1, H1), np.float32)
    s = np.arange(SL1); c = s % W_IN
    sum1[s[c < H1], c[c < H1]] = 1.0
    sum2 = np.zeros((SL2, H2), np.float32)
    s = np.arange(SL2); c = s % P1
    sum2[s[c < H2], c[c < H2]] = 1.0

    # 2x2/2 pooling selectors (pick even rows / cols; c12r packs channel 1 at lanes 12..23)
    r12 = np.zeros((P1, H1 - 1), np.float32)
    r12[np.arange(P1), 2 * np.arange(P1)] = 1.0
    c12l = np.zeros((H1 - 1, PACK2), np.float32)
    c12l[2 * np.arange(P1), np.arange(P1)] = 1.0
    c12r = np.zeros((H1 - 1, PACK2), np.float32)
    c12r[2 * np.arange(P1), P1 + np.arange(P1)] = 1.0
    c4 = np.zeros((H2 - 1, P2), np.float32)
    c4[2 * np.arange(P2), np.arange(P2)] = 1.0

    kp = dict(
        w1row=w1row, sum1=sum1, r12=r12, c12l=c12l, c12r=c12r,
        w2row=w2row, sum2=sum2, c4=c4,
        wfc1t=np.ascontiguousarray(np.asarray(params["wfc1"], np.float32).T),
        bfc1=np.asarray(params["bfc1"], np.float32).reshape(1, -1),
        wfc3t=np.ascontiguousarray(np.asarray(params["wfc3"], np.float32).T),
        bfc3=np.asarray(params["bfc3"], np.float32).reshape(1, -1),
        b1=np.asarray(params["b1"], np.float32),
        gamma=np.asarray(params["gamma"], np.float32),
        beta=np.asarray(params["beta"], np.float32),
        b2=np.asarray(params["b2"], np.float32),
    )
    return {k: jnp.asarray(v) for k, v in kp.items()}


# --------------------------- params / pure-JAX reference ---------------------------- #

def init_params(key):
    ks = jax.random.split(key, 10)

    def uni(k, shape, fan_in):
        bound = 1.0 / np.sqrt(fan_in)
        return jax.random.uniform(k, shape, jnp.float32, -bound, bound)

    return {
        "w1": uni(ks[0], (C1, C_IN, K1, K1), C_IN * K1 * K1),
        "b1": uni(ks[1], (C1,), C_IN * K1 * K1),
        "gamma": 1.0 + 0.1 * jax.random.normal(ks[2], (C1,), jnp.float32),
        "beta": 0.1 * jax.random.normal(ks[3], (C1,), jnp.float32),
        "w2": uni(ks[4], (C2, C1, K2, K2), C1 * K2 * K2),
        "b2": uni(ks[5], (C2,), C1 * K2 * K2),
        "wfc1": uni(ks[6], (FC1_OUT, FLAT), FLAT),
        "bfc1": uni(ks[7], (FC1_OUT,), FLAT),
        "wfc3": uni(ks[8], (FC3_OUT, FC1_OUT), FC1_OUT),
        "bfc3": uni(ks[9], (FC3_OUT,), FC1_OUT),
    }


def reference_forward(x, p):
    def conv(a, w, b):
        out = lax.conv_general_dilated(
            a, w, window_strides=(1, 1), padding="VALID",
            dimension_numbers=("NCHW", "OIHW", "NCHW"),
            precision=lax.Precision.HIGHEST)
        return out + b[None, :, None, None]

    def maxpool(a):
        return lax.reduce_window(a, -jnp.inf, lax.max,
                                 (1, 1, 2, 2), (1, 1, 2, 2), "VALID")

    h = conv(x, p["w1"], p["b1"])
    mean = h.mean(axis=(0, 2, 3), keepdims=True)
    var = ((h - mean) ** 2).mean(axis=(0, 2, 3), keepdims=True)   # biased
    h = (h - mean) / jnp.sqrt(var + BN_EPS)
    h = h * p["gamma"][None, :, None, None] + p["beta"][None, :, None, None]
    h = jax.nn.relu(maxpool(h))
    h = maxpool(jax.nn.relu(conv(h, p["w2"], p["b2"])))
    h = h.reshape(-1, FLAT)
    h = jax.nn.relu(h @ p["wfc1"].T + p["bfc1"])
    return h @ p["wfc3"].T + p["bfc3"]


if __name__ == "__main__":
    key = jax.random.PRNGKey(0)
    kx, kparam = jax.random.split(key)
    x = jax.random.normal(kx, (N, C_IN, H_IN, W_IN), jnp.float32)
    params = init_params(kparam)
    kp = prepare_kernel_params(params)        # one-time kernel-ready layouts

    out = convbn_forward(x, kp)
    out = jax.block_until_ready(out)
    assert out.shape == (N, FC3_OUT) and out.dtype == jnp.float32

    ref = reference_forward(x, params)
    np.testing.assert_allclose(np.asarray(out), np.asarray(ref), rtol=5e-2, atol=5e-2)

    print("KERNEL_OK")
</pallas_src>

<mosaic_0001>
module attributes {stable_mosaic.version = 11 : i64} {
  func.func @_convbn_fused_kernel(%arg0: memref<2x4x26x26xf32, #tpu.memory_space<vmem>>, %arg1: memref<18x102xf32, #tpu.memory_space<vmem>>, %arg2: memref<102x24xf32, #tpu.memory_space<vmem>>, %arg3: memref<12x23xf32, #tpu.memory_space<vmem>>, %arg4: memref<23x24xf32, #tpu.memory_space<vmem>>, %arg5: memref<23x24xf32, #tpu.memory_space<vmem>>, %arg6: memref<48x21xf32, #tpu.memory_space<vmem>>, %arg7: memref<21x9xf32, #tpu.memory_space<vmem>>, %arg8: memref<8x4xf32, #tpu.memory_space<vmem>>, %arg9: memref<48x8xf32, #tpu.memory_space<vmem>>, %arg10: memref<1x8xf32, #tpu.memory_space<vmem>>, %arg11: memref<8x10xf32, #tpu.memory_space<vmem>>, %arg12: memref<1x10xf32, #tpu.memory_space<vmem>>, %arg13: memref<2xf32, #tpu.memory_space<smem>>, %arg14: memref<2xf32, #tpu.memory_space<smem>>, %arg15: memref<2xf32, #tpu.memory_space<smem>>, %arg16: memref<3xf32, #tpu.memory_space<smem>>, %arg17: memref<2x10xf32, #tpu.memory_space<vmem>>, %arg18: memref<2x26x104xf32, #tpu.memory_space<vmem>>, %arg19: memref<2x48xf32, #tpu.memory_space<vmem>>) attributes {dimension_semantics = [], scalar_prefetch = 0 : i64, scratch_operands = 2 : i64, tpu.core_type = #tpu.core_type<tc>} {
    %c0 = arith.constant 0 : index
    %c0_0 = arith.constant 0 : index
    %0 = vector.load %arg1[%c0, %c0_0] : memref<18x102xf32, #tpu.memory_space<vmem>>, vector<18x102xf32>
    %c0_1 = arith.constant 0 : index
    %c0_2 = arith.constant 0 : index
    %1 = vector.load %arg6[%c0_1, %c0_2] : memref<48x21xf32, #tpu.memory_space<vmem>>, vector<48x21xf32>
    %c0_3 = arith.constant 0 : index
    %c0_4 = arith.constant 0 : index
    %2 = vector.load %arg2[%c0_3, %c0_4] : memref<102x24xf32, #tpu.memory_space<vmem>>, vector<102x24xf32>
    %c0_5 = arith.constant 0 : index
    %c0_6 = arith.constant 0 : index
    %3 = vector.load %arg7[%c0_5, %c0_6] : memref<21x9xf32, #tpu.memory_space<vmem>>, vector<21x9xf32>
    %c0_7 = arith.constant 0 : index
    %c0_8 = arith.constant 0 : index
    %4 = vector.load %arg3[%c0_7, %c0_8] : memref<12x23xf32, #tpu.memory_space<vmem>>, vector<12x23xf32>
    %c0_9 = arith.constant 0 : index
    %c0_10 = arith.constant 0 : index
    %5 = vector.load %arg4[%c0_9, %c0_10] : memref<23x24xf32, #tpu.memory_space<vmem>>, vector<23x24xf32>
    %c0_11 = arith.constant 0 : index
    %c0_12 = arith.constant 0 : index
    %6 = vector.load %arg5[%c0_11, %c0_12] : memref<23x24xf32, #tpu.memory_space<vmem>>, vector<23x24xf32>
    %c0_13 = arith.constant 0 : index
    %c0_14 = arith.constant 0 : index
    %7 = vector.load %arg8[%c0_13, %c0_14] : memref<8x4xf32, #tpu.memory_space<vmem>>, vector<8x4xf32>
    %c0_15 = arith.constant 0 : index
    %c0_16 = arith.constant 0 : index
    %c0_17 = arith.constant 0 : index
    %c0_18 = arith.constant 0 : index
    %8 = vector.load %arg0[%c0_15, %c0_16, %c0_17, %c0_18] : memref<2x4x26x26xf32, #tpu.memory_space<vmem>>, vector<1x1x26x26xf32>
    %9 = vector.shape_cast %8 : vector<1x1x26x26xf32> to vector<26x26xf32>
    %c0_19 = arith.constant 0 : index
    %c0_20 = arith.constant 0 : index
    %c0_21 = arith.constant 0 : index
    %10 = vector.load %arg18[%c0_19, %c0_20, %c0_21] : memref<2x26x104xf32, #tpu.memory_space<vmem>>, vector<1x26x26xf32>
    %11 = vector.shape_cast %10 : vector<1x26x26xf32> to vector<26x26xf32>
    %12 = vector.shape_cast %9 : vector<26x26xf32> to vector<1x26x26xf32>
    tpu.vector_store %arg18[%c0_19, %c0_20, %c0_21], %12 {strides = array<i32>} : memref<2x26x104xf32, #tpu.memory_space<vmem>>, vector<1x26x26xf32>,
    %c0_22 = arith.constant 0 : index
    %c1 = arith.constant 1 : index
    %c0_23 = arith.constant 0 : index
    %c0_24 = arith.constant 0 : index
    %13 = vector.load %arg0[%c0_22, %c1, %c0_23, %c0_24] : memref<2x4x26x26xf32, #tpu.memory_space<vmem>>, vector<1x1x26x26xf32>
    %14 = vector.shape_cast %13 : vector<1x1x26x26xf32> to vector<26x26xf32>
    %c0_25 = arith.constant 0 : index
    %c0_26 = arith.constant 0 : index
    %c26 = arith.constant 26 : index
    %15 = vector.load %arg18[%c0_25, %c0_26, %c26] : memref<2x26x104xf32, #tpu.memory_space<vmem>>, vector<1x26x26xf32>
    %16 = vector.shape_cast %15 : vector<1x26x26xf32> to vector<26x26xf32>
    %17 = vector.shape_cast %14 : vector<26x26xf32> to vector<1x26x26xf32>
    tpu.vector_store %arg18[%c0_25, %c0_26, %c26], %17 {strides = array<i32>} : memref<2x26x104xf32, #tpu.memory_space<vmem>>, vector<1x26x26xf32>,
    %c0_27 = arith.constant 0 : index
    %c2 = arith.constant 2 : index
    %c0_28 = arith.constant 0 : index
    %c0_29 = arith.constant 0 : index
    %18 = vector.load %arg0[%c0_27, %c2, %c0_28, %c0_29] : memref<2x4x26x26xf32, #tpu.memory_space<vmem>>, vector<1x1x26x26xf32>
    %19 = vector.shape_cast %18 : vector<1x1x26x26xf32> to vector<26x26xf32>
    %c0_30 = arith.constant 0 : index
    %c0_31 = arith.constant 0 : index
    %c52 = arith.constant 52 : index
    %20 = vector.load %arg18[%c0_30, %c0_31, %c52] : memref<2x26x104xf32, #tpu.memory_space<vmem>>, vector<1x26x26xf32>
    %21 = vector.shape_cast %20 : vector<1x26x26xf32> to vector<26x26xf32>
    %22 = vector.shape_cast %19 : vector<26x26xf32> to vector<1x26x26xf32>
    tpu.vector_store %arg18[%c0_30, %c0_31, %c52], %22 {strides = array<i32>} : memref<2x26x104xf32, #tpu.memory_space<vmem>>, vector<1x26x26xf32>,
    %c0_32 = arith.constant 0 : index
    %c3 = arith.constant 3 : index
    %c0_33 = arith.constant 0 : index
    %c0_34 = arith.constant 0 : index
    %23 = vector.load %arg0[%c0_32, %c3, %c0_33, %c0_34] : memref<2x4x26x26xf32, #tpu.memory_space<vmem>>, vector<1x1x26x26xf32>
    %24 = vector.shape_cast %23 : vector<1x1x26x26xf32> to vector<26x26xf32>
    %c0_35 = arith.constant 0 : index
    %c0_36 = arith.constant 0 : index
    %c78 = arith.constant 78 : index
    %25 = vector.load %arg18[%c0_35, %c0_36, %c78] : memref<2x26x104xf32, #tpu.memory_space<vmem>>, vector<1x26x26xf32>
    %26 = vector.shape_cast %25 : vector<1x26x26xf32> to vector<26x26xf32>
    %27 = vector.shape_cast %24 : vector<26x26xf32> to vector<1x26x26xf32>
    tpu.vector_store %arg18[%c0_35, %c0_36, %c78], %27 {strides = array<i32>} : memref<2x26x104xf32, #tpu.memory_space<vmem>>, vector<1x26x26xf32>,
    %c0_37 = arith.constant 0 : index
    %c0_38 = arith.constant 0 : index
    %c0_39 = arith.constant 0 : index
    %28 = vector.load %arg18[%c0_37, %c0_38, %c0_39] : memref<2x26x104xf32, #tpu.memory_space<vmem>>, vector<1x26x104xf32>
    %29 = vector.shape_cast %28 : vector<1x26x104xf32> to vector<26x104xf32>
    %cst = arith.constant 0.000000e+00 : f32
    %30 = vector.broadcast %cst : f32 to vector<24x102xf32>
    %cst_40 = arith.constant 0.000000e+00 : f32
    %31 = vector.broadcast %cst_40 : f32 to vector<24x102xf32>
    %32 = vector.extract_strided_slice %29 {offsets = [0, 0], sizes = [24, 102], strides = [1, 1]} : vector<26x104xf32> to vector<24x102xf32>
    %33 = vector.extract_strided_slice %0 {offsets = [0, 0], sizes = [1, 102], strides = [1, 1]} : vector<18x102xf32> to vector<1x102xf32>
    %34 = vector.broadcast %33 : vector<1x102xf32> to vector<24x102xf32>
    %35 = arith.mulf %32, %34 : vector<24x102xf32>
    %36 = arith.addf %30, %35 : vector<24x102xf32>
    %37 = vector.extract_strided_slice %0 {offsets = [9, 0], sizes = [1, 102], strides = [1, 1]} : vector<18x102xf32> to vector<1x102xf32>
    %38 = vector.broadcast %37 : vector<1x102xf32> to vector<24x102xf32>
    %39 = arith.mulf %32, %38 : vector<24x102xf32>
    %40 = arith.addf %31, %39 : vector<24x102xf32>
    %41 = vector.extract_strided_slice %29 {offsets = [0, 1], sizes = [24, 102], strides = [1, 1]} : vector<26x104xf32> to vector<24x102xf32>
    %42 = vector.extract_strided_slice %0 {offsets = [1, 0], sizes = [1, 102], strides = [1, 1]} : vector<18x102xf32> to vector<1x102xf32>
    %43 = vector.broadcast %42 : vector<1x102xf32> to vector<24x102xf32>
    %44 = arith.mulf %41, %43 : vector<24x102xf32>
    %45 = arith.addf %36, %44 : vector<24x102xf32>
    %46 = vector.extract_strided_slice %0 {offsets = [10, 0], sizes = [1, 102], strides = [1, 1]} : vector<18x102xf32> to vector<1x102xf32>
    %47 = vector.broadcast %46 : vector<1x102xf32> to vector<24x102xf32>
    %48 = arith.mulf %41, %47 : vector<24x102xf32>
    %49 = arith.addf %40, %48 : vector<24x102xf32>
    %50 = vector.extract_strided_slice %29 {offsets = [0, 2], sizes = [24, 102], strides = [1, 1]} : vector<26x104xf32> to vector<24x102xf32>
    %51 = vector.extract_strided_slice %0 {offsets = [2, 0], sizes = [1, 102], strides = [1, 1]} : vector<18x102xf32> to vector<1x102xf32>
    %52 = vector.broadcast %51 : vector<1x102xf32> to vector<24x102xf32>
    %53 = arith.mulf %50, %52 : vector<24x102xf32>
    %54 = arith.addf %45, %53 : vector<24x102xf32>
    %55 = vector.extract_strided_slice %0 {offsets = [11, 0], sizes = [1, 102], strides = [1, 1]} : vector<18x102xf32> to vector<1x102xf32>
    %56 = vector.broadcast %55 : vector<1x102xf32> to vector<24x102xf32>
    %57 = arith.mulf %50, %56 : vector<24x102xf32>
    %58 = arith.addf %49, %57 : vector<24x102xf32>
    %59 = vector.extract_strided_slice %29 {offsets = [1, 0], sizes = [24, 102], strides = [1, 1]} : vector<26x104xf32> to vector<24x102xf32>
    %60 = vector.extract_strided_slice %0 {offsets = [3, 0], sizes = [1, 102], strides = [1, 1]} : vector<18x102xf32> to vector<1x102xf32>
    %61 = vector.broadcast %60 : vector<1x102xf32> to vector<24x102xf32>
    %62 = arith.mulf %59, %61 : vector<24x102xf32>
    %63 = arith.addf %54, %62 : vector<24x102xf32>
    %64 = vector.extract_strided_slice %0 {offsets = [12, 0], sizes = [1, 102], strides = [1, 1]} : vector<18x102xf32> to vector<1x102xf32>
    %65 = vector.broadcast %64 : vector<1x102xf32> to vector<24x102xf32>
    %66 = arith.mulf %59, %65 : vector<24x102xf32>
    %67 = arith.addf %58, %66 : vector<24x102xf32>
    %68 = vector.extract_strided_slice %29 {offsets = [1, 1], sizes = [24, 102], strides = [1, 1]} : vector<26x104xf32> to vector<24x102xf32>
    %69 = vector.extract_strided_slice %0 {offsets = [4, 0], sizes = [1, 102], strides = [1, 1]} : vector<18x102xf32> to vector<1x102xf32>
    %70 = vector.broadcast %69 : vector<1x102xf32> to vector<24x102xf32>
    %71 = arith.mulf %68, %70 : vector<24x102xf32>
    %72 = arith.addf %63, %71 : vector<24x102xf32>
    %73 = vector.extract_strided_slice %0 {offsets = [13, 0], sizes = [1, 102], strides = [1, 1]} : vector<18x102xf32> to vector<1x102xf32>
    %74 = vector.broadcast %73 : vector<1x102xf32> to vector<24x102xf32>
    %75 = arith.mulf %68, %74 : vector<24x102xf32>
    %76 = arith.addf %67, %75 : vector<24x102xf32>
    %77 = vector.extract_strided_slice %29 {offsets = [1, 2], sizes = [24, 102], strides = [1, 1]} : vector<26x104xf32> to vector<24x102xf32>
    %78 = vector.extract_strided_slice %0 {offsets = [5, 0], sizes = [1, 102], strides = [1, 1]} : vector<18x102xf32> to vector<1x102xf32>
    %79 = vector.broadcast %78 : vector<1x102xf32> to vector<24x102xf32>
    %80 = arith.mulf %77, %79 : vector<24x102xf32>
    %81 = arith.addf %72, %80 : vector<24x102xf32>
    %82 = vector.extract_strided_slice %0 {offsets = [14, 0], sizes = [1, 102], strides = [1, 1]} : vector<18x102xf32> to vector<1x102xf32>
    %83 = vector.broadcast %82 : vector<1x102xf32> to vector<24x102xf32>
    %84 = arith.mulf %77, %83 : vector<24x102xf32>
    %85 = arith.addf %76, %84 : vector<24x102xf32>
    %86 = vector.extract_strided_slice %29 {offsets = [2, 0], sizes = [24, 102], strides = [1, 1]} : vector<26x104xf32> to vector<24x102xf32>
    %87 = vector.extract_strided_slice %0 {offsets = [6, 0], sizes = [1, 102], strides = [1, 1]} : vector<18x102xf32> to vector<1x102xf32>
    %88 = vector.broadcast %87 : vector<1x102xf32> to vector<24x102xf32>
    %89 = arith.mulf %86, %88 : vector<24x102xf32>
    %90 = arith.addf %81, %89 : vector<24x102xf32>
    %91 = vector.extract_strided_slice %0 {offsets = [15, 0], sizes = [1, 102], strides = [1, 1]} : vector<18x102xf32> to vector<1x102xf32>
    %92 = vector.broadcast %91 : vector<1x102xf32> to vector<24x102xf32>
    %93 = arith.mulf %86, %92 : vector<24x102xf32>
    %94 = arith.addf %85, %93 : vector<24x102xf32>
    %95 = vector.extract_strided_slice %29 {offsets = [2, 1], sizes = [24, 102], strides = [1, 1]} : vector<26x104xf32> to vector<24x102xf32>
    %96 = vector.extract_strided_slice %0 {offsets = [7, 0], sizes = [1, 102], strides = [1, 1]} : vector<18x102xf32> to vector<1x102xf32>
    %97 = vector.broadcast %96 : vector<1x102xf32> to vector<24x102xf32>
    %98 = arith.mulf %95, %97 : vector<24x102xf32>
    %99 = arith.addf %90, %98 : vector<24x102xf32>
    %100 = vector.extract_strided_slice %0 {offsets = [16, 0], sizes = [1, 102], strides = [1, 1]} : vector<18x102xf32> to vector<1x102xf32>
    %101 = vector.broadcast %100 : vector<1x102xf32> to vector<24x102xf32>
    %102 = arith.mulf %95, %101 : vector<24x102xf32>
    %103 = arith.addf %94, %102 : vector<24x102xf32>
    %104 = vector.extract_strided_slice %29 {offsets = [2, 2], sizes = [24, 102], strides = [1, 1]} : vector<26x104xf32> to vector<24x102xf32>
    %105 = vector.extract_strided_slice %0 {offsets = [8, 0], sizes = [1, 102], strides = [1, 1]} : vector<18x102xf32> to vector<1x102xf32>
    %106 = vector.broadcast %105 : vector<1x102xf32> to vector<24x102xf32>
    %107 = arith.mulf %104, %106 : vector<24x102xf32>
    %108 = arith.addf %99, %107 : vector<24x102xf32>
    %109 = vector.extract_strided_slice %0 {offsets = [17, 0], sizes = [1, 102], strides = [1, 1]} : vector<18x102xf32> to vector<1x102xf32>
    %110 = vector.broadcast %109 : vector<1x102xf32> to vector<24x102xf32>
    %111 = arith.mulf %104, %110 : vector<24x102xf32>
    %112 = arith.addf %103, %111 : vector<24x102xf32>
    %cst_41 = arith.constant dense<0.000000e+00> : vector<24x24xf32>
    %113 = tpu.matmul %108, %2, %cst_41 {dimension_numbers = #tpu.dot_dimension_numbers<[1], [0], [0], [1], [0, 0, 1, 1], [], []>} : vector<24x102xf32>, vector<102x24xf32>, vector<24x24xf32> -> vector<24x24xf32>
    %c0_42 = arith.constant 0 : index
    %114 = memref.load %arg13[%c0_42] : memref<2xf32, #tpu.memory_space<smem>>
    %115 = vector.broadcast %114 : f32 to vector<24x24xf32>
    %116 = arith.addf %113, %115 : vector<24x24xf32>
    %cst_43 = arith.constant dense<0.000000e+00> : vector<24x24xf32>
    %117 = tpu.matmul %112, %2, %cst_43 {dimension_numbers = #tpu.dot_dimension_numbers<[1], [0], [0], [1], [0, 0, 1, 1], [], []>} : vector<24x102xf32>, vector<102x24xf32>, vector<24x24xf32> -> vector<24x24xf32>
    %c1_44 = arith.constant 1 : index
    %118 = memref.load %arg13[%c1_44] : memref<2xf32, #tpu.memory_space<smem>>
    %119 = vector.broadcast %118 : f32 to vector<24x24xf32>
    %120 = arith.addf %117, %119 : vector<24x24xf32>
    %c1_45 = arith.constant 1 : index
    %c0_46 = arith.constant 0 : index
    %c0_47 = arith.constant 0 : index
    %c0_48 = arith.constant 0 : index
    %121 = vector.load %arg0[%c1_45, %c0_46, %c0_47, %c0_48] : memref<2x4x26x26xf32, #tpu.memory_space<vmem>>, vector<1x1x26x26xf32>
    %122 = vector.shape_cast %121 : vector<1x1x26x26xf32> to vector<26x26xf32>
    %c1_49 = arith.constant 1 : index
    %c0_50 = arith.constant 0 : index
    %c0_51 = arith.constant 0 : index
    %123 = vector.load %arg18[%c1_49, %c0_50, %c0_51] : memref<2x26x104xf32, #tpu.memory_space<vmem>>, vector<1x26x26xf32>
    %124 = vector.shape_cast %123 : vector<1x26x26xf32> to vector<26x26xf32>
    %125 = vector.shape_cast %122 : vector<26x26xf32> to vector<1x26x26xf32>
    tpu.vector_store %arg18[%c1_49, %c0_50, %c0_51], %125 {strides = array<i32>} : memref<2x26x104xf32, #tpu.memory_space<vmem>>, vector<1x26x26xf32>,
    %c1_52 = arith.constant 1 : index
    %c1_53 = arith.constant 1 : index
    %c0_54 = arith.constant 0 : index
    %c0_55 = arith.constant 0 : index
    %126 = vector.load %arg0[%c1_52, %c1_53, %c0_54, %c0_55] : memref<2x4x26x26xf32, #tpu.memory_space<vmem>>, vector<1x1x26x26xf32>
    %127 = vector.shape_cast %126 : vector<1x1x26x26xf32> to vector<26x26xf32>
    %c1_56 = arith.constant 1 : index
    %c0_57 = arith.constant 0 : index
    %c26_58 = arith.constant 26 : index
    %128 = vector.load %arg18[%c1_56, %c0_57, %c26_58] : memref<2x26x104xf32, #tpu.memory_space<vmem>>, vector<1x26x26xf32>
    %129 = vector.shape_cast %128 : vector<1x26x26xf32> to vector<26x26xf32>
    %130 = vector.shape_cast %127 : vector<26x26xf32> to vector<1x26x26xf32>
    tpu.vector_store %arg18[%c1_56, %c0_57, %c26_58], %130 {strides = array<i32>} : memref<2x26x104xf32, #tpu.memory_space<vmem>>, vector<1x26x26xf32>,
    %c1_59 = arith.constant 1 : index
    %c2_60 = arith.constant 2 : index
    %c0_61 = arith.constant 0 : index
    %c0_62 = arith.constant 0 : index
    %131 = vector.load %arg0[%c1_59, %c2_60, %c0_61, %c0_62] : memref<2x4x26x26xf32, #tpu.memory_space<vmem>>, vector<1x1x26x26xf32>
    %132 = vector.shape_cast %131 : vector<1x1x26x26xf32> to vector<26x26xf32>
    %c1_63 = arith.constant 1 : index
    %c0_64 = arith.constant 0 : index
    %c52_65 = arith.constant 52 : index
    %133 = vector.load %arg18[%c1_63, %c0_64, %c52_65] : memref<2x26x104xf32, #tpu.memory_space<vmem>>, vector<1x26x26xf32>
    %134 = vector.shape_cast %133 : vector<1x26x26xf32> to vector<26x26xf32>
    %135 = vector.shape_cast %132 : vector<26x26xf32> to vector<1x26x26xf32>
    tpu.vector_store %arg18[%c1_63, %c0_64, %c52_65], %135 {strides = array<i32>} : memref<2x26x104xf32, #tpu.memory_space<vmem>>, vector<1x26x26xf32>,
    %c1_66 = arith.constant 1 : index
    %c3_67 = arith.constant 3 : index
    %c0_68 = arith.constant 0 : index
    %c0_69 = arith.constant 0 : index
    %136 = vector.load %arg0[%c1_66, %c3_67, %c0_68, %c0_69] : memref<2x4x26x26xf32, #tpu.memory_space<vmem>>, vector<1x1x26x26xf32>
    %137 = vector.shape_cast %136 : vector<1x1x26x26xf32> to vector<26x26xf32>
    %c1_70 = arith.constant 1 : index
    %c0_71 = arith.constant 0 : index
    %c78_72 = arith.constant 78 : index
    %138 = vector.load %arg18[%c1_70, %c0_71, %c78_72] : memref<2x26x104xf32, #tpu.memory_space<vmem>>, vector<1x26x26xf32>
    %139 = vector.shape_cast %138 : vector<1x26x26xf32> to vector<26x26xf32>
    %140 = vector.shape_cast %137 : vector<26x26xf32> to vector<1x26x26xf32>
    tpu.vector_store %arg18[%c1_70, %c0_71, %c78_72], %140 {strides = array<i32>} : memref<2x26x104xf32, #tpu.memory_space<vmem>>, vector<1x26x26xf32>,
    %c1_73 = arith.constant 1 : index
    %c0_74 = arith.constant 0 : index
    %c0_75 = arith.constant 0 : index
    %141 = vector.load %arg18[%c1_73, %c0_74, %c0_75] : memref<2x26x104xf32, #tpu.memory_space<vmem>>, vector<1x26x104xf32>
    %142 = vector.shape_cast %141 : vector<1x26x104xf32> to vector<26x104xf32>
    %cst_76 = arith.constant 0.000000e+00 : f32
    %143 = vector.broadcast %cst_76 : f32 to vector<24x102xf32>
    %cst_77 = arith.constant 0.000000e+00 : f32
    %144 = vector.broadcast %cst_77 : f32 to vector<24x102xf32>
    %145 = vector.extract_strided_slice %142 {offsets = [0, 0], sizes = [24, 102], strides = [1, 1]} : vector<26x104xf32> to vector<24x102xf32>
    %146 = vector.extract_strided_slice %0 {offsets = [0, 0], sizes = [1, 102], strides = [1, 1]} : vector<18x102xf32> to vector<1x102xf32>
    %147 = vector.broadcast %146 : vector<1x102xf32> to vector<24x102xf32>
    %148 = arith.mulf %145, %147 : vector<24x102xf32>
    %149 = arith.addf %143, %148 : vector<24x102xf32>
    %150 = vector.extract_strided_slice %0 {offsets = [9, 0], sizes = [1, 102], strides = [1, 1]} : vector<18x102xf32> to vector<1x102xf32>
    %151 = vector.broadcast %150 : vector<1x102xf32> to vector<24x102xf32>
    %152 = arith.mulf %145, %151 : vector<24x102xf32>
    %153 = arith.addf %144, %152 : vector<24x102xf32>
    %154 = vector.extract_strided_slice %142 {offsets = [0, 1], sizes = [24, 102], strides = [1, 1]} : vector<26x104xf32> to vector<24x102xf32>
    %155 = vector.extract_strided_slice %0 {offsets = [1, 0], sizes = [1, 102], strides = [1, 1]} : vector<18x102xf32> to vector<1x102xf32>
    %156 = vector.broadcast %155 : vector<1x102xf32> to vector<24x102xf32>
    %157 = arith.mulf %154, %156 : vector<24x102xf32>
    %158 = arith.addf %149, %157 : vector<24x102xf32>
    %159 = vector.extract_strided_slice %0 {offsets = [10, 0], sizes = [1, 102], strides = [1, 1]} : vector<18x102xf32> to vector<1x102xf32>
    %160 = vector.broadcast %159 : vector<1x102xf32> to vector<24x102xf32>
    %161 = arith.mulf %154, %160 : vector<24x102xf32>
    %162 = arith.addf %153, %161 : vector<24x102xf32>
    %163 = vector.extract_strided_slice %142 {offsets = [0, 2], sizes = [24, 102], strides = [1, 1]} : vector<26x104xf32> to vector<24x102xf32>
    %164 = vector.extract_strided_slice %0 {offsets = [2, 0], sizes = [1, 102], strides = [1, 1]} : vector<18x102xf32> to vector<1x102xf32>
    %165 = vector.broadcast %164 : vector<1x102xf32> to vector<24x102xf32>
    %166 = arith.mulf %163, %165 : vector<24x102xf32>
    %167 = arith.addf %158, %166 : vector<24x102xf32>
    %168 = vector.extract_strided_slice %0 {offsets = [11, 0], sizes = [1, 102], strides = [1, 1]} : vector<18x102xf32> to vector<1x102xf32>
    %169 = vector.broadcast %168 : vector<1x102xf32> to vector<24x102xf32>
    %170 = arith.mulf %163, %169 : vector<24x102xf32>
    %171 = arith.addf %162, %170 : vector<24x102xf32>
    %172 = vector.extract_strided_slice %142 {offsets = [1, 0], sizes = [24, 102], strides = [1, 1]} : vector<26x104xf32> to vector<24x102xf32>
    %173 = vector.extract_strided_slice %0 {offsets = [3, 0], sizes = [1, 102], strides = [1, 1]} : vector<18x102xf32> to vector<1x102xf32>
    %174 = vector.broadcast %173 : vector<1x102xf32> to vector<24x102xf32>
    %175 = arith.mulf %172, %174 : vector<24x102xf32>
    %176 = arith.addf %167, %175 : vector<24x102xf32>
    %177 = vector.extract_strided_slice %0 {offsets = [12, 0], sizes = [1, 102], strides = [1, 1]} : vector<18x102xf32> to vector<1x102xf32>
    %178 = vector.broadcast %177 : vector<1x102xf32> to vector<24x102xf32>
    %179 = arith.mulf %172, %178 : vector<24x102xf32>
    %180 = arith.addf %171, %179 : vector<24x102xf32>
    %181 = vector.extract_strided_slice %142 {offsets = [1, 1], sizes = [24, 102], strides = [1, 1]} : vector<26x104xf32> to vector<24x102xf32>
    %182 = vector.extract_strided_slice %0 {offsets = [4, 0], sizes = [1, 102], strides = [1, 1]} : vector<18x102xf32> to vector<1x102xf32>
    %183 = vector.broadcast %182 : vector<1x102xf32> to vector<24x102xf32>
    %184 = arith.mulf %181, %183 : vector<24x102xf32>
    %185 = arith.addf %176, %184 : vector<24x102xf32>
    %186 = vector.extract_strided_slice %0 {offsets = [13, 0], sizes = [1, 102], strides = [1, 1]} : vector<18x102xf32> to vector<1x102xf32>
    %187 = vector.broadcast %186 : vector<1x102xf32> to vector<24x102xf32>
    %188 = arith.mulf %181, %187 : vector<24x102xf32>
    %189 = arith.addf %180, %188 : vector<24x102xf32>
    %190 = vector.extract_strided_slice %142 {offsets = [1, 2], sizes = [24, 102], strides = [1, 1]} : vector<26x104xf32> to vector<24x102xf32>
    %191 = vector.extract_strided_slice %0 {offsets = [5, 0], sizes = [1, 102], strides = [1, 1]} : vector<18x102xf32> to vector<1x102xf32>
    %192 = vector.broadcast %191 : vector<1x102xf32> to vector<24x102xf32>
    %193 = arith.mulf %190, %192 : vector<24x102xf32>
    %194 = arith.addf %185, %193 : vector<24x102xf32>
    %195 = vector.extract_strided_slice %0 {offsets = [14, 0], sizes = [1, 102], strides = [1, 1]} : vector<18x102xf32> to vector<1x102xf32>
    %196 = vector.broadcast %195 : vector<1x102xf32> to vector<24x102xf32>
    %197 = arith.mulf %190, %196 : vector<24x102xf32>
    %198 = arith.addf %189, %197 : vector<24x102xf32>
    %199 = vector.extract_strided_slice %142 {offsets = [2, 0], sizes = [24, 102], strides = [1, 1]} : vector<26x104xf32> to vector<24x102xf32>
    %200 = vector.extract_strided_slice %0 {offsets = [6, 0], sizes = [1, 102], strides = [1, 1]} : vector<18x102xf32> to vector<1x102xf32>
    %201 = vector.broadcast %200 : vector<1x102xf32> to vector<24x102xf32>
    %202 = arith.mulf %199, %201 : vector<24x102xf32>
    %203 = arith.addf %194, %202 : vector<24x102xf32>
    %204 = vector.extract_strided_slice %0 {offsets = [15, 0], sizes = [1, 102], strides = [1, 1]} : vector<18x102xf32> to vector<1x102xf32>
    %205 = vector.broadcast %204 : vector<1x102xf32> to vector<24x102xf32>
    %206 = arith.mulf %199, %205 : vector<24x102xf32>
    %207 = arith.addf %198, %206 : vector<24x102xf32>
    %208 = vector.extract_strided_slice %142 {offsets = [2, 1], sizes = [24, 102], strides = [1, 1]} : vector<26x104xf32> to vector<24x102xf32>
    %209 = vector.extract_strided_slice %0 {offsets = [7, 0], sizes = [1, 102], strides = [1, 1]} : vector<18x102xf32> to vector<1x102xf32>
    %210 = vector.broadcast %209 : vector<1x102xf32> to vector<24x102xf32>
    %211 = arith.mulf %208, %210 : vector<24x102xf32>
    %212 = arith.addf %203, %211 : vector<24x102xf32>
    %213 = vector.extract_strided_slice %0 {offsets = [16, 0], sizes = [1, 102], strides = [1, 1]} : vector<18x102xf32> to vector<1x102xf32>
    %214 = vector.broadcast %213 : vector<1x102xf32> to vector<24x102xf32>
    %215 = arith.mulf %208, %214 : vector<24x102xf32>
    %216 = arith.addf %207, %215 : vector<24x102xf32>
    %217 = vector.extract_strided_slice %142 {offsets = [2, 2], sizes = [24, 102], strides = [1, 1]} : vector<26x104xf32> to vector<24x102xf32>
    %218 = vector.extract_strided_slice %0 {offsets = [8, 0], sizes = [1, 102], strides = [1, 1]} : vector<18x102xf32> to vector<1x102xf32>
    %219 = vector.broadcast %218 : vector<1x102xf32> to vector<24x102xf32>
    %220 = arith.mulf %217, %219 : vector<24x102xf32>
    %221 = arith.addf %212, %220 : vector<24x102xf32>
    %222 = vector.extract_strided_slice %0 {offsets = [17, 0], sizes = [1, 102], strides = [1, 1]} : vector<18x102xf32> to vector<1x102xf32>
    %223 = vector.broadcast %222 : vector<1x102xf32> to vector<24x102xf32>
    %224 = arith.mulf %217, %223 : vector<24x102xf32>
    %225 = arith.addf %216, %224 : vector<24x102xf32>
    %cst_78 = arith.constant dense<0.000000e+00> : vector<24x24xf32>
    %226 = tpu.matmul %221, %2, %cst_78 {dimension_numbers = #tpu.dot_dimension_numbers<[1], [0], [0], [1], [0, 0, 1, 1], [], []>} : vector<24x102xf32>, vector<102x24xf32>, vector<24x24xf32> -> vector<24x24xf32>
    %c0_79 = arith.constant 0 : index
    %227 = memref.load %arg13[%c0_79] : memref<2xf32, #tpu.memory_space<smem>>
    %228 = vector.broadcast %227 : f32 to vector<24x24xf32>
    %229 = arith.addf %226, %228 : vector<24x24xf32>
    %cst_80 = arith.constant dense<0.000000e+00> : vector<24x24xf32>
    %230 = tpu.matmul %225, %2, %cst_80 {dimension_numbers = #tpu.dot_dimension_numbers<[1], [0], [0], [1], [0, 0, 1, 1], [], []>} : vector<24x102xf32>, vector<102x24xf32>, vector<24x24xf32> -> vector<24x24xf32>
    %c1_81 = arith.constant 1 : index
    %231 = memref.load %arg13[%c1_81] : memref<2xf32, #tpu.memory_space<smem>>
    %232 = vector.broadcast %231 : f32 to vector<24x24xf32>
    %233 = arith.addf %230, %232 : vector<24x24xf32>
    %234 = vector.shape_cast %116 : vector<24x24xf32> to vector<1x24x24xf32>
    %cst_82 = arith.constant dense<0.000000e+00> : vector<1xf32>
    %235 = vector.multi_reduction <add>, %234, %cst_82 [1, 2] : vector<1x24x24xf32> to vector<1xf32>
    %236 = vector.shape_cast %235 : vector<1xf32> to vector<1x1x1xf32>
    %237 = vector.extract %236[0, 0, 0] : f32 from vector<1x1x1xf32>
    %cst_83 = arith.constant 0.000000e+00 : f32
    %238 = arith.addf %cst_83, %237 : f32
    %239 = vector.shape_cast %229 : vector<24x24xf32> to vector<1x24x24xf32>
    %cst_84 = arith.constant dense<0.000000e+00> : vector<1xf32>
    %240 = vector.multi_reduction <add>, %239, %cst_84 [1, 2] : vector<1x24x24xf32> to vector<1xf32>
    %241 = vector.shape_cast %240 : vector<1xf32> to vector<1x1x1xf32>
    %242 = vector.extract %241[0, 0, 0] : f32 from vector<1x1x1xf32>
    %243 = arith.addf %238, %242 : f32
    %cst_85 = arith.constant 8.68055562E-4 : f32
    %244 = arith.mulf %243, %cst_85 : f32
    %245 = vector.broadcast %244 : f32 to vector<24x24xf32>
    %246 = arith.subf %116, %245 : vector<24x24xf32>
    %247 = arith.mulf %246, %246 : vector<24x24xf32>
    %248 = vector.shape_cast %247 : vector<24x24xf32> to vector<1x24x24xf32>
    %cst_86 = arith.constant dense<0.000000e+00> : vector<1xf32>
    %249 = vector.multi_reduction <add>, %248, %cst_86 [1, 2] : vector<1x24x24xf32> to vector<1xf32>
    %250 = vector.shape_cast %249 : vector<1xf32> to vector<1x1x1xf32>
    %251 = vector.extract %250[0, 0, 0] : f32 from vector<1x1x1xf32>
    %cst_87 = arith.constant 0.000000e+00 : f32
    %252 = arith.addf %cst_87, %251 : f32
    %253 = vector.broadcast %244 : f32 to vector<24x24xf32>
    %254 = arith.subf %229, %253 : vector<24x24xf32>
    %255 = arith.mulf %254, %254 : vector<24x24xf32>
    %256 = vector.shape_cast %255 : vector<24x24xf32> to vector<1x24x24xf32>
    %cst_88 = arith.constant dense<0.000000e+00> : vector<1xf32>
    %257 = vector.multi_reduction <add>, %256, %cst_88 [1, 2] : vector<1x24x24xf32> to vector<1xf32>
    %258 = vector.shape_cast %257 : vector<1xf32> to vector<1x1x1xf32>
    %259 = vector.extract %258[0, 0, 0] : f32 from vector<1x1x1xf32>
    %260 = arith.addf %252, %259 : f32
    %cst_89 = arith.constant 8.68055562E-4 : f32
    %261 = arith.mulf %260, %cst_89 : f32
    %c0_90 = arith.constant 0 : index
    %262 = memref.load %arg14[%c0_90] : memref<2xf32, #tpu.memory_space<smem>>
    %cst_91 = arith.constant 9.99999974E-6 : f32
    %263 = arith.addf %261, %cst_91 : f32
    %264 = math.rsqrt %263 : f32
    %265 = arith.mulf %262, %264 : f32
    %c0_92 = arith.constant 0 : index
    %266 = memref.load %arg15[%c0_92] : memref<2xf32, #tpu.memory_space<smem>>
    %267 = arith.mulf %244, %265 : f32
    %268 = arith.subf %266, %267 : f32
    %269 = vector.broadcast %265 : f32 to vector<24x24xf32>
    %270 = arith.mulf %116, %269 : vector<24x24xf32>
    %271 = vector.broadcast %268 : f32 to vector<24x24xf32>
    %272 = arith.addf %270, %271 : vector<24x24xf32>
    %273 = vector.broadcast %265 : f32 to vector<24x24xf32>
    %274 = arith.mulf %229, %273 : vector<24x24xf32>
    %275 = vector.broadcast %268 : f32 to vector<24x24xf32>
    %276 = arith.addf %274, %275 : vector<24x24xf32>
    %277 = vector.shape_cast %120 : vector<24x24xf32> to vector<1x24x24xf32>
    %cst_93 = arith.constant dense<0.000000e+00> : vector<1xf32>
    %278 = vector.multi_reduction <add>, %277, %cst_93 [1, 2] : vector<1x24x24xf32> to vector<1xf32>
    %279 = vector.shape_cast %278 : vector<1xf32> to vector<1x1x1xf32>
    %280 = vector.extract %279[0, 0, 0] : f32 from vector<1x1x1xf32>
    %cst_94 = arith.constant 0.000000e+00 : f32
    %281 = arith.addf %cst_94, %280 : f32
    %282 = vector.shape_cast %233 : vector<24x24xf32> to vector<1x24x24xf32>
    %cst_95 = arith.constant dense<0.000000e+00> : vector<1xf32>
    %283 = vector.multi_reduction <add>, %282, %cst_95 [1, 2] : vector<1x24x24xf32> to vector<1xf32>
    %284 = vector.shape_cast %283 : vector<1xf32> to vector<1x1x1xf32>
    %285 = vector.extract %284[0, 0, 0] : f32 from vector<1x1x1xf32>
    %286 = arith.addf %281, %285 : f32
    %cst_96 = arith.constant 8.68055562E-4 : f32
    %287 = arith.mulf %286, %cst_96 : f32
    %288 = vector.broadcast %287 : f32 to vector<24x24xf32>
    %289 = arith.subf %120, %288 : vector<24x24xf32>
    %290 = arith.mulf %289, %289 : vector<24x24xf32>
    %291 = vector.shape_cast %290 : vector<24x24xf32> to vector<1x24x24xf32>
    %cst_97 = arith.constant dense<0.000000e+00> : vector<1xf32>
    %292 = vector.multi_reduction <add>, %291, %cst_97 [1, 2] : vector<1x24x24xf32> to vector<1xf32>
    %293 = vector.shape_cast %292 : vector<1xf32> to vector<1x1x1xf32>
    %294 = vector.extract %293[0, 0, 0] : f32 from vector<1x1x1xf32>
    %cst_98 = arith.constant 0.000000e+00 : f32
    %295 = arith.addf %cst_98, %294 : f32
    %296 = vector.broadcast %287 : f32 to vector<24x24xf32>
    %297 = arith.subf %233, %296 : vector<24x24xf32>
    %298 = arith.mulf %297, %297 : vector<24x24xf32>
    %299 = vector.shape_cast %298 : vector<24x24xf32> to vector<1x24x24xf32>
    %cst_99 = arith.constant dense<0.000000e+00> : vector<1xf32>
    %300 = vector.multi_reduction <add>, %299, %cst_99 [1, 2] : vector<1x24x24xf32> to vector<1xf32>
    %301 = vector.shape_cast %300 : vector<1xf32> to vector<1x1x1xf32>
    %302 = vector.extract %301[0, 0, 0] : f32 from vector<1x1x1xf32>
    %303 = arith.addf %295, %302 : f32
    %cst_100 = arith.constant 8.68055562E-4 : f32
    %304 = arith.mulf %303, %cst_100 : f32
    %c1_101 = arith.constant 1 : index
    %305 = memref.load %arg14[%c1_101] : memref<2xf32, #tpu.memory_space<smem>>
    %cst_102 = arith.constant 9.99999974E-6 : f32
    %306 = arith.addf %304, %cst_102 : f32
    %307 = math.rsqrt %306 : f32
    %308 = arith.mulf %305, %307 : f32
    %c1_103 = arith.constant 1 : index
    %309 = memref.load %arg15[%c1_103] : memref<2xf32, #tpu.memory_space<smem>>
    %310 = arith.mulf %287, %308 : f32
    %311 = arith.subf %309, %310 : f32
    %312 = vector.broadcast %308 : f32 to vector<24x24xf32>
    %313 = arith.mulf %120, %312 : vector<24x24xf32>
    %314 = vector.broadcast %311 : f32 to vector<24x24xf32>
    %315 = arith.addf %313, %314 : vector<24x24xf32>
    %316 = vector.broadcast %308 : f32 to vector<24x24xf32>
    %317 = arith.mulf %233, %316 : vector<24x24xf32>
    %318 = vector.broadcast %311 : f32 to vector<24x24xf32>
    %319 = arith.addf %317, %318 : vector<24x24xf32>
    %320 = vector.extract_strided_slice %272 {offsets = [0, 0], sizes = [23, 24], strides = [1, 1]} : vector<24x24xf32> to vector<23x24xf32>
    %321 = vector.extract_strided_slice %272 {offsets = [1, 0], sizes = [23, 24], strides = [1, 1]} : vector<24x24xf32> to vector<23x24xf32>
    %322 = arith.maximumf %320, %321 : vector<23x24xf32>
    %323 = vector.extract_strided_slice %322 {offsets = [0, 0], sizes = [23, 23], strides = [1, 1]} : vector<23x24xf32> to vector<23x23xf32>
    %324 = vector.extract_strided_slice %322 {offsets = [0, 1], sizes = [23, 23], strides = [1, 1]} : vector<23x24xf32> to vector<23x23xf32>
    %325 = arith.maximumf %323, %324 : vector<23x23xf32>
    %326 = vector.extract_strided_slice %315 {offsets = [0, 0], sizes = [23, 24], strides = [1, 1]} : vector<24x24xf32> to vector<23x24xf32>
    %327 = vector.extract_strided_slice %315 {offsets = [1, 0], sizes = [23, 24], strides = [1, 1]} : vector<24x24xf32> to vector<23x24xf32>
    %328 = arith.maximumf %326, %327 : vector<23x24xf32>
    %329 = vector.extract_strided_slice %328 {offsets = [0, 0], sizes = [23, 23], strides = [1, 1]} : vector<23x24xf32> to vector<23x23xf32>
    %330 = vector.extract_strided_slice %328 {offsets = [0, 1], sizes = [23, 23], strides = [1, 1]} : vector<23x24xf32> to vector<23x23xf32>
    %331 = arith.maximumf %329, %330 : vector<23x23xf32>
    %cst_104 = arith.constant dense<0.000000e+00> : vector<23x24xf32>
    %332 = tpu.matmul %325, %5, %cst_104 {dimension_numbers = #tpu.dot_dimension_numbers<[1], [0], [0], [1], [0, 0, 1, 1], [], []>} : vector<23x23xf32>, vector<23x24xf32>, vector<23x24xf32> -> vector<23x24xf32>
    %cst_105 = arith.constant dense<0.000000e+00> : vector<23x24xf32>
    %333 = tpu.matmul %331, %6, %cst_105 {dimension_numbers = #tpu.dot_dimension_numbers<[1], [0], [0], [1], [0, 0, 1, 1], [], []>} : vector<23x23xf32>, vector<23x24xf32>, vector<23x24xf32> -> vector<23x24xf32>
    %334 = arith.addf %332, %333 : vector<23x24xf32>
    %cst_106 = arith.constant dense<0.000000e+00> : vector<12x24xf32>
    %335 = tpu.matmul %4, %334, %cst_106 {dimension_numbers = #tpu.dot_dimension_numbers<[1], [0], [0], [1], [0, 0, 1, 1], [], []>} : vector<12x23xf32>, vector<23x24xf32>, vector<12x24xf32> -> vector<12x24xf32>
    %cst_107 = arith.constant 0.000000e+00 : f32
    %336 = vector.broadcast %cst_107 : f32 to vector<12x24xf32>
    %337 = arith.maximumf %335, %336 : vector<12x24xf32>
    %338 = vector.extract_strided_slice %276 {offsets = [0, 0], sizes = [23, 24], strides = [1, 1]} : vector<24x24xf32> to vector<23x24xf32>
    %339 = vector.extract_strided_slice %276 {offsets = [1, 0], sizes = [23, 24], strides = [1, 1]} : vector<24x24xf32> to vector<23x24xf32>
    %340 = arith.maximumf %338, %339 : vector<23x24xf32>
    %341 = vector.extract_strided_slice %340 {offsets = [0, 0], sizes = [23, 23], strides = [1, 1]} : vector<23x24xf32> to vector<23x23xf32>
    %342 = vector.extract_strided_slice %340 {offsets = [0, 1], sizes = [23, 23], strides = [1, 1]} : vector<23x24xf32> to vector<23x23xf32>
    %343 = arith.maximumf %341, %342 : vector<23x23xf32>
    %344 = vector.extract_strided_slice %319 {offsets = [0, 0], sizes = [23, 24], strides = [1, 1]} : vector<24x24xf32> to vector<23x24xf32>
    %345 = vector.extract_strided_slice %319 {offsets = [1, 0], sizes = [23, 24], strides = [1, 1]} : vector<24x24xf32> to vector<23x24xf32>
    %346 = arith.maximumf %344, %345 : vector<23x24xf32>
    %347 = vector.extract_strided_slice %346 {offsets = [0, 0], sizes = [23, 23], strides = [1, 1]} : vector<23x24xf32> to vector<23x23xf32>
    %348 = vector.extract_strided_slice %346 {offsets = [0, 1], sizes = [23, 23], strides = [1, 1]} : vector<23x24xf32> to vector<23x23xf32>
    %349 = arith.maximumf %347, %348 : vector<23x23xf32>
    %cst_108 = arith.constant dense<0.000000e+00> : vector<23x24xf32>
    %350 = tpu.matmul %343, %5, %cst_108 {dimension_numbers = #tpu.dot_dimension_numbers<[1], [0], [0], [1], [0, 0, 1, 1], [], []>} : vector<23x23xf32>, vector<23x24xf32>, vector<23x24xf32> -> vector<23x24xf32>
    %cst_109 = arith.constant dense<0.000000e+00> : vector<23x24xf32>
    %351 = tpu.matmul %349, %6, %cst_109 {dimension_numbers = #tpu.dot_dimension_numbers<[1], [0], [0], [1], [0, 0, 1, 1], [], []>} : vector<23x23xf32>, vector<23x24xf32>, vector<23x24xf32> -> vector<23x24xf32>
    %352 = arith.addf %350, %351 : vector<23x24xf32>
    %cst_110 = arith.constant dense<0.000000e+00> : vector<12x24xf32>
    %353 = tpu.matmul %4, %352, %cst_110 {dimension_numbers = #tpu.dot_dimension_numbers<[1], [0], [0], [1], [0, 0, 1, 1], [], []>} : vector<12x23xf32>, vector<23x24xf32>, vector<12x24xf32> -> vector<12x24xf32>
    %cst_111 = arith.constant 0.000000e+00 : f32
    %354 = vector.broadcast %cst_111 : f32 to vector<12x24xf32>
    %355 = arith.maximumf %353, %354 : vector<12x24xf32>
    %cst_112 = arith.constant 0.000000e+00 : f32
    %356 = vector.broadcast %cst_112 : f32 to vector<9x21xf32>
    %cst_113 = arith.constant 0.000000e+00 : f32
    %357 = vector.broadcast %cst_113 : f32 to vector<9x21xf32>
    %cst_114 = arith.constant 0.000000e+00 : f32
    %358 = vector.broadcast %cst_114 : f32 to vector<9x21xf32>
    %359 = vector.extract_strided_slice %337 {offsets = [0, 0], sizes = [9, 21], strides = [1, 1]} : vector<12x24xf32> to vector<9x21xf32>
    %360 = vector.extract_strided_slice %1 {offsets = [0, 0], sizes = [1, 21], strides = [1, 1]} : vector<48x21xf32> to vector<1x21xf32>
    %361 = vector.broadcast %360 : vector<1x21xf32> to vector<9x21xf32>
    %362 = arith.mulf %359, %361 : vector<9x21xf32>
    %363 = arith.addf %356, %362 : vector<9x21xf32>
    %364 = vector.extract_strided_slice %1 {offsets = [16, 0], sizes = [1, 21], strides = [1, 1]} : vector<48x21xf32> to vector<1x21xf32>
    %365 = vector.broadcast %364 : vector<1x21xf32> to vector<9x21xf32>
    %366 = arith.mulf %359, %365 : vector<9x21xf32>
    %367 = arith.addf %357, %366 : vector<9x21xf32>
    %368 = vector.extract_strided_slice %1 {offsets = [32, 0], sizes = [1, 21], strides = [1, 1]} : vector<48x21xf32> to vector<1x21xf32>
    %369 = vector.broadcast %368 : vector<1x21xf32> to vector<9x21xf32>
    %370 = arith.mulf %359, %369 : vector<9x21xf32>
    %371 = arith.addf %358, %370 : vector<9x21xf32>
    %372 = vector.extract_strided_slice %337 {offsets = [0, 1], sizes = [9, 21], strides = [1, 1]} : vector<12x24xf32> to vector<9x21xf32>
    %373 = vector.extract_strided_slice %1 {offsets = [1, 0], sizes = [1, 21], strides = [1, 1]} : vector<48x21xf32> to vector<1x21xf32>
    %374 = vector.broadcast %373 : vector<1x21xf32> to vector<9x21xf32>
    %375 = arith.mulf %372, %374 : vector<9x21xf32>
    %376 = arith.addf %363, %375 : vector<9x21xf32>
    %377 = vector.extract_strided_slice %1 {offsets = [17, 0], sizes = [1, 21], strides = [1, 1]} : vector<48x21xf32> to vector<1x21xf32>
    %378 = vector.broadcast %377 : vector<1x21xf32> to vector<9x21xf32>
    %379 = arith.mulf %372, %378 : vector<9x21xf32>
    %380 = arith.addf %367, %379 : vector<9x21xf32>
    %381 = vector.extract_strided_slice %1 {offsets = [33, 0], sizes = [1, 21], strides = [1, 1]} : vector<48x21xf32> to vector<1x21xf32>
    %382 = vector.broadcast %381 : vector<1x21xf32> to vector<9x21xf32>
    %383 = arith.mulf %372, %382 : vector<9x21xf32>
    %384 = arith.addf %371, %383 : vector<9x21xf32>
    %385 = vector.extract_strided_slice %337 {offsets = [0, 2], sizes = [9, 21], strides = [1, 1]} : vector<12x24xf32> to vector<9x21xf32>
    %386 = vector.extract_strided_slice %1 {offsets = [2, 0], sizes = [1, 21], strides = [1, 1]} : vector<48x21xf32> to vector<1x21xf32>
    %387 = vector.broadcast %386 : vector<1x21xf32> to vector<9x21xf32>
    %388 = arith.mulf %385, %387 : vector<9x21xf32>
    %389 = arith.addf %376, %388 : vector<9x21xf32>
    %390 = vector.extract_strided_slice %1 {offsets = [18, 0], sizes = [1, 21], strides = [1, 1]} : vector<48x21xf32> to vector<1x21xf32>
    %391 = vector.broadcast %390 : vector<1x21xf32> to vector<9x21xf32>
    %392 = arith.mulf %385, %391 : vector<9x21xf32>
    %393 = arith.addf %380, %392 : vector<9x21xf32>
    %394 = vector.extract_strided_slice %1 {offsets = [34, 0], sizes = [1, 21], strides = [1, 1]} : vector<48x21xf32> to vector<1x21xf32>
    %395 = vector.broadcast %394 : vector<1x21xf32> to vector<9x21xf32>
    %396 = arith.mulf %385, %395 : vector<9x21xf32>
    %397 = arith.addf %384, %396 : vector<9x21xf32>
    %398 = vector.extract_strided_slice %337 {offsets = [0, 3], sizes = [9, 21], strides = [1, 1]} : vector<12x24xf32> to vector<9x21xf32>
    %399 = vector.extract_strided_slice %1 {offsets = [3, 0], sizes = [1, 21], strides = [1, 1]} : vector<48x21xf32> to vector<1x21xf32>
    %400 = vector.broadcast %399 : vector<1x21xf32> to vector<9x21xf32>
    %401 = arith.mulf %398, %400 : vector<9x21xf32>
    %402 = arith.addf %389, %401 : vector<9x21xf32>
    %403 = vector.extract_strided_slice %1 {offsets = [19, 0], sizes = [1, 21], strides = [1, 1]} : vector<48x21xf32> to vector<1x21xf32>
    %404 = vector.broadcast %403 : vector<1x21xf32> to vector<9x21xf32>
    %405 = arith.mulf %398, %404 : vector<9x21xf32>
    %406 = arith.addf %393, %405 : vector<9x21xf32>
    %407 = vector.extract_strided_slice %1 {offsets = [35, 0], sizes = [1, 21], strides = [1, 1]} : vector<48x21xf32> to vector<1x21xf32>
    %408 = vector.broadcast %407 : vector<1x21xf32> to vector<9x21xf32>
    %409 = arith.mulf %398, %408 : vector<9x21xf32>
    %410 = arith.addf %397, %409 : vector<9x21xf32>
    %411 = vector.extract_strided_slice %337 {offsets = [1, 0], sizes = [9, 21], strides = [1, 1]} : vector<12x24xf32> to vector<9x21xf32>
    %412 = vector.extract_strided_slice %1 {offsets = [4, 0], sizes = [1, 21], strides = [1, 1]} : vector<48x21xf32> to vector<1x21xf32>
    %413 = vector.broadcast %412 : vector<1x21xf32> to vector<9x21xf32>
    %414 = arith.mulf %411, %413 : vector<9x21xf32>
    %415 = arith.addf %402, %414 : vector<9x21xf32>
    %416 = vector.extract_strided_slice %1 {offsets = [20, 0], sizes = [1, 21], strides = [1, 1]} : vector<48x21xf32> to vector<1x21xf32>
    %417 = vector.broadcast %416 : vector<1x21xf32> to vector<9x21xf32>
    %418 = arith.mulf %411, %417 : vector<9x21xf32>
    %419 = arith.addf %406, %418 : vector<9x21xf32>
    %420 = vector.extract_strided_slice %1 {offsets = [36, 0], sizes = [1, 21], strides = [1, 1]} : vector<48x21xf32> to vector<1x21xf32>
    %421 = vector.broadcast %420 : vector<1x21xf32> to vector<9x21xf32>
    %422 = arith.mulf %411, %421 : vector<9x21xf32>
    %423 = arith.addf %410, %422 : vector<9x21xf32>
    %424 = vector.extract_strided_slice %337 {offsets = [1, 1], sizes = [9, 21], strides = [1, 1]} : vector<12x24xf32> to vector<9x21xf32>
    %425 = vector.extract_strided_slice %1 {offsets = [5, 0], sizes = [1, 21], strides = [1, 1]} : vector<48x21xf32> to vector<1x21xf32>
    %426 = vector.broadcast %425 : vector<1x21xf32> to vector<9x21xf32>
    %427 = arith.mulf %424, %426 : vector<9x21xf32>
    %428 = arith.addf %415, %427 : vector<9x21xf32>
    %429 = vector.extract_strided_slice %1 {offsets = [21, 0], sizes = [1, 21], strides = [1, 1]} : vector<48x21xf32> to vector<1x21xf32>
    %430 = vector.broadcast %429 : vector<1x21xf32> to vector<9x21xf32>
    %431 = arith.mulf %424, %430 : vector<9x21xf32>
    %432 = arith.addf %419, %431 : vector<9x21xf32>
    %433 = vector.extract_strided_slice %1 {offsets = [37, 0], sizes = [1, 21], strides = [1, 1]} : vector<48x21xf32> to vector<1x21xf32>
    %434 = vector.broadcast %433 : vector<1x21xf32> to vector<9x21xf32>
    %435 = arith.mulf %424, %434 : vector<9x21xf32>
    %436 = arith.addf %423, %435 : vector<9x21xf32>
    %437 = vector.extract_strided_slice %337 {offsets = [1, 2], sizes = [9, 21], strides = [1, 1]} : vector<12x24xf32> to vector<9x21xf32>
    %438 = vector.extract_strided_slice %1 {offsets = [6, 0], sizes = [1, 21], strides = [1, 1]} : vector<48x21xf32> to vector<1x21xf32>
    %439 = vector.broadcast %438 : vector<1x21xf32> to vector<9x21xf32>
    %440 = arith.mulf %437, %439 : vector<9x21xf32>
    %441 = arith.addf %428, %440 : vector<9x21xf32>
    %442 = vector.extract_strided_slice %1 {offsets = [22, 0], sizes = [1, 21], strides = [1, 1]} : vector<48x21xf32> to vector<1x21xf32>
    %443 = vector.broadcast %442 : vector<1x21xf32> to vector<9x21xf32>
    %444 = arith.mulf %437, %443 : vector<9x21xf32>
    %445 = arith.addf %432, %444 : vector<9x21xf32>
    %446 = vector.extract_strided_slice %1 {offsets = [38, 0], sizes = [1, 21], strides = [1, 1]} : vector<48x21xf32> to vector<1x21xf32>
    %447 = vector.broadcast %446 : vector<1x21xf32> to vector<9x21xf32>
    %448 = arith.mulf %437, %447 : vector<9x21xf32>
    %449 = arith.addf %436, %448 : vector<9x21xf32>
    %450 = vector.extract_strided_slice %337 {offsets = [1, 3], sizes = [9, 21], strides = [1, 1]} : vector<12x24xf32> to vector<9x21xf32>
    %451 = vector.extract_strided_slice %1 {offsets = [7, 0], sizes = [1, 21], strides = [1, 1]} : vector<48x21xf32> to vector<1x21xf32>
    %452 = vector.broadcast %451 : vector<1x21xf32> to vector<9x21xf32>
    %453 = arith.mulf %450, %452 : vector<9x21xf32>
    %454 = arith.addf %441, %453 : vector<9x21xf32>
    %455 = vector.extract_strided_slice %1 {offsets = [23, 0], sizes = [1, 21], strides = [1, 1]} : vector<48x21xf32> to vector<1x21xf32>
    %456 = vector.broadcast %455 : vector<1x21xf32> to vector<9x21xf32>
    %457 = arith.mulf %450, %456 : vector<9x21xf32>
    %458 = arith.addf %445, %457 : vector<9x21xf32>
    %459 = vector.extract_strided_slice %1 {offsets = [39, 0], sizes = [1, 21], strides = [1, 1]} : vector<48x21xf32> to vector<1x21xf32>
    %460 = vector.broadcast %459 : vector<1x21xf32> to vector<9x21xf32>
    %461 = arith.mulf %450, %460 : vector<9x21xf32>
    %462 = arith.addf %449, %461 : vector<9x21xf32>
    %463 = vector.extract_strided_slice %337 {offsets = [2, 0], sizes = [9, 21], strides = [1, 1]} : vector<12x24xf32> to vector<9x21xf32>
    %464 = vector.extract_strided_slice %1 {offsets = [8, 0], sizes = [1, 21], strides = [1, 1]} : vector<48x21xf32> to vector<1x21xf32>
    %465 = vector.broadcast %464 : vector<1x21xf32> to vector<9x21xf32>
    %466 = arith.mulf %463, %465 : vector<9x21xf32>
    %467 = arith.addf %454, %466 : vector<9x21xf32>
    %468 = vector.extract_strided_slice %1 {offsets = [24, 0], sizes = [1, 21], strides = [1, 1]} : vector<48x21xf32> to vector<1x21xf32>
    %469 = vector.broadcast %468 : vector<1x21xf32> to vector<9x21xf32>
    %470 = arith.mulf %463, %469 : vector<9x21xf32>
    %471 = arith.addf %458, %470 : vector<9x21xf32>
    %472 = vector.extract_strided_slice %1 {offsets = [40, 0], sizes = [1, 21], strides = [1, 1]} : vector<48x21xf32> to vector<1x21xf32>
    %473 = vector.broadcast %472 : vector<1x21xf32> to vector<9x21xf32>
    %474 = arith.mulf %463, %473 : vector<9x21xf32>
    %475 = arith.addf %462, %474 : vector<9x21xf32>
    %476 = vector.extract_strided_slice %337 {offsets = [2, 1], sizes = [9, 21], strides = [1, 1]} : vector<12x24xf32> to vector<9x21xf32>
    %477 = vector.extract_strided_slice %1 {offsets = [9, 0], sizes = [1, 21], strides = [1, 1]} : vector<48x21xf32> to vector<1x21xf32>
    %478 = vector.broadcast %477 : vector<1x21xf32> to vector<9x21xf32>
    %479 = arith.mulf %476, %478 : vector<9x21xf32>
    %480 = arith.addf %467, %479 : vector<9x21xf32>
    %481 = vector.extract_strided_slice %1 {offsets = [25, 0], sizes = [1, 21], strides = [1, 1]} : vector<48x21xf32> to vector<1x21xf32>
    %482 = vector.broadcast %481 : vector<1x21xf32> to vector<9x21xf32>
    %483 = arith.mulf %476, %482 : vector<9x21xf32>
    %484 = arith.addf %471, %483 : vector<9x21xf32>
    %485 = vector.extract_strided_slice %1 {offsets = [41, 0], sizes = [1, 21], strides = [1, 1]} : vector<48x21xf32> to vector<1x21xf32>
    %486 = vector.broadcast %485 : vector<1x21xf32> to vector<9x21xf32>
    %487 = arith.mulf %476, %486 : vector<9x21xf32>
    %488 = arith.addf %475, %487 : vector<9x21xf32>
    %489 = vector.extract_strided_slice %337 {offsets = [2, 2], sizes = [9, 21], strides = [1, 1]} : vector<12x24xf32> to vector<9x21xf32>
    %490 = vector.extract_strided_slice %1 {offsets = [10, 0], sizes = [1, 21], strides = [1, 1]} : vector<48x21xf32> to vector<1x21xf32>
    %491 = vector.broadcast %490 : vector<1x21xf32> to vector<9x21xf32>
    %492 = arith.mulf %489, %491 : vector<9x21xf32>
    %493 = arith.addf %480, %492 : vector<9x21xf32>
    %494 = vector.extract_strided_slice %1 {offsets = [26, 0], sizes = [1, 21], strides = [1, 1]} : vector<48x21xf32> to vector<1x21xf32>
    %495 = vector.broadcast %494 : vector<1x21xf32> to vector<9x21xf32>
    %496 = arith.mulf %489, %495 : vector<9x21xf32>
    %497 = arith.addf %484, %496 : vector<9x21xf32>
    %498 = vector.extract_strided_slice %1 {offsets = [42, 0], sizes = [1, 21], strides = [1, 1]} : vector<48x21xf32> to vector<1x21xf32>
    %499 = vector.broadcast %498 : vector<1x21xf32> to vector<9x21xf32>
    %500 = arith.mulf %489, %499 : vector<9x21xf32>
    %501 = arith.addf %488, %500 : vector<9x21xf32>
    %502 = vector.extract_strided_slice %337 {offsets = [2, 3], sizes = [9, 21], strides = [1, 1]} : vector<12x24xf32> to vector<9x21xf32>
    %503 = vector.extract_strided_slice %1 {offsets = [11, 0], sizes = [1, 21], strides = [1, 1]} : vector<48x21xf32> to vector<1x21xf32>
    %504 = vector.broadcast %503 : vector<1x21xf32> to vector<9x21xf32>
    %505 = arith.mulf %502, %504 : vector<9x21xf32>
    %506 = arith.addf %493, %505 : vector<9x21xf32>
    %507 = vector.extract_strided_slice %1 {offsets = [27, 0], sizes = [1, 21], strides = [1, 1]} : vector<48x21xf32> to vector<1x21xf32>
    %508 = vector.broadcast %507 : vector<1x21xf32> to vector<9x21xf32>
    %509 = arith.mulf %502, %508 : vector<9x21xf32>
    %510 = arith.addf %497, %509 : vector<9x21xf32>
    %511 = vector.extract_strided_slice %1 {offsets = [43, 0], sizes = [1, 21], strides = [1, 1]} : vector<48x21xf32> to vector<1x21xf32>
    %512 = vector.broadcast %511 : vector<1x21xf32> to vector<9x21xf32>
    %513 = arith.mulf %502, %512 : vector<9x21xf32>
    %514 = arith.addf %501, %513 : vector<9x21xf32>
    %515 = vector.extract_strided_slice %337 {offsets = [3, 0], sizes = [9, 21], strides = [1, 1]} : vector<12x24xf32> to vector<9x21xf32>
    %516 = vector.extract_strided_slice %1 {offsets = [12, 0], sizes = [1, 21], strides = [1, 1]} : vector<48x21xf32> to vector<1x21xf32>
    %517 = vector.broadcast %516 : vector<1x21xf32> to vector<9x21xf32>
    %518 = arith.mulf %515, %517 : vector<9x21xf32>
    %519 = arith.addf %506, %518 : vector<9x21xf32>
    %520 = vector.extract_strided_slice %1 {offsets = [28, 0], sizes = [1, 21], strides = [1, 1]} : vector<48x21xf32> to vector<1x21xf32>
    %521 = vector.broadcast %520 : vector<1x21xf32> to vector<9x21xf32>
    %522 = arith.mulf %515, %521 : vector<9x21xf32>
    %523 = arith.addf %510, %522 : vector<9x21xf32>
    %524 = vector.extract_strided_slice %1 {offsets = [44, 0], sizes = [1, 21], strides = [1, 1]} : vector<48x21xf32> to vector<1x21xf32>
    %525 = vector.broadcast %524 : vector<1x21xf32> to vector<9x21xf32>
    %526 = arith.mulf %515, %525 : vector<9x21xf32>
    %527 = arith.addf %514, %526 : vector<9x21xf32>
    %528 = vector.extract_strided_slice %337 {offsets = [3, 1], sizes = [9, 21], strides = [1, 1]} : vector<12x24xf32> to vector<9x21xf32>
    %529 = vector.extract_strided_slice %1 {offsets = [13, 0], sizes = [1, 21], strides = [1, 1]} : vector<48x21xf32> to vector<1x21xf32>
    %530 = vector.broadcast %529 : vector<1x21xf32> to vector<9x21xf32>
    %531 = arith.mulf %528, %530 : vector<9x21xf32>
    %532 = arith.addf %519, %531 : vector<9x21xf32>
    %533 = vector.extract_strided_slice %1 {offsets = [29, 0], sizes = [1, 21], strides = [1, 1]} : vector<48x21xf32> to vector<1x21xf32>
    %534 = vector.broadcast %533 : vector<1x21xf32> to vector<9x21xf32>
    %535 = arith.mulf %528, %534 : vector<9x21xf32>
    %536 = arith.addf %523, %535 : vector<9x21xf32>
    %537 = vector.extract_strided_slice %1 {offsets = [45, 0], sizes = [1, 21], strides = [1, 1]} : vector<48x21xf32> to vector<1x21xf32>
    %538 = vector.broadcast %537 : vector<1x21xf32> to vector<9x21xf32>
    %539 = arith.mulf %528, %538 : vector<9x21xf32>
    %540 = arith.addf %527, %539 : vector<9x21xf32>
    %541 = vector.extract_strided_slice %337 {offsets = [3, 2], sizes = [9, 21], strides = [1, 1]} : vector<12x24xf32> to vector<9x21xf32>
    %542 = vector.extract_strided_slice %1 {offsets = [14, 0], sizes = [1, 21], strides = [1, 1]} : vector<48x21xf32> to vector<1x21xf32>
    %543 = vector.broadcast %542 : vector<1x21xf32> to vector<9x21xf32>
    %544 = arith.mulf %541, %543 : vector<9x21xf32>
    %545 = arith.addf %532, %544 : vector<9x21xf32>
    %546 = vector.extract_strided_slice %1 {offsets = [30, 0], sizes = [1, 21], strides = [1, 1]} : vector<48x21xf32> to vector<1x21xf32>
    %547 = vector.broadcast %546 : vector<1x21xf32> to vector<9x21xf32>
    %548 = arith.mulf %541, %547 : vector<9x21xf32>
    %549 = arith.addf %536, %548 : vector<9x21xf32>
    %550 = vector.extract_strided_slice %1 {offsets = [46, 0], sizes = [1, 21], strides = [1, 1]} : vector<48x21xf32> to vector<1x21xf32>
    %551 = vector.broadcast %550 : vector<1x21xf32> to vector<9x21xf32>
    %552 = arith.mulf %541, %551 : vector<9x21xf32>
    %553 = arith.addf %540, %552 : vector<9x21xf32>
    %554 = vector.extract_strided_slice %337 {offsets = [3, 3], sizes = [9, 21], strides = [1, 1]} : vector<12x24xf32> to vector<9x21xf32>
    %555 = vector.extract_strided_slice %1 {offsets = [15, 0], sizes = [1, 21], strides = [1, 1]} : vector<48x21xf32> to vector<1x21xf32>
    %556 = vector.broadcast %555 : vector<1x21xf32> to vector<9x21xf32>
    %557 = arith.mulf %554, %556 : vector<9x21xf32>
    %558 = arith.addf %545, %557 : vector<9x21xf32>
    %559 = vector.extract_strided_slice %1 {offsets = [31, 0], sizes = [1, 21], strides = [1, 1]} : vector<48x21xf32> to vector<1x21xf32>
    %560 = vector.broadcast %559 : vector<1x21xf32> to vector<9x21xf32>
    %561 = arith.mulf %554, %560 : vector<9x21xf32>
    %562 = arith.addf %549, %561 : vector<9x21xf32>
    %563 = vector.extract_strided_slice %1 {offsets = [47, 0], sizes = [1, 21], strides = [1, 1]} : vector<48x21xf32> to vector<1x21xf32>
    %564 = vector.broadcast %563 : vector<1x21xf32> to vector<9x21xf32>
    %565 = arith.mulf %554, %564 : vector<9x21xf32>
    %566 = arith.addf %553, %565 : vector<9x21xf32>
    %cst_115 = arith.constant dense<0.000000e+00> : vector<9x9xf32>
    %567 = tpu.matmul %558, %3, %cst_115 {dimension_numbers = #tpu.dot_dimension_numbers<[1], [0], [0], [1], [0, 0, 1, 1], [], []>} : vector<9x21xf32>, vector<21x9xf32>, vector<9x9xf32> -> vector<9x9xf32>
    %c0_116 = arith.constant 0 : index
    %568 = memref.load %arg16[%c0_116] : memref<3xf32, #tpu.memory_space<smem>>
    %569 = vector.broadcast %568 : f32 to vector<9x9xf32>
    %570 = arith.addf %567, %569 : vector<9x9xf32>
    %cst_117 = arith.constant 0.000000e+00 : f32
    %571 = vector.broadcast %cst_117 : f32 to vector<9x9xf32>
    %572 = arith.maximumf %570, %571 : vector<9x9xf32>
    %573 = vector.extract_strided_slice %572 {offsets = [0, 0], sizes = [8, 9], strides = [1, 1]} : vector<9x9xf32> to vector<8x9xf32>
    %574 = vector.extract_strided_slice %572 {offsets = [1, 0], sizes = [8, 9], strides = [1, 1]} : vector<9x9xf32> to vector<8x9xf32>
    %575 = arith.maximumf %573, %574 : vector<8x9xf32>
    %576 = vector.extract_strided_slice %575 {offsets = [0, 0], sizes = [8, 8], strides = [1, 1]} : vector<8x9xf32> to vector<8x8xf32>
    %577 = vector.extract_strided_slice %575 {offsets = [0, 1], sizes = [8, 8], strides = [1, 1]} : vector<8x9xf32> to vector<8x8xf32>
    %578 = arith.maximumf %576, %577 : vector<8x8xf32>
    %cst_118 = arith.constant dense<0.000000e+00> : vector<8x4xf32>
    %579 = tpu.matmul %578, %7, %cst_118 {dimension_numbers = #tpu.dot_dimension_numbers<[1], [0], [0], [1], [0, 0, 1, 1], [], []>} : vector<8x8xf32>, vector<8x4xf32>, vector<8x4xf32> -> vector<8x4xf32>
    %580 = vector.extract_strided_slice %579 {offsets = [0, 0], sizes = [1, 4], strides = [1, 1]} : vector<8x4xf32> to vector<1x4xf32>
    %c0_119 = arith.constant 0 : index
    %c0_120 = arith.constant 0 : index
    %581 = vector.load %arg19[%c0_119, %c0_120] : memref<2x48xf32, #tpu.memory_space<vmem>>, vector<1x4xf32>
    tpu.vector_store %arg19[%c0_119, %c0_120], %580 {strides = array<i32>} : memref<2x48xf32, #tpu.memory_space<vmem>>, vector<1x4xf32>,
    %582 = vector.extract_strided_slice %579 {offsets = [2, 0], sizes = [1, 4], strides = [1, 1]} : vector<8x4xf32> to vector<1x4xf32>
    %c0_121 = arith.constant 0 : index
    %c4 = arith.constant 4 : index
    %583 = vector.load %arg19[%c0_121, %c4] : memref<2x48xf32, #tpu.memory_space<vmem>>, vector<1x4xf32>
    tpu.vector_store %arg19[%c0_121, %c4], %582 {strides = array<i32>} : memref<2x48xf32, #tpu.memory_space<vmem>>, vector<1x4xf32>,
    %584 = vector.extract_strided_slice %579 {offsets = [4, 0], sizes = [1, 4], strides = [1, 1]} : vector<8x4xf32> to vector<1x4xf32>
    %c0_122 = arith.constant 0 : index
    %c8 = arith.constant 8 : index
    %585 = vector.load %arg19[%c0_122, %c8] : memref<2x48xf32, #tpu.memory_space<vmem>>, vector<1x4xf32>
    tpu.vector_store %arg19[%c0_122, %c8], %584 {strides = array<i32>} : memref<2x48xf32, #tpu.memory_space<vmem>>, vector<1x4xf32>,
    %586 = vector.extract_strided_slice %579 {offsets = [6, 0], sizes = [1, 4], strides = [1, 1]} : vector<8x4xf32> to vector<1x4xf32>
    %c0_123 = arith.constant 0 : index
    %c12 = arith.constant 12 : index
    %587 = vector.load %arg19[%c0_123, %c12] : memref<2x48xf32, #tpu.memory_space<vmem>>, vector<1x4xf32>
    tpu.vector_store %arg19[%c0_123, %c12], %586 {strides = array<i32>} : memref<2x48xf32, #tpu.memory_space<vmem>>, vector<1x4xf32>,
    %cst_124 = arith.constant dense<0.000000e+00> : vector<9x9xf32>
    %588 = tpu.matmul %562, %3, %cst_124 {dimension_numbers = #tpu.dot_dimension_numbers<[1], [0], [0], [1], [0, 0, 1, 1], [], []>} : vector<9x21xf32>, vector<21x9xf32>, vector<9x9xf32> -> vector<9x9xf32>
    %c1_125 = arith.constant 1 : index
    %589 = memref.load %arg16[%c1_125] : memref<3xf32, #tpu.memory_space<smem>>
    %590 = vector.broadcast %589 : f32 to vector<9x9xf32>
    %591 = arith.addf %588, %590 : vector<9x9xf32>
    %cst_126 = arith.constant 0.000000e+00 : f32
    %592 = vector.broadcast %cst_126 : f32 to vector<9x9xf32>
    %593 = arith.maximumf %591, %592 : vector<9x9xf32>
    %594 = vector.extract_strided_slice %593 {offsets = [0, 0], sizes = [8, 9], strides = [1, 1]} : vector<9x9xf32> to vector<8x9xf32>
    %595 = vector.extract_strided_slice %593 {offsets = [1, 0], sizes = [8, 9], strides = [1, 1]} : vector<9x9xf32> to vector<8x9xf32>
    %596 = arith.maximumf %594, %595 : vector<8x9xf32>
    %597 = vector.extract_strided_slice %596 {offsets = [0, 0], sizes = [8, 8], strides = [1, 1]} : vector<8x9xf32> to vector<8x8xf32>
    %598 = vector.extract_strided_slice %596 {offsets = [0, 1], sizes = [8, 8], strides = [1, 1]} : vector<8x9xf32> to vector<8x8xf32>
    %599 = arith.maximumf %597, %598 : vector<8x8xf32>
    %cst_127 = arith.constant dense<0.000000e+00> : vector<8x4xf32>
    %600 = tpu.matmul %599, %7, %cst_127 {dimension_numbers = #tpu.dot_dimension_numbers<[1], [0], [0], [1], [0, 0, 1, 1], [], []>} : vector<8x8xf32>, vector<8x4xf32>, vector<8x4xf32> -> vector<8x4xf32>
    %601 = vector.extract_strided_slice %600 {offsets = [0, 0], sizes = [1, 4], strides = [1, 1]} : vector<8x4xf32> to vector<1x4xf32>
    %c0_128 = arith.constant 0 : index
    %c16 = arith.constant 16 : index
    %602 = vector.load %arg19[%c0_128, %c16] : memref<2x48xf32, #tpu.memory_space<vmem>>, vector<1x4xf32>
    tpu.vector_store %arg19[%c0_128, %c16], %601 {strides = array<i32>} : memref<2x48xf32, #tpu.memory_space<vmem>>, vector<1x4xf32>,
    %603 = vector.extract_strided_slice %600 {offsets = [2, 0], sizes = [1, 4], strides = [1, 1]} : vector<8x4xf32> to vector<1x4xf32>
    %c0_129 = arith.constant 0 : index
    %c20 = arith.constant 20 : index
    %604 = vector.load %arg19[%c0_129, %c20] : memref<2x48xf32, #tpu.memory_space<vmem>>, vector<1x4xf32>
    tpu.vector_store %arg19[%c0_129, %c20], %603 {strides = array<i32>} : memref<2x48xf32, #tpu.memory_space<vmem>>, vector<1x4xf32>,
    %605 = vector.extract_strided_slice %600 {offsets = [4, 0], sizes = [1, 4], strides = [1, 1]} : vector<8x4xf32> to vector<1x4xf32>
    %c0_130 = arith.constant 0 : index
    %c24 = arith.constant 24 : index
    %606 = vector.load %arg19[%c0_130, %c24] : memref<2x48xf32, #tpu.memory_space<vmem>>, vector<1x4xf32>
    tpu.vector_store %arg19[%c0_130, %c24], %605 {strides = array<i32>} : memref<2x48xf32, #tpu.memory_space<vmem>>, vector<1x4xf32>,
    %607 = vector.extract_strided_slice %600 {offsets = [6, 0], sizes = [1, 4], strides = [1, 1]} : vector<8x4xf32> to vector<1x4xf32>
    %c0_131 = arith.constant 0 : index
    %c28 = arith.constant 28 : index
    %608 = vector.load %arg19[%c0_131, %c28] : memref<2x48xf32, #tpu.memory_space<vmem>>, vector<1x4xf32>
    tpu.vector_store %arg19[%c0_131, %c28], %607 {strides = array<i32>} : memref<2x48xf32, #tpu.memory_space<vmem>>, vector<1x4xf32>,
    %cst_132 = arith.constant dense<0.000000e+00> : vector<9x9xf32>
    %609 = tpu.matmul %566, %3, %cst_132 {dimension_numbers = #tpu.dot_dimension_numbers<[1], [0], [0], [1], [0, 0, 1, 1], [], []>} : vector<9x21xf32>, vector<21x9xf32>, vector<9x9xf32> -> vector<9x9xf32>
    %c2_133 = arith.constant 2 : index
    %610 = memref.load %arg16[%c2_133] : memref<3xf32, #tpu.memory_space<smem>>
    %611 = vector.broadcast %610 : f32 to vector<9x9xf32>
    %612 = arith.addf %609, %611 : vector<9x9xf32>
    %cst_134 = arith.constant 0.000000e+00 : f32
    %613 = vector.broadcast %cst_134 : f32 to vector<9x9xf32>
    %614 = arith.maximumf %612, %613 : vector<9x9xf32>
    %615 = vector.extract_strided_slice %614 {offsets = [0, 0], sizes = [8, 9], strides = [1, 1]} : vector<9x9xf32> to vector<8x9xf32>
    %616 = vector.extract_strided_slice %614 {offsets = [1, 0], sizes = [8, 9], strides = [1, 1]} : vector<9x9xf32> to vector<8x9xf32>
    %617 = arith.maximumf %615, %616 : vector<8x9xf32>
    %618 = vector.extract_strided_slice %617 {offsets = [0, 0], sizes = [8, 8], strides = [1, 1]} : vector<8x9xf32> to vector<8x8xf32>
    %619 = vector.extract_strided_slice %617 {offsets = [0, 1], sizes = [8, 8], strides = [1, 1]} : vector<8x9xf32> to vector<8x8xf32>
    %620 = arith.maximumf %618, %619 : vector<8x8xf32>
    %cst_135 = arith.constant dense<0.000000e+00> : vector<8x4xf32>
    %621 = tpu.matmul %620, %7, %cst_135 {dimension_numbers = #tpu.dot_dimension_numbers<[1], [0], [0], [1], [0, 0, 1, 1], [], []>} : vector<8x8xf32>, vector<8x4xf32>, vector<8x4xf32> -> vector<8x4xf32>
    %622 = vector.extract_strided_slice %621 {offsets = [0, 0], sizes = [1, 4], strides = [1, 1]} : vector<8x4xf32> to vector<1x4xf32>
    %c0_136 = arith.constant 0 : index
    %c32 = arith.constant 32 : index
    %623 = vector.load %arg19[%c0_136, %c32] : memref<2x48xf32, #tpu.memory_space<vmem>>, vector<1x4xf32>
    tpu.vector_store %arg19[%c0_136, %c32], %622 {strides = array<i32>} : memref<2x48xf32, #tpu.memory_space<vmem>>, vector<1x4xf32>,
    %624 = vector.extract_strided_slice %621 {offsets = [2, 0], sizes = [1, 4], strides = [1, 1]} : vector<8x4xf32> to vector<1x4xf32>
    %c0_137 = arith.constant 0 : index
    %c36 = arith.constant 36 : index
    %625 = vector.load %arg19[%c0_137, %c36] : memref<2x48xf32, #tpu.memory_space<vmem>>, vector<1x4xf32>
    tpu.vector_store %arg19[%c0_137, %c36], %624 {strides = array<i32>} : memref<2x48xf32, #tpu.memory_space<vmem>>, vector<1x4xf32>,
    %626 = vector.extract_strided_slice %621 {offsets = [4, 0], sizes = [1, 4], strides = [1, 1]} : vector<8x4xf32> to vector<1x4xf32>
    %c0_138 = arith.constant 0 : index
    %c40 = arith.constant 40 : index
    %627 = vector.load %arg19[%c0_138, %c40] : memref<2x48xf32, #tpu.memory_space<vmem>>, vector<1x4xf32>
    tpu.vector_store %arg19[%c0_138, %c40], %626 {strides = array<i32>} : memref<2x48xf32, #tpu.memory_space<vmem>>, vector<1x4xf32>,
    %628 = vector.extract_strided_slice %621 {offsets = [6, 0], sizes = [1, 4], strides = [1, 1]} : vector<8x4xf32> to vector<1x4xf32>
    %c0_139 = arith.constant 0 : index
    %c44 = arith.constant 44 : index
    %629 = vector.load %arg19[%c0_139, %c44] : memref<2x48xf32, #tpu.memory_space<vmem>>, vector<1x4xf32>
    tpu.vector_store %arg19[%c0_139, %c44], %628 {strides = array<i32>} : memref<2x48xf32, #tpu.memory_space<vmem>>, vector<1x4xf32>,
    %cst_140 = arith.constant 0.000000e+00 : f32
    %630 = vector.broadcast %cst_140 : f32 to vector<9x21xf32>
    %cst_141 = arith.constant 0.000000e+00 : f32
    %631 = vector.broadcast %cst_141 : f32 to vector<9x21xf32>
    %cst_142 = arith.constant 0.000000e+00 : f32
    %632 = vector.broadcast %cst_142 : f32 to vector<9x21xf32>
    %633 = vector.extract_strided_slice %355 {offsets = [0, 0], sizes = [9, 21], strides = [1, 1]} : vector<12x24xf32> to vector<9x21xf32>
    %634 = vector.extract_strided_slice %1 {offsets = [0, 0], sizes = [1, 21], strides = [1, 1]} : vector<48x21xf32> to vector<1x21xf32>
    %635 = vector.broadcast %634 : vector<1x21xf32> to vector<9x21xf32>
    %636 = arith.mulf %633, %635 : vector<9x21xf32>
    %637 = arith.addf %630, %636 : vector<9x21xf32>
    %638 = vector.extract_strided_slice %1 {offsets = [16, 0], sizes = [1, 21], strides = [1, 1]} : vector<48x21xf32> to vector<1x21xf32>
    %639 = vector.broadcast %638 : vector<1x21xf32> to vector<9x21xf32>
    %640 = arith.mulf %633, %639 : vector<9x21xf32>
    %641 = arith.addf %631, %640 : vector<9x21xf32>
    %642 = vector.extract_strided_slice %1 {offsets = [32, 0], sizes = [1, 21], strides = [1, 1]} : vector<48x21xf32> to vector<1x21xf32>
    %643 = vector.broadcast %642 : vector<1x21xf32> to vector<9x21xf32>
    %644 = arith.mulf %633, %643 : vector<9x21xf32>
    %645 = arith.addf %632, %644 : vector<9x21xf32>
    %646 = vector.extract_strided_slice %355 {offsets = [0, 1], sizes = [9, 21], strides = [1, 1]} : vector<12x24xf32> to vector<9x21xf32>
    %647 = vector.extract_strided_slice %1 {offsets = [1, 0], sizes = [1, 21], strides = [1, 1]} : vector<48x21xf32> to vector<1x21xf32>
    %648 = vector.broadcast %647 : vector<1x21xf32> to vector<9x21xf32>
    %649 = arith.mulf %646, %648 : vector<9x21xf32>
    %650 = arith.addf %637, %649 : vector<9x21xf32>
    %651 = vector.extract_strided_slice %1 {offsets = [17, 0], sizes = [1, 21], strides = [1, 1]} : vector<48x21xf32> to vector<1x21xf32>
    %652 = vector.broadcast %651 : vector<1x21xf32> to vector<9x21xf32>
    %653 = arith.mulf %646, %652 : vector<9x21xf32>
    %654 = arith.addf %641, %653 : vector<9x21xf32>
    %655 = vector.extract_strided_slice %1 {offsets = [33, 0], sizes = [1, 21], strides = [1, 1]} : vector<48x21xf32> to vector<1x21xf32>
    %656 = vector.broadcast %655 : vector<1x21xf32> to vector<9x21xf32>
    %657 = arith.mulf %646, %656 : vector<9x21xf32>
    %658 = arith.addf %645, %657 : vector<9x21xf32>
    %659 = vector.extract_strided_slice %355 {offsets = [0, 2], sizes = [9, 21], strides = [1, 1]} : vector<12x24xf32> to vector<9x21xf32>
    %660 = vector.extract_strided_slice %1 {offsets = [2, 0], sizes = [1, 21], strides = [1, 1]} : vector<48x21xf32> to vector<1x21xf32>
    %661 = vector.broadcast %660 : vector<1x21xf32> to vector<9x21xf32>
    %662 = arith.mulf %659, %661 : vector<9x21xf32>
    %663 = arith.addf %650, %662 : vector<9x21xf32>
    %664 = vector.extract_strided_slice %1 {offsets = [18, 0], sizes = [1, 21], strides = [1, 1]} : vector<48x21xf32> to vector<1x21xf32>
    %665 = vector.broadcast %664 : vector<1x21xf32> to vector<9x21xf32>
    %666 = arith.mulf %659, %665 : vector<9x21xf32>
    %667 = arith.addf %654, %666 : vector<9x21xf32>
    %668 = vector.extract_strided_slice %1 {offsets = [34, 0], sizes = [1, 21], strides = [1, 1]} : vector<48x21xf32> to vector<1x21xf32>
    %669 = vector.broadcast %668 : vector<1x21xf32> to vector<9x21xf32>
    %670 = arith.mulf %659, %669 : vector<9x21xf32>
    %671 = arith.addf %658, %670 : vector<9x21xf32>
    %672 = vector.extract_strided_slice %355 {offsets = [0, 3], sizes = [9, 21], strides = [1, 1]} : vector<12x24xf32> to vector<9x21xf32>
    %673 = vector.extract_strided_slice %1 {offsets = [3, 0], sizes = [1, 21], strides = [1, 1]} : vector<48x21xf32> to vector<1x21xf32>
    %674 = vector.broadcast %673 : vector<1x21xf32> to vector<9x21xf32>
    %675 = arith.mulf %672, %674 : vector<9x21xf32>
    %676 = arith.addf %663, %675 : vector<9x21xf32>
    %677 = vector.extract_strided_slice %1 {offsets = [19, 0], sizes = [1, 21], strides = [1, 1]} : vector<48x21xf32> to vector<1x21xf32>
    %678 = vector.broadcast %677 : vector<1x21xf32> to vector<9x21xf32>
    %679 = arith.mulf %672, %678 : vector<9x21xf32>
    %680 = arith.addf %667, %679 : vector<9x21xf32>
    %681 = vector.extract_strided_slice %1 {offsets = [35, 0], sizes = [1, 21], strides = [1, 1]} : vector<48x21xf32> to vector<1x21xf32>
    %682 = vector.broadcast %681 : vector<1x21xf32> to vector<9x21xf32>
    %683 = arith.mulf %672, %682 : vector<9x21xf32>
    %684 = arith.addf %671, %683 : vector<9x21xf32>
    %685 = vector.extract_strided_slice %355 {offsets = [1, 0], sizes = [9, 21], strides = [1, 1]} : vector<12x24xf32> to vector<9x21xf32>
    %686 = vector.extract_strided_slice %1 {offsets = [4, 0], sizes = [1, 21], strides = [1, 1]} : vector<48x21xf32> to vector<1x21xf32>
    %687 = vector.broadcast %686 : vector<1x21xf32> to vector<9x21xf32>
    %688 = arith.mulf %685, %687 : vector<9x21xf32>
    %689 = arith.addf %676, %688 : vector<9x21xf32>
    %690 = vector.extract_strided_slice %1 {offsets = [20, 0], sizes = [1, 21], strides = [1, 1]} : vector<48x21xf32> to vector<1x21xf32>
    %691 = vector.broadcast %690 : vector<1x21xf32> to vector<9x21xf32>
    %692 = arith.mulf %685, %691 : vector<9x21xf32>
    %693 = arith.addf %680, %692 : vector<9x21xf32>
    %694 = vector.extract_strided_slice %1 {offsets = [36, 0], sizes = [1, 21], strides = [1, 1]} : vector<48x21xf32> to vector<1x21xf32>
    %695 = vector.broadcast %694 : vector<1x21xf32> to vector<9x21xf32>
    %696 = arith.mulf %685, %695 : vector<9x21xf32>
    %697 = arith.addf %684, %696 : vector<9x21xf32>
    %698 = vector.extract_strided_slice %355 {offsets = [1, 1], sizes = [9, 21], strides = [1, 1]} : vector<12x24xf32> to vector<9x21xf32>
    %699 = vector.extract_strided_slice %1 {offsets = [5, 0], sizes = [1, 21], strides = [1, 1]} : vector<48x21xf32> to vector<1x21xf32>
    %700 = vector.broadcast %699 : vector<1x21xf32> to vector<9x21xf32>
    %701 = arith.mulf %698, %700 : vector<9x21xf32>
    %702 = arith.addf %689, %701 : vector<9x21xf32>
    %703 = vector.extract_strided_slice %1 {offsets = [21, 0], sizes = [1, 21], strides = [1, 1]} : vector<48x21xf32> to vector<1x21xf32>
    %704 = vector.broadcast %703 : vector<1x21xf32> to vector<9x21xf32>
    %705 = arith.mulf %698, %704 : vector<9x21xf32>
    %706 = arith.addf %693, %705 : vector<9x21xf32>
    %707 = vector.extract_strided_slice %1 {offsets = [37, 0], sizes = [1, 21], strides = [1, 1]} : vector<48x21xf32> to vector<1x21xf32>
    %708 = vector.broadcast %707 : vector<1x21xf32> to vector<9x21xf32>
    %709 = arith.mulf %698, %708 : vector<9x21xf32>
    %710 = arith.addf %697, %709 : vector<9x21xf32>
    %711 = vector.extract_strided_slice %355 {offsets = [1, 2], sizes = [9, 21], strides = [1, 1]} : vector<12x24xf32> to vector<9x21xf32>
    %712 = vector.extract_strided_slice %1 {offsets = [6, 0], sizes = [1, 21], strides = [1, 1]} : vector<48x21xf32> to vector<1x21xf32>
    %713 = vector.broadcast %712 : vector<1x21xf32> to vector<9x21xf32>
    %714 = arith.mulf %711, %713 : vector<9x21xf32>
    %715 = arith.addf %702, %714 : vector<9x21xf32>
    %716 = vector.extract_strided_slice %1 {offsets = [22, 0], sizes = [1, 21], strides = [1, 1]} : vector<48x21xf32> to vector<1x21xf32>
    %717 = vector.broadcast %716 : vector<1x21xf32> to vector<9x21xf32>
    %718 = arith.mulf %711, %717 : vector<9x21xf32>
    %719 = arith.addf %706, %718 : vector<9x21xf32>
    %720 = vector.extract_strided_slice %1 {offsets = [38, 0], sizes = [1, 21], strides = [1, 1]} : vector<48x21xf32> to vector<1x21xf32>
    %721 = vector.broadcast %720 : vector<1x21xf32> to vector<9x21xf32>
    %722 = arith.mulf %711, %721 : vector<9x21xf32>
    %723 = arith.addf %710, %722 : vector<9x21xf32>
    %724 = vector.extract_strided_slice %355 {offsets = [1, 3], sizes = [9, 21], strides = [1, 1]} : vector<12x24xf32> to vector<9x21xf32>
    %725 = vector.extract_strided_slice %1 {offsets = [7, 0], sizes = [1, 21], strides = [1, 1]} : vector<48x21xf32> to vector<1x21xf32>
    %726 = vector.broadcast %725 : vector<1x21xf32> to vector<9x21xf32>
    %727 = arith.mulf %724, %726 : vector<9x21xf32>
    %728 = arith.addf %715, %727 : vector<9x21xf32>
    %729 = vector.extract_strided_slice %1 {offsets = [23, 0], sizes = [1, 21], strides = [1, 1]} : vector<48x21xf32> to vector<1x21xf32>
    %730 = vector.broadcast %729 : vector<1x21xf32> to vector<9x21xf32>
    %731 = arith.mulf %724, %730 : vector<9x21xf32>
    %732 = arith.addf %719, %731 : vector<9x21xf32>
    %733 = vector.extract_strided_slice %1 {offsets = [39, 0], sizes = [1, 21], strides = [1, 1]} : vector<48x21xf32> to vector<1x21xf32>
    %734 = vector.broadcast %733 : vector<1x21xf32> to vector<9x21xf32>
    %735 = arith.mulf %724, %734 : vector<9x21xf32>
    %736 = arith.addf %723, %735 : vector<9x21xf32>
    %737 = vector.extract_strided_slice %355 {offsets = [2, 0], sizes = [9, 21], strides = [1, 1]} : vector<12x24xf32> to vector<9x21xf32>
    %738 = vector.extract_strided_slice %1 {offsets = [8, 0], sizes = [1, 21], strides = [1, 1]} : vector<48x21xf32> to vector<1x21xf32>
    %739 = vector.broadcast %738 : vector<1x21xf32> to vector<9x21xf32>
    %740 = arith.mulf %737, %739 : vector<9x21xf32>
    %741 = arith.addf %728, %740 : vector<9x21xf32>
    %742 = vector.extract_strided_slice %1 {offsets = [24, 0], sizes = [1, 21], strides = [1, 1]} : vector<48x21xf32> to vector<1x21xf32>
    %743 = vector.broadcast %742 : vector<1x21xf32> to vector<9x21xf32>
    %744 = arith.mulf %737, %743 : vector<9x21xf32>
    %745 = arith.addf %732, %744 : vector<9x21xf32>
    %746 = vector.extract_strided_slice %1 {offsets = [40, 0], sizes = [1, 21], strides = [1, 1]} : vector<48x21xf32> to vector<1x21xf32>
    %747 = vector.broadcast %746 : vector<1x21xf32> to vector<9x21xf32>
    %748 = arith.mulf %737, %747 : vector<9x21xf32>
    %749 = arith.addf %736, %748 : vector<9x21xf32>
    %750 = vector.extract_strided_slice %355 {offsets = [2, 1], sizes = [9, 21], strides = [1, 1]} : vector<12x24xf32> to vector<9x21xf32>
    %751 = vector.extract_strided_slice %1 {offsets = [9, 0], sizes = [1, 21], strides = [1, 1]} : vector<48x21xf32> to vector<1x21xf32>
    %752 = vector.broadcast %751 : vector<1x21xf32> to vector<9x21xf32>
    %753 = arith.mulf %750, %752 : vector<9x21xf32>
    %754 = arith.addf %741, %753 : vector<9x21xf32>
    %755 = vector.extract_strided_slice %1 {offsets = [25, 0], sizes = [1, 21], strides = [1, 1]} : vector<48x21xf32> to vector<1x21xf32>
    %756 = vector.broadcast %755 : vector<1x21xf32> to vector<9x21xf32>
    %757 = arith.mulf %750, %756 : vector<9x21xf32>
    %758 = arith.addf %745, %757 : vector<9x21xf32>
    %759 = vector.extract_strided_slice %1 {offsets = [41, 0], sizes = [1, 21], strides = [1, 1]} : vector<48x21xf32> to vector<1x21xf32>
    %760 = vector.broadcast %759 : vector<1x21xf32> to vector<9x21xf32>
    %761 = arith.mulf %750, %760 : vector<9x21xf32>
    %762 = arith.addf %749, %761 : vector<9x21xf32>
    %763 = vector.extract_strided_slice %355 {offsets = [2, 2], sizes = [9, 21], strides = [1, 1]} : vector<12x24xf32> to vector<9x21xf32>
    %764 = vector.extract_strided_slice %1 {offsets = [10, 0], sizes = [1, 21], strides = [1, 1]} : vector<48x21xf32> to vector<1x21xf32>
    %765 = vector.broadcast %764 : vector<1x21xf32> to vector<9x21xf32>
    %766 = arith.mulf %763, %765 : vector<9x21xf32>
    %767 = arith.addf %754, %766 : vector<9x21xf32>
    %768 = vector.extract_strided_slice %1 {offsets = [26, 0], sizes = [1, 21], strides = [1, 1]} : vector<48x21xf32> to vector<1x21xf32>
    %769 = vector.broadcast %768 : vector<1x21xf32> to vector<9x21xf32>
    %770 = arith.mulf %763, %769 : vector<9x21xf32>
    %771 = arith.addf %758, %770 : vector<9x21xf32>
    %772 = vector.extract_strided_slice %1 {offsets = [42, 0], sizes = [1, 21], strides = [1, 1]} : vector<48x21xf32> to vector<1x21xf32>
    %773 = vector.broadcast %772 : vector<1x21xf32> to vector<9x21xf32>
    %774 = arith.mulf %763, %773 : vector<9x21xf32>
    %775 = arith.addf %762, %774 : vector<9x21xf32>
    %776 = vector.extract_strided_slice %355 {offsets = [2, 3], sizes = [9, 21], strides = [1, 1]} : vector<12x24xf32> to vector<9x21xf32>
    %777 = vector.extract_strided_slice %1 {offsets = [11, 0], sizes = [1, 21], strides = [1, 1]} : vector<48x21xf32> to vector<1x21xf32>
    %778 = vector.broadcast %777 : vector<1x21xf32> to vector<9x21xf32>
    %779 = arith.mulf %776, %778 : vector<9x21xf32>
    %780 = arith.addf %767, %779 : vector<9x21xf32>
    %781 = vector.extract_strided_slice %1 {offsets = [27, 0], sizes = [1, 21], strides = [1, 1]} : vector<48x21xf32> to vector<1x21xf32>
    %782 = vector.broadcast %781 : vector<1x21xf32> to vector<9x21xf32>
    %783 = arith.mulf %776, %782 : vector<9x21xf32>
    %784 = arith.addf %771, %783 : vector<9x21xf32>
    %785 = vector.extract_strided_slice %1 {offsets = [43, 0], sizes = [1, 21], strides = [1, 1]} : vector<48x21xf32> to vector<1x21xf32>
    %786 = vector.broadcast %785 : vector<1x21xf32> to vector<9x21xf32>
    %787 = arith.mulf %776, %786 : vector<9x21xf32>
    %788 = arith.addf %775, %787 : vector<9x21xf32>
    %789 = vector.extract_strided_slice %355 {offsets = [3, 0], sizes = [9, 21], strides = [1, 1]} : vector<12x24xf32> to vector<9x21xf32>
    %790 = vector.extract_strided_slice %1 {offsets = [12, 0], sizes = [1, 21], strides = [1, 1]} : vector<48x21xf32> to vector<1x21xf32>
    %791 = vector.broadcast %790 : vector<1x21xf32> to vector<9x21xf32>
    %792 = arith.mulf %789, %791 : vector<9x21xf32>
    %793 = arith.addf %780, %792 : vector<9x21xf32>
    %794 = vector.extract_strided_slice %1 {offsets = [28, 0], sizes = [1, 21], strides = [1, 1]} : vector<48x21xf32> to vector<1x21xf32>
    %795 = vector.broadcast %794 : vector<1x21xf32> to vector<9x21xf32>
    %796 = arith.mulf %789, %795 : vector<9x21xf32>
    %797 = arith.addf %784, %796 : vector<9x21xf32>
    %798 = vector.extract_strided_slice %1 {offsets = [44, 0], sizes = [1, 21], strides = [1, 1]} : vector<48x21xf32> to vector<1x21xf32>
    %799 = vector.broadcast %798 : vector<1x21xf32> to vector<9x21xf32>
    %800 = arith.mulf %789, %799 : vector<9x21xf32>
    %801 = arith.addf %788, %800 : vector<9x21xf32>
    %802 = vector.extract_strided_slice %355 {offsets = [3, 1], sizes = [9, 21], strides = [1, 1]} : vector<12x24xf32> to vector<9x21xf32>
    %803 = vector.extract_strided_slice %1 {offsets = [13, 0], sizes = [1, 21], strides = [1, 1]} : vector<48x21xf32> to vector<1x21xf32>
    %804 = vector.broadcast %803 : vector<1x21xf32> to vector<9x21xf32>
    %805 = arith.mulf %802, %804 : vector<9x21xf32>
    %806 = arith.addf %793, %805 : vector<9x21xf32>
    %807 = vector.extract_strided_slice %1 {offsets = [29, 0], sizes = [1, 21], strides = [1, 1]} : vector<48x21xf32> to vector<1x21xf32>
    %808 = vector.broadcast %807 : vector<1x21xf32> to vector<9x21xf32>
    %809 = arith.mulf %802, %808 : vector<9x21xf32>
    %810 = arith.addf %797, %809 : vector<9x21xf32>
    %811 = vector.extract_strided_slice %1 {offsets = [45, 0], sizes = [1, 21], strides = [1, 1]} : vector<48x21xf32> to vector<1x21xf32>
    %812 = vector.broadcast %811 : vector<1x21xf32> to vector<9x21xf32>
    %813 = arith.mulf %802, %812 : vector<9x21xf32>
    %814 = arith.addf %801, %813 : vector<9x21xf32>
    %815 = vector.extract_strided_slice %355 {offsets = [3, 2], sizes = [9, 21], strides = [1, 1]} : vector<12x24xf32> to vector<9x21xf32>
    %816 = vector.extract_strided_slice %1 {offsets = [14, 0], sizes = [1, 21], strides = [1, 1]} : vector<48x21xf32> to vector<1x21xf32>
    %817 = vector.broadcast %816 : vector<1x21xf32> to vector<9x21xf32>
    %818 = arith.mulf %815, %817 : vector<9x21xf32>
    %819 = arith.addf %806, %818 : vector<9x21xf32>
    %820 = vector.extract_strided_slice %1 {offsets = [30, 0], sizes = [1, 21], strides = [1, 1]} : vector<48x21xf32> to vector<1x21xf32>
    %821 = vector.broadcast %820 : vector<1x21xf32> to vector<9x21xf32>
    %822 = arith.mulf %815, %821 : vector<9x21xf32>
    %823 = arith.addf %810, %822 : vector<9x21xf32>
    %824 = vector.extract_strided_slice %1 {offsets = [46, 0], sizes = [1, 21], strides = [1, 1]} : vector<48x21xf32> to vector<1x21xf32>
    %825 = vector.broadcast %824 : vector<1x21xf32> to vector<9x21xf32>
    %826 = arith.mulf %815, %825 : vector<9x21xf32>
    %827 = arith.addf %814, %826 : vector<9x21xf32>
    %828 = vector.extract_strided_slice %355 {offsets = [3, 3], sizes = [9, 21], strides = [1, 1]} : vector<12x24xf32> to vector<9x21xf32>
    %829 = vector.extract_strided_slice %1 {offsets = [15, 0], sizes = [1, 21], strides = [1, 1]} : vector<48x21xf32> to vector<1x21xf32>
    %830 = vector.broadcast %829 : vector<1x21xf32> to vector<9x21xf32>
    %831 = arith.mulf %828, %830 : vector<9x21xf32>
    %832 = arith.addf %819, %831 : vector<9x21xf32>
    %833 = vector.extract_strided_slice %1 {offsets = [31, 0], sizes = [1, 21], strides = [1, 1]} : vector<48x21xf32> to vector<1x21xf32>
    %834 = vector.broadcast %833 : vector<1x21xf32> to vector<9x21xf32>
    %835 = arith.mulf %828, %834 : vector<9x21xf32>
    %836 = arith.addf %823, %835 : vector<9x21xf32>
    %837 = vector.extract_strided_slice %1 {offsets = [47, 0], sizes = [1, 21], strides = [1, 1]} : vector<48x21xf32> to vector<1x21xf32>
    %838 = vector.broadcast %837 : vector<1x21xf32> to vector<9x21xf32>
    %839 = arith.mulf %828, %838 : vector<9x21xf32>
    %840 = arith.addf %827, %839 : vector<9x21xf32>
    %cst_143 = arith.constant dense<0.000000e+00> : vector<9x9xf32>
    %841 = tpu.matmul %832, %3, %cst_143 {dimension_numbers = #tpu.dot_dimension_numbers<[1], [0], [0], [1], [0, 0, 1, 1], [], []>} : vector<9x21xf32>, vector<21x9xf32>, vector<9x9xf32> -> vector<9x9xf32>
    %c0_144 = arith.constant 0 : index
    %842 = memref.load %arg16[%c0_144] : memref<3xf32, #tpu.memory_space<smem>>
    %843 = vector.broadcast %842 : f32 to vector<9x9xf32>
    %844 = arith.addf %841, %843 : vector<9x9xf32>
    %cst_145 = arith.constant 0.000000e+00 : f32
    %845 = vector.broadcast %cst_145 : f32 to vector<9x9xf32>
    %846 = arith.maximumf %844, %845 : vector<9x9xf32>
    %847 = vector.extract_strided_slice %846 {offsets = [0, 0], sizes = [8, 9], strides = [1, 1]} : vector<9x9xf32> to vector<8x9xf32>
    %848 = vector.extract_strided_slice %846 {offsets = [1, 0], sizes = [8, 9], strides = [1, 1]} : vector<9x9xf32> to vector<8x9xf32>
    %849 = arith.maximumf %847, %848 : vector<8x9xf32>
    %850 = vector.extract_strided_slice %849 {offsets = [0, 0], sizes = [8, 8], strides = [1, 1]} : vector<8x9xf32> to vector<8x8xf32>
    %851 = vector.extract_strided_slice %849 {offsets = [0, 1], sizes = [8, 8], strides = [1, 1]} : vector<8x9xf32> to vector<8x8xf32>
    %852 = arith.maximumf %850, %851 : vector<8x8xf32>
    %cst_146 = arith.constant dense<0.000000e+00> : vector<8x4xf32>
    %853 = tpu.matmul %852, %7, %cst_146 {dimension_numbers = #tpu.dot_dimension_numbers<[1], [0], [0], [1], [0, 0, 1, 1], [], []>} : vector<8x8xf32>, vector<8x4xf32>, vector<8x4xf32> -> vector<8x4xf32>
    %854 = vector.extract_strided_slice %853 {offsets = [0, 0], sizes = [1, 4], strides = [1, 1]} : vector<8x4xf32> to vector<1x4xf32>
    %c1_147 = arith.constant 1 : index
    %c0_148 = arith.constant 0 : index
    %855 = vector.load %arg19[%c1_147, %c0_148] : memref<2x48xf32, #tpu.memory_space<vmem>>, vector<1x4xf32>
    tpu.vector_store %arg19[%c1_147, %c0_148], %854 {strides = array<i32>} : memref<2x48xf32, #tpu.memory_space<vmem>>, vector<1x4xf32>,
    %856 = vector.extract_strided_slice %853 {offsets = [2, 0], sizes = [1, 4], strides = [1, 1]} : vector<8x4xf32> to vector<1x4xf32>
    %c1_149 = arith.constant 1 : index
    %c4_150 = arith.constant 4 : index
    %857 = vector.load %arg19[%c1_149, %c4_150] : memref<2x48xf32, #tpu.memory_space<vmem>>, vector<1x4xf32>
    tpu.vector_store %arg19[%c1_149, %c4_150], %856 {strides = array<i32>} : memref<2x48xf32, #tpu.memory_space<vmem>>, vector<1x4xf32>,
    %858 = vector.extract_strided_slice %853 {offsets = [4, 0], sizes = [1, 4], strides = [1, 1]} : vector<8x4xf32> to vector<1x4xf32>
    %c1_151 = arith.constant 1 : index
    %c8_152 = arith.constant 8 : index
    %859 = vector.load %arg19[%c1_151, %c8_152] : memref<2x48xf32, #tpu.memory_space<vmem>>, vector<1x4xf32>
    tpu.vector_store %arg19[%c1_151, %c8_152], %858 {strides = array<i32>} : memref<2x48xf32, #tpu.memory_space<vmem>>, vector<1x4xf32>,
    %860 = vector.extract_strided_slice %853 {offsets = [6, 0], sizes = [1, 4], strides = [1, 1]} : vector<8x4xf32> to vector<1x4xf32>
    %c1_153 = arith.constant 1 : index
    %c12_154 = arith.constant 12 : index
    %861 = vector.load %arg19[%c1_153, %c12_154] : memref<2x48xf32, #tpu.memory_space<vmem>>, vector<1x4xf32>
    tpu.vector_store %arg19[%c1_153, %c12_154], %860 {strides = array<i32>} : memref<2x48xf32, #tpu.memory_space<vmem>>, vector<1x4xf32>,
    %cst_155 = arith.constant dense<0.000000e+00> : vector<9x9xf32>
    %862 = tpu.matmul %836, %3, %cst_155 {dimension_numbers = #tpu.dot_dimension_numbers<[1], [0], [0], [1], [0, 0, 1, 1], [], []>} : vector<9x21xf32>, vector<21x9xf32>, vector<9x9xf32> -> vector<9x9xf32>
    %c1_156 = arith.constant 1 : index
    %863 = memref.load %arg16[%c1_156] : memref<3xf32, #tpu.memory_space<smem>>
    %864 = vector.broadcast %863 : f32 to vector<9x9xf32>
    %865 = arith.addf %862, %864 : vector<9x9xf32>
    %cst_157 = arith.constant 0.000000e+00 : f32
    %866 = vector.broadcast %cst_157 : f32 to vector<9x9xf32>
    %867 = arith.maximumf %865, %866 : vector<9x9xf32>
    %868 = vector.extract_strided_slice %867 {offsets = [0, 0], sizes = [8, 9], strides = [1, 1]} : vector<9x9xf32> to vector<8x9xf32>
    %869 = vector.extract_strided_slice %867 {offsets = [1, 0], sizes = [8, 9], strides = [1, 1]} : vector<9x9xf32> to vector<8x9xf32>
    %870 = arith.maximumf %868, %869 : vector<8x9xf32>
    %871 = vector.extract_strided_slice %870 {offsets = [0, 0], sizes = [8, 8], strides = [1, 1]} : vector<8x9xf32> to vector<8x8xf32>
    %872 = vector.extract_strided_slice %870 {offsets = [0, 1], sizes = [8, 8], strides = [1, 1]} : vector<8x9xf32> to vector<8x8xf32>
    %873 = arith.maximumf %871, %872 : vector<8x8xf32>
    %cst_158 = arith.constant dense<0.000000e+00> : vector<8x4xf32>
    %874 = tpu.matmul %873, %7, %cst_158 {dimension_numbers = #tpu.dot_dimension_numbers<[1], [0], [0], [1], [0, 0, 1, 1], [], []>} : vector<8x8xf32>, vector<8x4xf32>, vector<8x4xf32> -> vector<8x4xf32>
    %875 = vector.extract_strided_slice %874 {offsets = [0, 0], sizes = [1, 4], strides = [1, 1]} : vector<8x4xf32> to vector<1x4xf32>
    %c1_159 = arith.constant 1 : index
    %c16_160 = arith.constant 16 : index
    %876 = vector.load %arg19[%c1_159, %c16_160] : memref<2x48xf32, #tpu.memory_space<vmem>>, vector<1x4xf32>
    tpu.vector_store %arg19[%c1_159, %c16_160], %875 {strides = array<i32>} : memref<2x48xf32, #tpu.memory_space<vmem>>, vector<1x4xf32>,
    %877 = vector.extract_strided_slice %874 {offsets = [2, 0], sizes = [1, 4], strides = [1, 1]} : vector<8x4xf32> to vector<1x4xf32>
    %c1_161 = arith.constant 1 : index
    %c20_162 = arith.constant 20 : index
    %878 = vector.load %arg19[%c1_161, %c20_162] : memref<2x48xf32, #tpu.memory_space<vmem>>, vector<1x4xf32>
    tpu.vector_store %arg19[%c1_161, %c20_162], %877 {strides = array<i32>} : memref<2x48xf32, #tpu.memory_space<vmem>>, vector<1x4xf32>,
    %879 = vector.extract_strided_slice %874 {offsets = [4, 0], sizes = [1, 4], strides = [1, 1]} : vector<8x4xf32> to vector<1x4xf32>
    %c1_163 = arith.constant 1 : index
    %c24_164 = arith.constant 24 : index
    %880 = vector.load %arg19[%c1_163, %c24_164] : memref<2x48xf32, #tpu.memory_space<vmem>>, vector<1x4xf32>
    tpu.vector_store %arg19[%c1_163, %c24_164], %879 {strides = array<i32>} : memref<2x48xf32, #tpu.memory_space<vmem>>, vector<1x4xf32>,
    %881 = vector.extract_strided_slice %874 {offsets = [6, 0], sizes = [1, 4], strides = [1, 1]} : vector<8x4xf32> to vector<1x4xf32>
    %c1_165 = arith.constant 1 : index
    %c28_166 = arith.constant 28 : index
    %882 = vector.load %arg19[%c1_165, %c28_166] : memref<2x48xf32, #tpu.memory_space<vmem>>, vector<1x4xf32>
    tpu.vector_store %arg19[%c1_165, %c28_166], %881 {strides = array<i32>} : memref<2x48xf32, #tpu.memory_space<vmem>>, vector<1x4xf32>,
    %cst_167 = arith.constant dense<0.000000e+00> : vector<9x9xf32>
    %883 = tpu.matmul %840, %3, %cst_167 {dimension_numbers = #tpu.dot_dimension_numbers<[1], [0], [0], [1], [0, 0, 1, 1], [], []>} : vector<9x21xf32>, vector<21x9xf32>, vector<9x9xf32> -> vector<9x9xf32>
    %c2_168 = arith.constant 2 : index
    %884 = memref.load %arg16[%c2_168] : memref<3xf32, #tpu.memory_space<smem>>
    %885 = vector.broadcast %884 : f32 to vector<9x9xf32>
    %886 = arith.addf %883, %885 : vector<9x9xf32>
    %cst_169 = arith.constant 0.000000e+00 : f32
    %887 = vector.broadcast %cst_169 : f32 to vector<9x9xf32>
    %888 = arith.maximumf %886, %887 : vector<9x9xf32>
    %889 = vector.extract_strided_slice %888 {offsets = [0, 0], sizes = [8, 9], strides = [1, 1]} : vector<9x9xf32> to vector<8x9xf32>
    %890 = vector.extract_strided_slice %888 {offsets = [1, 0], sizes = [8, 9], strides = [1, 1]} : vector<9x9xf32> to vector<8x9xf32>
    %891 = arith.maximumf %889, %890 : vector<8x9xf32>
    %892 = vector.extract_strided_slice %891 {offsets = [0, 0], sizes = [8, 8], strides = [1, 1]} : vector<8x9xf32> to vector<8x8xf32>
    %893 = vector.extract_strided_slice %891 {offsets = [0, 1], sizes = [8, 8], strides = [1, 1]} : vector<8x9xf32> to vector<8x8xf32>
    %894 = arith.maximumf %892, %893 : vector<8x8xf32>
    %cst_170 = arith.constant dense<0.000000e+00> : vector<8x4xf32>
    %895 = tpu.matmul %894, %7, %cst_170 {dimension_numbers = #tpu.dot_dimension_numbers<[1], [0], [0], [1], [0, 0, 1, 1], [], []>} : vector<8x8xf32>, vector<8x4xf32>, vector<8x4xf32> -> vector<8x4xf32>
    %896 = vector.extract_strided_slice %895 {offsets = [0, 0], sizes = [1, 4], strides = [1, 1]} : vector<8x4xf32> to vector<1x4xf32>
    %c1_171 = arith.constant 1 : index
    %c32_172 = arith.constant 32 : index
    %897 = vector.load %arg19[%c1_171, %c32_172] : memref<2x48xf32, #tpu.memory_space<vmem>>, vector<1x4xf32>
    tpu.vector_store %arg19[%c1_171, %c32_172], %896 {strides = array<i32>} : memref<2x48xf32, #tpu.memory_space<vmem>>, vector<1x4xf32>,
    %898 = vector.extract_strided_slice %895 {offsets = [2, 0], sizes = [1, 4], strides = [1, 1]} : vector<8x4xf32> to vector<1x4xf32>
    %c1_173 = arith.constant 1 : index
    %c36_174 = arith.constant 36 : index
    %899 = vector.load %arg19[%c1_173, %c36_174] : memref<2x48xf32, #tpu.memory_space<vmem>>, vector<1x4xf32>
    tpu.vector_store %arg19[%c1_173, %c36_174], %898 {strides = array<i32>} : memref<2x48xf32, #tpu.memory_space<vmem>>, vector<1x4xf32>,
    %900 = vector.extract_strided_slice %895 {offsets = [4, 0], sizes = [1, 4], strides = [1, 1]} : vector<8x4xf32> to vector<1x4xf32>
    %c1_175 = arith.constant 1 : index
    %c40_176 = arith.constant 40 : index
    %901 = vector.load %arg19[%c1_175, %c40_176] : memref<2x48xf32, #tpu.memory_space<vmem>>, vector<1x4xf32>
    tpu.vector_store %arg19[%c1_175, %c40_176], %900 {strides = array<i32>} : memref<2x48xf32, #tpu.memory_space<vmem>>, vector<1x4xf32>,
    %902 = vector.extract_strided_slice %895 {offsets = [6, 0], sizes = [1, 4], strides = [1, 1]} : vector<8x4xf32> to vector<1x4xf32>
    %c1_177 = arith.constant 1 : index
    %c44_178 = arith.constant 44 : index
    %903 = vector.load %arg19[%c1_177, %c44_178] : memref<2x48xf32, #tpu.memory_space<vmem>>, vector<1x4xf32>
    tpu.vector_store %arg19[%c1_177, %c44_178], %902 {strides = array<i32>} : memref<2x48xf32, #tpu.memory_space<vmem>>, vector<1x4xf32>,
    %c0_179 = arith.constant 0 : index
    %c0_180 = arith.constant 0 : index
    %904 = vector.load %arg19[%c0_179, %c0_180] : memref<2x48xf32, #tpu.memory_space<vmem>>, vector<2x48xf32>
    %c0_181 = arith.constant 0 : index
    %c0_182 = arith.constant 0 : index
    %905 = vector.load %arg9[%c0_181, %c0_182] : memref<48x8xf32, #tpu.memory_space<vmem>>, vector<48x8xf32>
    %cst_183 = arith.constant dense<0.000000e+00> : vector<2x8xf32>
    %906 = tpu.matmul %904, %905, %cst_183 {dimension_numbers = #tpu.dot_dimension_numbers<[1], [0], [0], [1], [0, 0, 1, 1], [], []>} : vector<2x48xf32>, vector<48x8xf32>, vector<2x8xf32> -> vector<2x8xf32>
    %c0_184 = arith.constant 0 : index
    %c0_185 = arith.constant 0 : index
    %907 = vector.load %arg10[%c0_184, %c0_185] : memref<1x8xf32, #tpu.memory_space<vmem>>, vector<1x8xf32>
    %908 = vector.broadcast %907 : vector<1x8xf32> to vector<2x8xf32>
    %909 = arith.addf %906, %908 : vector<2x8xf32>
    %cst_186 = arith.constant 0.000000e+00 : f32
    %910 = vector.broadcast %cst_186 : f32 to vector<2x8xf32>
    %911 = arith.maximumf %909, %910 : vector<2x8xf32>
    %c0_187 = arith.constant 0 : index
    %c0_188 = arith.constant 0 : index
    %912 = vector.load %arg11[%c0_187, %c0_188] : memref<8x10xf32, #tpu.memory_space<vmem>>, vector<8x10xf32>
    %cst_189 = arith.constant dense<0.000000e+00> : vector<2x10xf32>
    %913 = tpu.matmul %911, %912, %cst_189 {dimension_numbers = #tpu.dot_dimension_numbers<[1], [0], [0], [1], [0, 0, 1, 1], [], []>} : vector<2x8xf32>, vector<8x10xf32>, vector<2x10xf32> -> vector<2x10xf32>
    %c0_190 = arith.constant 0 : index
    %c0_191 = arith.constant 0 : index
    %914 = vector.load %arg12[%c0_190, %c0_191] : memref<1x10xf32, #tpu.memory_space<vmem>>, vector<1x10xf32>
    %915 = vector.broadcast %914 : vector<1x10xf32> to vector<2x10xf32>
    %916 = arith.addf %913, %915 : vector<2x10xf32>
    %c0_192 = arith.constant 0 : index
    %c0_193 = arith.constant 0 : index
    %917 = vector.load %arg17[%c0_192, %c0_193] : memref<2x10xf32, #tpu.memory_space<vmem>>, vector<2x10xf32>
    tpu.vector_store %arg17[%c0_192, %c0_193], %916 {strides = array<i32>} : memref<2x10xf32, #tpu.memory_space<vmem>>, vector<2x10xf32>,
    return
  }
}

</mosaic_0001>

<llo_original>
// kernel: convbn_forward.1
$region0: #{convbn_forward.1}
  #allocation0 [shape = 'u32[]', space=smem, size = 0x4, offset = 0x4, fixed_abs, tag = 'smem constant byte address 0x4 - core index']
  #allocation1 [shape = 'u32[72,128]{1,0:T(1,128)}', space=vmem, size = 0x9000, scoped, tag = 'internal scratch']
  #allocation2 [shape = 'f32[2,26,104]{2,1,0:T(8,128)}', space=vmem, size = 0x8000, scoped, tag = 'scratch operand']
  #allocation3 [shape = 'f32[2,48]{1,0:T(2,128)}', space=vmem, size = 0x400, scoped, tag = 'scratch operand']
  %s0 = inlined_call_operand.vmem [shape: f32[2,4,26,26], index: 0, kind: input, shape index: {}]
  %s1 = inlined_call_operand.vmem [shape: f32[18,102], index: 1, kind: input, shape index: {}]
  %s2 = inlined_call_operand.vmem [shape: f32[102,24], index: 2, kind: input, shape index: {}]
  %s3 = inlined_call_operand.vmem [shape: f32[12,23], index: 3, kind: input, shape index: {}]
  %s4 = inlined_call_operand.vmem [shape: f32[23,24], index: 4, kind: input, shape index: {}]
  %s5 = inlined_call_operand.vmem [shape: f32[23,24], index: 5, kind: input, shape index: {}]
  %s6 = inlined_call_operand.vmem [shape: f32[48,21], index: 6, kind: input, shape index: {}]
  %s7 = inlined_call_operand.vmem [shape: f32[21,9], index: 7, kind: input, shape index: {}]
  %s8 = inlined_call_operand.vmem [shape: f32[8,4], index: 8, kind: input, shape index: {}]
  %s9 = inlined_call_operand.vmem [shape: f32[48,8], index: 9, kind: input, shape index: {}]
  %s10 = inlined_call_operand.vmem [shape: f32[1,8], index: 10, kind: input, shape index: {}]
  %s11 = inlined_call_operand.vmem [shape: f32[8,10], index: 11, kind: input, shape index: {}]
  %s12 = inlined_call_operand.vmem [shape: f32[1,10], index: 12, kind: input, shape index: {}]
  %s13 = inlined_call_operand.vmem [shape: f32[2], index: 13, kind: input, shape index: {}]
  %s14 = inlined_call_operand.vmem [shape: f32[2], index: 14, kind: input, shape index: {}]
  %s15 = inlined_call_operand.vmem [shape: f32[2], index: 15, kind: input, shape index: {}]
  %s16 = inlined_call_operand.vmem [shape: f32[3], index: 16, kind: input, shape index: {}]
  %s17 = inlined_call_operand.hbm [shape: f32[2,10], index: 17, kind: output, shape index: {}]
  %s18 = sld [smem:[#allocation0]]
  $region94: #{convbn_forward.1} parent=0
    _
  %s20 = ssub.s32 1, %s18
  %s21 = scalar_select 0, %s20, %s18
  $region1: #{convbn_forward.1} parent=0
    #allocation4 [shape = 'u8[512]{0}', space=smem, size = 0x200, scoped, tag = 'input window, operand 13, single buffered']
    #allocation5 [shape = 's32[1]{0}', space=sflag, size = 0x4, scoped, tag = 'scoped memory for convbn_forward.1']
    #allocation6 [shape = 's32[1]{0}', space=sflag, size = 0x4, scoped, tag = 'scoped memory for convbn_forward.1']
    #allocation7 [shape = 'u8[512]{0}', space=smem, size = 0x200, scoped, tag = 'input window, operand 14, single buffered']
    #allocation8 [shape = 's32[1]{0}', space=sflag, size = 0x4, scoped, tag = 'scoped memory for convbn_forward.1']
    #allocation9 [shape = 'u8[512]{0}', space=smem, size = 0x200, scoped, tag = 'input window, operand 15, single buffered']
    #allocation10 [shape = 'u8[512]{0}', space=smem, size = 0x200, scoped, tag = 'input window, operand 16, single buffered']
    #allocation11 [shape = 's32[1]{0}', space=sflag, size = 0x4, scoped, tag = 'scoped memory for convbn_forward.1']
    #allocation12 [shape = 'u8[1024]{0}', space=vmem, size = 0x400, scoped, tag = 'output window, operand 0, single buffered']
    %22 = vsyncpa [#allocation6], 0
    %23 = vsyncpa [#allocation8], 0
    %24 = vsyncpa [#allocation11], 0
    %25 = vsyncpa [#allocation5], 0
    // Predicated region
    $region2: #{convbn_forward.1} parent=1 // pred_check
      _
    $region3: #{convbn_forward.1} parent=1 // pred_check_branch
      %27 = sbr.rel (0) target = $region5
    $region4: #{convbn_forward.1} parent=1 // pred_region
      _
    $region5: #{convbn_forward.1} parent=1 // pred_fallthru
      _
    // Predicated region
    $region6: #{convbn_forward.1} parent=1 // pred_check
      _
    $region7: #{convbn_forward.1} parent=1 // pred_check_branch
      %29 = sbr.rel (0) target = $region9
    $region8: #{convbn_forward.1} parent=1 // pred_region
      _
    $region9: #{convbn_forward.1} parent=1 // pred_fallthru
      _
    // Predicated region
    $region10: #{convbn_forward.1} parent=1 // pred_check
      _
    $region11: #{convbn_forward.1} parent=1 // pred_check_branch
      %31 = sbr.rel (0) target = $region13
    $region12: #{convbn_forward.1} parent=1 // pred_region
      _
    $region13: #{convbn_forward.1} parent=1 // pred_fallthru
      _
    // Predicated region
    $region14: #{convbn_forward.1} parent=1 // pred_check
      _
    $region15: #{convbn_forward.1} parent=1 // pred_check_branch
      %33 = sbr.rel (0) target = $region17
    $region16: #{convbn_forward.1} parent=1 // pred_region
      _
    $region17: #{convbn_forward.1} parent=1 // pred_fallthru
      _
    // Predicated region
    $region18: #{convbn_forward.1} parent=1 // pred_check
      _
    $region19: #{convbn_forward.1} parent=1 // pred_check_branch
      %35 = sbr.rel (0) target = $region21
    $region20: #{convbn_forward.1} parent=1 // pred_region
      _
    $region21: #{convbn_forward.1} parent=1 // pred_fallthru
      _
    // Predicated region
    $region22: #{convbn_forward.1} parent=1 // pred_check
      _
    $region23: #{convbn_forward.1} parent=1 // pred_check_branch
      %37 = sbr.rel (0) target = $region25
    $region24: #{convbn_forward.1} parent=1 // pred_region
      _
    $region25: #{convbn_forward.1} parent=1 // pred_fallthru
      _
    // Predicated region
    $region26: #{convbn_forward.1} parent=1 // pred_check
      _
    $region27: #{convbn_forward.1} parent=1 // pred_check_branch
      %39 = sbr.rel (0) target = $region29
    $region28: #{convbn_forward.1} parent=1 // pred_region
      _
    $region29: #{convbn_forward.1} parent=1 // pred_fallthru
      _
    // Predicated region
    $region30: #{convbn_forward.1} parent=1 // pred_check
      _
    $region31: #{convbn_forward.1} parent=1 // pred_check_branch
      %41 = sbr.rel (0) target = $region33
    $region32: #{convbn_forward.1} parent=1 // pred_region
      _
    $region33: #{convbn_forward.1} parent=1 // pred_fallthru
      _
    // Predicated region
    $region34: #{convbn_forward.1} parent=1 // pred_check
      _
    $region35: #{convbn_forward.1} parent=1 // pred_check_branch
      %43 = sbr.rel (0) target = $region37
    $region36: #{convbn_forward.1} parent=1 // pred_region
      _
    $region37: #{convbn_forward.1} parent=1 // pred_fallthru
      _
    // Predicated region
    $region38: #{convbn_forward.1} parent=1 // pred_check
      _
    $region39: #{convbn_forward.1} parent=1 // pred_check_branch
      %45 = sbr.rel (0) target = $region41
    $region40: #{convbn_forward.1} parent=1 // pred_region
      _
    $region41: #{convbn_forward.1} parent=1 // pred_fallthru
      _
    // Predicated region
    $region42: #{convbn_forward.1} parent=1 // pred_check
      _
    $region43: #{convbn_forward.1} parent=1 // pred_check_branch
      %47 = sbr.rel (0) target = $region45
    $region44: #{convbn_forward.1} parent=1 // pred_region
      _
    $region45: #{convbn_forward.1} parent=1 // pred_fallthru
      _
    // Predicated region
    $region46: #{convbn_forward.1} parent=1 // pred_check
      _
    $region47: #{convbn_forward.1} parent=1 // pred_check_branch
      %49 = sbr.rel (0) target = $region49
    $region48: #{convbn_forward.1} parent=1 // pred_region
      _
    $region49: #{convbn_forward.1} parent=1 // pred_fallthru
      _
    // Predicated region
    $region50: #{convbn_forward.1} parent=1 // pred_check
      _
    $region51: #{convbn_forward.1} parent=1 // pred_check_branch
      %51 = sbr.rel (0) target = $region53
    $region52: #{convbn_forward.1} parent=1 // pred_region
      _
    $region53: #{convbn_forward.1} parent=1 // pred_fallthru
      _
    // Predicated region
    $region54: #{convbn_forward.1} parent=1 // pred_check
      _
    $region55: #{convbn_forward.1} parent=1 // pred_check_branch
      %53 = sbr.rel (0) target = $region57
    $region56: #{convbn_forward.1} parent=1 // pred_region
      %55 = vsyncadd [#allocation6], 0
      %s57 = sshll.u32 %s13, 4
      %s58 = int_to_ptr.vmem [resolvable:$true] %s57
      %60 = dma.vmem_to_smem %s58, 16, [#allocation4], [#allocation6]
    $region57: #{convbn_forward.1} parent=1 // pred_fallthru
      _
    // Predicated region
    $region58: #{convbn_forward.1} parent=1 // pred_check
      _
    $region59: #{convbn_forward.1} parent=1 // pred_check_branch
      %62 = sbr.rel (0) target = $region61
    $region60: #{convbn_forward.1} parent=1 // pred_region
      %64 = vsyncadd [#allocation8], 0
      %s66 = sshll.u32 %s14, 4
      %s67 = int_to_ptr.vmem [resolvable:$true] %s66
      %69 = dma.vmem_to_smem %s67, 16, [#allocation7], [#allocation8]
    $region61: #{convbn_forward.1} parent=1 // pred_fallthru
      _
    // Predicated region
    $region62: #{convbn_forward.1} parent=1 // pred_check
      _
    $region63: #{convbn_forward.1} parent=1 // pred_check_branch
      %71 = sbr.rel (0) target = $region65
    $region64: #{convbn_forward.1} parent=1 // pred_region
      %73 = vsyncadd [#allocation8], 0
      %s75 = sshll.u32 %s15, 4
      %s76 = int_to_ptr.vmem [resolvable:$true] %s75
      %78 = dma.vmem_to_smem %s76, 16, [#allocation9], [#allocation8]
    $region65: #{convbn_forward.1} parent=1 // pred_fallthru
      _
    // Predicated region
    $region66: #{convbn_forward.1} parent=1 // pred_check
      _
    $region67: #{convbn_forward.1} parent=1 // pred_check_branch
      %80 = sbr.rel (0) target = $region69
    $region68: #{convbn_forward.1} parent=1 // pred_region
      %82 = vsyncadd [#allocation11], 0
      %s84 = sshll.u32 %s16, 4
      %s85 = int_to_ptr.vmem [resolvable:$true] %s84
      %87 = dma.vmem_to_smem %s85, 16, [#allocation10], [#allocation11]
    $region69: #{convbn_forward.1} parent=1 // pred_fallthru
      _
    // Predicated region
    $region70: #{convbn_forward.1} parent=1 // pred_check
      _
    $region71: #{convbn_forward.1} parent=1 // pred_check_branch
      %89 = sbr.rel (0) target = $region73
    $region72: #{convbn_forward.1} parent=1 // pred_region
      %91 = dma.done [#allocation6], 16
    $region73: #{convbn_forward.1} parent=1 // pred_fallthru
      _
    // Predicated region
    $region74: #{convbn_forward.1} parent=1 // pred_check
      _
    $region75: #{convbn_forward.1} parent=1 // pred_check_branch
      %93 = sbr.rel (0) target = $region77
    $region76: #{convbn_forward.1} parent=1 // pred_region
      %95 = dma.done [#allocation8], 16
    $region77: #{convbn_forward.1} parent=1 // pred_fallthru
      _
    // Predicated region
    $region78: #{convbn_forward.1} parent=1 // pred_check
      _
    $region79: #{convbn_forward.1} parent=1 // pred_check_branch
      %97 = sbr.rel (0) target = $region81
    $region80: #{convbn_forward.1} parent=1 // pred_region
      %99 = dma.done [#allocation8], 16
    $region81: #{convbn_forward.1} parent=1 // pred_fallthru
      _
    // Predicated region
    $region82: #{convbn_forward.1} parent=1 // pred_check
      _
    $region83: #{convbn_forward.1} parent=1 // pred_check_branch
      %101 = sbr.rel (0) target = $region85
    $region84: #{convbn_forward.1} parent=1 // pred_region
      %103 = dma.done [#allocation11], 16
    $region85: #{convbn_forward.1} parent=1 // pred_fallthru
      _
    %104 = sfence
    %v105 = vld [vmem:[%s1] sm:$0xff]
    %v106 = vld [vmem:[%s1 + $0x8] sm:$0xff]
    %v107 = vld [vmem:[%s1 + $0x10] sm:$0x3]
    %v108 = vld [vmem:[%s6] sm:$0xff]
    %v109 = vld [vmem:[%s6 + $0x8] sm:$0xff]
    %v110 = vld [vmem:[%s6 + $0x10] sm:$0xff]
    %v111 = vld [vmem:[%s6 + $0x18] sm:$0xff]
    %v112 = vld [vmem:[%s6 + $0x20] sm:$0xff]
    %v113 = vld [vmem:[%s6 + $0x28] sm:$0xff]
    %v114 = vld [vmem:[%s2] sm:$0xff]
    %v115 = vld [vmem:[%s2 + $0x8] sm:$0xff]
    %v116 = vld [vmem:[%s2 + $0x10] sm:$0xff]
    %v117 = vld [vmem:[%s2 + $0x18] sm:$0xff]
    %v118 = vld [vmem:[%s2 + $0x20] sm:$0xff]
    %v119 = vld [vmem:[%s2 + $0x28] sm:$0xff]
    %v120 = vld [vmem:[%s2 + $0x30] sm:$0xff]
    %v121 = vld [vmem:[%s2 + $0x38] sm:$0xff]
    %v122 = vld [vmem:[%s2 + $0x40] sm:$0xff]
    %v123 = vld [vmem:[%s2 + $0x48] sm:$0xff]
    %v124 = vld [vmem:[%s2 + $0x50] sm:$0xff]
    %v125 = vld [vmem:[%s2 + $0x58] sm:$0xff]
    %v126 = vld [vmem:[%s2 + $0x60] sm:$0x3f]
    %v127 = vld [vmem:[%s7] sm:$0xff]
    %v128 = vld [vmem:[%s7 + $0x8] sm:$0xff]
    %v129 = vld [vmem:[%s7 + $0x10] sm:$0x1f]
    %v130 = vld [vmem:[%s3] sm:$0xff]
    %v131 = vld [vmem:[%s3 + $0x8] sm:$0xf]
    %v132 = vld [vmem:[%s4] sm:$0xff]
    %v133 = vld [vmem:[%s4 + $0x8] sm:$0xff]
    %v134 = vld [vmem:[%s4 + $0x10] sm:$0x7f]
    %v135 = vld [vmem:[%s5] sm:$0xff]
    %v136 = vld [vmem:[%s5 + $0x8] sm:$0xff]
    %v137 = vld [vmem:[%s5 + $0x10] sm:$0x7f]
    %v138 = vld [vmem:[%s8] sm:$0xff]
    %v139 = vld [vmem:[%s0] sm:$0xff]
    %v140 = vld [vmem:[%s0 + $0x8] sm:$0xff]
    %v141 = vld [vmem:[%s0 + $0x10] sm:$0xff]
    %v142 = vld [vmem:[%s0 + $0x18] sm:$0x3]
    %vm143 = vcmask 211968
    %144 = vst.msk [vmem:[#allocation2] sm:$0xff] %vm143, %v139
    %145 = vst.msk [vmem:[#allocation2 + $0x8] sm:$0xff] %vm143, %v140
    %146 = vst.msk [vmem:[#allocation2 + $0x10] sm:$0xff] %vm143, %v141
    %vm147 = vcmask 205824
    %148 = vst.msk [vmem:[#allocation2 + $0x18] sm:$0x3] %vm147, %v142
    %s149 = scalar_lea.vmem %s0, 32
    %v150 = vld [vmem:[%s149] sm:$0xff]
    %v151 = vld [vmem:[%s149 + $0x8] sm:$0xff]
    %v152 = vld [vmem:[%s149 + $0x10] sm:$0xff]
    %v153 = vld [vmem:[%s149 + $0x18] sm:$0x3]
    %158 = vrot.lane.b32.xlu0 %v150, 26
    %v159 = vpop.permute.xlu0 %158
    %160 = vrot.lane.b32.xlu0 %v151, 26
    %v161 = vpop.permute.xlu0 %160
    %162 = vrot.lane.b32.xlu0 %v152, 26
    %v163 = vpop.permute.xlu0 %162
    %164 = vrot.lane.b32.xlu0 %v153, 26
    %v165 = vpop.permute.xlu0 %164
    %vm170 = vcmask 425168
    %171 = vst.msk [vmem:[#allocation2] sm:$0xff] %vm170, %v159
    %172 = vst.msk [vmem:[#allocation2 + $0x8] sm:$0xff] %vm170, %v161
    %173 = vst.msk [vmem:[#allocation2 + $0x10] sm:$0xff] %vm170, %v163
    %vm174 = vcmask 419024
    %175 = vst.msk [vmem:[#allocation2 + $0x18] sm:$0x3] %vm174, %v165
    %s176 = scalar_lea.vmem %s0, 64
    %v177 = vld [vmem:[%s176] sm:$0xff]
    %v178 = vld [vmem:[%s176 + $0x8] sm:$0xff]
    %v179 = vld [vmem:[%s176 + $0x10] sm:$0xff]
    %v180 = vld [vmem:[%s176 + $0x18] sm:$0x3]
    %185 = vrot.lane.b32.xlu0 %v177, 52
    %v186 = vpop.permute.xlu0 %185
    %187 = vrot.lane.b32.xlu0 %v178, 52
    %v188 = vpop.permute.xlu0 %187
    %189 = vrot.lane.b32.xlu0 %v179, 52
    %v190 = vpop.permute.xlu0 %189
    %191 = vrot.lane.b32.xlu0 %v180, 52
    %v192 = vpop.permute.xlu0 %191
    %vm197 = vcmask 638368
    %198 = vst.msk [vmem:[#allocation2] sm:$0xff] %vm197, %v186
    %199 = vst.msk [vmem:[#allocation2 + $0x8] sm:$0xff] %vm197, %v188
    %200 = vst.msk [vmem:[#allocation2 + $0x10] sm:$0xff] %vm197, %v190
    %vm201 = vcmask 632224
    %202 = vst.msk [vmem:[#allocation2 + $0x18] sm:$0x3] %vm201, %v192
    %s203 = scalar_lea.vmem %s0, 96
    %v204 = vld [vmem:[%s203] sm:$0xff]
    %v205 = vld [vmem:[%s203 + $0x8] sm:$0xff]
    %v206 = vld [vmem:[%s203 + $0x10] sm:$0xff]
    %v207 = vld [vmem:[%s203 + $0x18] sm:$0x3]
    %212 = vrot.lane.b32.xlu0 %v204, 78
    %v213 = vpop.permute.xlu0 %212
    %214 = vrot.lane.b32.xlu0 %v205, 78
    %v215 = vpop.permute.xlu0 %214
    %216 = vrot.lane.b32.xlu0 %v206, 78
    %v217 = vpop.permute.xlu0 %216
    %218 = vrot.lane.b32.xlu0 %v207, 78
    %v219 = vpop.permute.xlu0 %218
    %vm224 = vcmask 851568
    %225 = vst.msk [vmem:[#allocation2] sm:$0xff] %vm224, %v213
    %226 = vst.msk [vmem:[#allocation2 + $0x8] sm:$0xff] %vm224, %v215
    %227 = vst.msk [vmem:[#allocation2 + $0x10] sm:$0xff] %vm224, %v217
    %vm228 = vcmask 845424
    %229 = vst.msk [vmem:[#allocation2 + $0x18] sm:$0x3] %vm228, %v219
    %v230 = vld [vmem:[#allocation2] sm:$0xff]
    %v231 = vld [vmem:[#allocation2 + $0x8] sm:$0xff]
    %v232 = vld [vmem:[#allocation2 + $0x10] sm:$0xff]
    %v233 = vld [vmem:[#allocation2 + $0x18] sm:$0x3]
    %v234 = vperm.slane %v105, 0
    %v235 = vmul.f32 %v230, %v234
    %v236 = vmul.f32 %v231, %v234
    %v237 = vmul.f32 %v232, %v234
    %v238 = vadd.f32 %v235, 0.0
    %v239 = vadd.f32 %v236, 0.0
    %v240 = vadd.f32 %v237, 0.0
    %v241 = vperm.slane %v106, 1
    %v242 = vmul.f32 %v230, %v241
    %v243 = vmul.f32 %v231, %v241
    %v244 = vmul.f32 %v232, %v241
    %v245 = vadd.f32 %v242, 0.0
    %v246 = vadd.f32 %v243, 0.0
    %v247 = vadd.f32 %v244, 0.0
    %v248 = vperm.slane %v105, 1
    %250 = vrot.lane.b32.xlu0 %v248, 1
    %v251 = vpop.permute.xlu0 %250
    %v253 = vmul.f32 %v230, %v251
    %v254 = vmul.f32 %v231, %v251
    %v255 = vmul.f32 %v232, %v251
    %259 = vrot.lane.b32.xlu0 %v253, 127
    %v260 = vpop.permute.xlu0 %259
    %261 = vrot.lane.b32.xlu0 %v254, 127
    %v262 = vpop.permute.xlu0 %261
    %263 = vrot.lane.b32.xlu0 %v255, 127
    %v264 = vpop.permute.xlu0 %263
    %v268 = vadd.f32 %v238, %v260
    %v269 = vadd.f32 %v239, %v262
    %v270 = vadd.f32 %v240, %v264
    %v271 = vperm.slane %v106, 2
    %273 = vrot.lane.b32.xlu0 %v271, 1
    %v274 = vpop.permute.xlu0 %273
    %v276 = vmul.f32 %v230, %v274
    %v277 = vmul.f32 %v231, %v274
    %v278 = vmul.f32 %v232, %v274
    %282 = vrot.lane.b32.xlu0 %v276, 127
    %v283 = vpop.permute.xlu0 %282
    %284 = vrot.lane.b32.xlu0 %v277, 127
    %v285 = vpop.permute.xlu0 %284
    %286 = vrot.lane.b32.xlu0 %v278, 127
    %v287 = vpop.permute.xlu0 %286
    %v291 = vadd.f32 %v245, %v283
    %v292 = vadd.f32 %v246, %v285
    %v293 = vadd.f32 %v247, %v287
    %v294 = vperm.slane %v105, 2
    %296 = vrot.lane.b32.xlu0 %v294, 2
    %v297 = vpop.permute.xlu0 %296
    %v299 = vmul.f32 %v230, %v297
    %v300 = vmul.f32 %v231, %v297
    %v301 = vmul.f32 %v232, %v297
    %305 = vrot.lane.b32.xlu0 %v299, 126
    %v306 = vpop.permute.xlu0 %305
    %307 = vrot.lane.b32.xlu0 %v300, 126
    %v308 = vpop.permute.xlu0 %307
    %309 = vrot.lane.b32.xlu0 %v301, 126
    %v310 = vpop.permute.xlu0 %309
    %v314 = vadd.f32 %v268, %v306
    %v315 = vadd.f32 %v269, %v308
    %v316 = vadd.f32 %v270, %v310
    %v317 = vperm.slane %v106, 3
    %319 = vrot.lane.b32.xlu0 %v317, 2
    %v320 = vpop.permute.xlu0 %319
    %v322 = vmul.f32 %v230, %v320
    %v323 = vmul.f32 %v231, %v320
    %v324 = vmul.f32 %v232, %v320
    %328 = vrot.lane.b32.xlu0 %v322, 126
    %v329 = vpop.permute.xlu0 %328
    %330 = vrot.lane.b32.xlu0 %v323, 126
    %v331 = vpop.permute.xlu0 %330
    %332 = vrot.lane.b32.xlu0 %v324, 126
    %v333 = vpop.permute.xlu0 %332
    %v337 = vadd.f32 %v291, %v329
    %v338 = vadd.f32 %v292, %v331
    %v339 = vadd.f32 %v293, %v333
    %v340 = vperm.slane %v105, 3
    %v341 = vmul.f32 %v230, %v340
    %v342 = vmul.f32 %v231, %v340
    %v343 = vmul.f32 %v232, %v340
    %v344 = vmul.f32 %v233, %v340
    %vm349 = vcmask 1046528
    %v350 = vrot.slane %v341, 1
    %v351 = vrot.slane %v342, 1
    %v352 = vsel %vm349, %v350, %v351
    %v353 = vrot.slane %v343, 1
    %v354 = vsel %vm349, %v351, %v353
    %v355 = vrot.slane %v344, 1
    %v356 = vsel %vm349, %v353, %v355
    %v360 = vadd.f32 %v314, %v352
    %v361 = vadd.f32 %v315, %v354
    %v362 = vadd.f32 %v316, %v356
    %v363 = vperm.slane %v106, 4
    %v364 = vmul.f32 %v230, %v363
    %v365 = vmul.f32 %v231, %v363
    %v366 = vmul.f32 %v232, %v363
    %v367 = vmul.f32 %v233, %v363
    %v372 = vrot.slane %v364, 1
    %v373 = vrot.slane %v365, 1
    %v374 = vsel %vm349, %v372, %v373
    %v375 = vrot.slane %v366, 1
    %v376 = vsel %vm349, %v373, %v375
    %v377 = vrot.slane %v367, 1
    %v378 = vsel %vm349, %v375, %v377
    %v382 = vadd.f32 %v337, %v374
    %v383 = vadd.f32 %v338, %v376
    %v384 = vadd.f32 %v339, %v378
    %v385 = vperm.slane %v105, 4
    %387 = vrot.lane.b32.xlu0 %v385, 1
    %v388 = vpop.permute.xlu0 %387
    %v390 = vmul.f32 %v230, %v388
    %v391 = vmul.f32 %v231, %v388
    %v392 = vmul.f32 %v232, %v388
    %v393 = vmul.f32 %v233, %v388
    %v398 = vrot.slane %v390, 1
    %v399 = vrot.slane %v391, 1
    %v400 = vsel %vm349, %v398, %v399
    %v401 = vrot.slane %v392, 1
    %v402 = vsel %vm349, %v399, %v401
    %v403 = vrot.slane %v393, 1
    %v404 = vsel %vm349, %v401, %v403
    %405 = vrot.lane.b32.xlu0 %v400, 127
    %v406 = vpop.permute.xlu0 %405
    %407 = vrot.lane.b32.xlu0 %v402, 127
    %v408 = vpop.permute.xlu0 %407
    %409 = vrot.lane.b32.xlu0 %v404, 127
    %v410 = vpop.permute.xlu0 %409
    %v414 = vadd.f32 %v360, %v406
    %v415 = vadd.f32 %v361, %v408
    %v416 = vadd.f32 %v362, %v410
    %v417 = vperm.slane %v106, 5
    %419 = vrot.lane.b32.xlu0 %v417, 1
    %v420 = vpop.permute.xlu0 %419
    %v422 = vmul.f32 %v230, %v420
    %v423 = vmul.f32 %v231, %v420
    %v424 = vmul.f32 %v232, %v420
    %v425 = vmul.f32 %v233, %v420
    %v430 = vrot.slane %v422, 1
    %v431 = vrot.slane %v423, 1
    %v432 = vsel %vm349, %v430, %v431
    %v433 = vrot.slane %v424, 1
    %v434 = vsel %vm349, %v431, %v433
    %v435 = vrot.slane %v425, 1
    %v436 = vsel %vm349, %v433, %v435
    %437 = vrot.lane.b32.xlu0 %v432, 127
    %v438 = vpop.permute.xlu0 %437
    %439 = vrot.lane.b32.xlu0 %v434, 127
    %v440 = vpop.permute.xlu0 %439
    %441 = vrot.lane.b32.xlu0 %v436, 127
    %v442 = vpop.permute.xlu0 %441
    %v446 = vadd.f32 %v382, %v438
    %v447 = vadd.f32 %v383, %v440
    %v448 = vadd.f32 %v384, %v442
    %v449 = vperm.slane %v105, 5
    %451 = vrot.lane.b32.xlu0 %v449, 2
    %v452 = vpop.permute.xlu0 %451
    %v454 = vmul.f32 %v230, %v452
    %v455 = vmul.f32 %v231, %v452
    %v456 = vmul.f32 %v232, %v452
    %v457 = vmul.f32 %v233, %v452
    %v462 = vrot.slane %v454, 1
    %v463 = vrot.slane %v455, 1
    %v464 = vsel %vm349, %v462, %v463
    %v465 = vrot.slane %v456, 1
    %v466 = vsel %vm349, %v463, %v465
    %v467 = vrot.slane %v457, 1
    %v468 = vsel %vm349, %v465, %v467
    %469 = vrot.lane.b32.xlu0 %v464, 126
    %v470 = vpop.permute.xlu0 %469
    %471 = vrot.lane.b32.xlu0 %v466, 126
    %v472 = vpop.permute.xlu0 %471
    %473 = vrot.lane.b32.xlu0 %v468, 126
    %v474 = vpop.permute.xlu0 %473
    %v478 = vadd.f32 %v414, %v470
    %v479 = vadd.f32 %v415, %v472
    %v480 = vadd.f32 %v416, %v474
    %v481 = vperm.slane %v106, 6
    %483 = vrot.lane.b32.xlu0 %v481, 2
    %v484 = vpop.permute.xlu0 %483
    %v486 = vmul.f32 %v230, %v484
    %v487 = vmul.f32 %v231, %v484
    %v488 = vmul.f32 %v232, %v484
    %v489 = vmul.f32 %v233, %v484
    %v494 = vrot.slane %v486, 1
    %v495 = vrot.slane %v487, 1
    %v496 = vsel %vm349, %v494, %v495
    %v497 = vrot.slane %v488, 1
    %v498 = vsel %vm349, %v495, %v497
    %v499 = vrot.slane %v489, 1
    %v500 = vsel %vm349, %v497, %v499
    %501 = vrot.lane.b32.xlu0 %v496, 126
    %v502 = vpop.permute.xlu0 %501
    %503 = vrot.lane.b32.xlu0 %v498, 126
    %v504 = vpop.permute.xlu0 %503
    %505 = vrot.lane.b32.xlu0 %v500, 126
    %v506 = vpop.permute.xlu0 %505
    %v510 = vadd.f32 %v446, %v502
    %v511 = vadd.f32 %v447, %v504
    %v512 = vadd.f32 %v448, %v506
    %v513 = vperm.slane %v105, 6
    %v514 = vmul.f32 %v230, %v513
    %v515 = vmul.f32 %v231, %v513
    %v516 = vmul.f32 %v232, %v513
    %v517 = vmul.f32 %v233, %v513
    %vm522 = vcmask 1045504
    %v523 = vrot.slane %v514, 2
    %v524 = vrot.slane %v515, 2
    %v525 = vsel %vm522, %v523, %v524
    %v526 = vrot.slane %v516, 2
    %v527 = vsel %vm522, %v524, %v526
    %v528 = vrot.slane %v517, 2
    %v529 = vsel %vm522, %v526, %v528
    %v533 = vadd.f32 %v478, %v525
    %v534 = vadd.f32 %v479, %v527
    %v535 = vadd.f32 %v480, %v529
    %v536 = vperm.slane %v106, 7
    %v537 = vmul.f32 %v230, %v536
    %v538 = vmul.f32 %v231, %v536
    %v539 = vmul.f32 %v232, %v536
    %v540 = vmul.f32 %v233, %v536
    %v545 = vrot.slane %v537, 2
    %v546 = vrot.slane %v538, 2
    %v547 = vsel %vm522, %v545, %v546
    %v548 = vrot.slane %v539, 2
    %v549 = vsel %vm522, %v546, %v548
    %v550 = vrot.slane %v540, 2
    %v551 = vsel %vm522, %v548, %v550
    %v555 = vadd.f32 %v510, %v547
    %v556 = vadd.f32 %v511, %v549
    %v557 = vadd.f32 %v512, %v551
    %v558 = vperm.slane %v105, 7
    %560 = vrot.lane.b32.xlu0 %v558, 1
    %v561 = vpop.permute.xlu0 %560
    %v563 = vmul.f32 %v230, %v561
    %v564 = vmul.f32 %v231, %v561
    %v565 = vmul.f32 %v232, %v561
    %v566 = vmul.f32 %v233, %v561
    %v571 = vrot.slane %v563, 2
    %v572 = vrot.slane %v564, 2
    %v573 = vsel %vm522, %v571, %v572
    %v574 = vrot.slane %v565, 2
    %v575 = vsel %vm522, %v572, %v574
    %v576 = vrot.slane %v566, 2
    %v577 = vsel %vm522, %v574, %v576
    %578 = vrot.lane.b32.xlu0 %v573, 127
    %v579 = vpop.permute.xlu0 %578
    %580 = vrot.lane.b32.xlu0 %v575, 127
    %v581 = vpop.permute.xlu0 %580
    %582 = vrot.lane.b32.xlu0 %v577, 127
    %v583 = vpop.permute.xlu0 %582
    %v587 = vadd.f32 %v533, %v579
    %v588 = vadd.f32 %v534, %v581
    %v589 = vadd.f32 %v535, %v583
    %v590 = vperm.slane %v107, 0
    %592 = vrot.lane.b32.xlu0 %v590, 1
    %v593 = vpop.permute.xlu0 %592
    %v595 = vmul.f32 %v230, %v593
    %v596 = vmul.f32 %v231, %v593
    %v597 = vmul.f32 %v232, %v593
    %v598 = vmul.f32 %v233, %v593
    %v603 = vrot.slane %v595, 2
    %v604 = vrot.slane %v596, 2
    %v605 = vsel %vm522, %v603, %v604
    %v606 = vrot.slane %v597, 2
    %v607 = vsel %vm522, %v604, %v606
    %v608 = vrot.slane %v598, 2
    %v609 = vsel %vm522, %v606, %v608
    %610 = vrot.lane.b32.xlu0 %v605, 127
    %v611 = vpop.permute.xlu0 %610
    %612 = vrot.lane.b32.xlu0 %v607, 127
    %v613 = vpop.permute.xlu0 %612
    %614 = vrot.lane.b32.xlu0 %v609, 127
    %v615 = vpop.permute.xlu0 %614
    %v619 = vadd.f32 %v555, %v611
    %v620 = vadd.f32 %v556, %v613
    %v621 = vadd.f32 %v557, %v615
    %v622 = vperm.slane %v106, 0
    %624 = vrot.lane.b32.xlu0 %v622, 2
    %v625 = vpop.permute.xlu0 %624
    %v627 = vmul.f32 %v230, %v625
    %v628 = vmul.f32 %v231, %v625
    %v629 = vmul.f32 %v232, %v625
    %v630 = vmul.f32 %v233, %v625
    %v635 = vrot.slane %v627, 2
    %v636 = vrot.slane %v628, 2
    %v637 = vsel %vm522, %v635, %v636
    %v638 = vrot.slane %v629, 2
    %v639 = vsel %vm522, %v636, %v638
    %v640 = vrot.slane %v630, 2
    %v641 = vsel %vm522, %v638, %v640
    %642 = vrot.lane.b32.xlu0 %v637, 126
    %v643 = vpop.permute.xlu0 %642
    %644 = vrot.lane.b32.xlu0 %v639, 126
    %v645 = vpop.permute.xlu0 %644
    %646 = vrot.lane.b32.xlu0 %v641, 126
    %v647 = vpop.permute.xlu0 %646
    %v651 = vadd.f32 %v587, %v643
    %v652 = vadd.f32 %v588, %v645
    %v653 = vadd.f32 %v589, %v647
    %v654 = vperm.slane %v107, 1
    %656 = vrot.lane.b32.xlu0 %v654, 2
    %v657 = vpop.permute.xlu0 %656
    %v659 = vmul.f32 %v230, %v657
    %v660 = vmul.f32 %v231, %v657
    %v661 = vmul.f32 %v232, %v657
    %v662 = vmul.f32 %v233, %v657
    %v667 = vrot.slane %v659, 2
    %v668 = vrot.slane %v660, 2
    %v669 = vsel %vm522, %v667, %v668
    %v670 = vrot.slane %v661, 2
    %v671 = vsel %vm522, %v668, %v670
    %v672 = vrot.slane %v662, 2
    %v673 = vsel %vm522, %v670, %v672
    %674 = vrot.lane.b32.xlu0 %v669, 126
    %v675 = vpop.permute.xlu0 %674
    %676 = vrot.lane.b32.xlu0 %v671, 126
    %v677 = vpop.permute.xlu0 %676
    %678 = vrot.lane.b32.xlu0 %v673, 126
    %v679 = vpop.permute.xlu0 %678
    %v683 = vadd.f32 %v619, %v675
    %v684 = vadd.f32 %v620, %v677
    %v685 = vadd.f32 %v621, %v679
    %s686 = sld [smem:[#allocation4]]
    %v687 = vstv %s686
    %vm688 = vcmask 834560
    %v690 = vsel %vm688, %v651, 0
    %v693 = vsel %vm688, %v652, 0
    %v696 = vsel %vm688, %v653, 0
    %v699 = vsel %vm522, %v126, 0
    %701 = vmatpush.msra.mxu0 0.0
    %702 = vmatpush.msra.mxu0 0.0
    %703 = vmatpush.msra.mxu0 0.0
    %704 = vmatpush.msra.mxu0 %v699
    %705 = vmatpush.msra.mxu0 %v125
    %706 = vmatpush.msra.mxu0 %v124
    %707 = vmatpush.msra.mxu0 %v123
    %708 = vmatpush.msra.mxu0 %v122
    %709 = vmatpush.msra.mxu0 %v121
    %710 = vmatpush.msra.mxu0 %v120
    %711 = vmatpush.msra.mxu0 %v119
    %712 = vmatpush.msra.mxu0 %v118
    %713 = vmatpush.msra.mxu0 %v117
    %714 = vmatpush.msra.mxu0 %v116
    %715 = vmatpush.msra.mxu0 %v115
    %716 = vmatpush.msra.mxu0 %v114
    %717 = vmatmul.f32.gmra.mxu0 %v690
    %v718 = vpop.f32.mrf.mxu0
    %v719 = vadd.f32 %v687, %v718
    %720 = vmatmul.f32.gmra.mxu0 %v693
    %v721 = vpop.f32.mrf.mxu0
    %v722 = vadd.f32 %v687, %v721
    %723 = vmatmul.f32.gmra.mxu0 %v696
    %v724 = vpop.f32.mrf.mxu0
    %v725 = vadd.f32 %v687, %v724
    %726 = vdwg.mxu0
    %s727 = sld [smem:[#allocation4 + $0x1]]
    %v728 = vstv %s727
    %v730 = vsel %vm688, %v683, 0
    %v733 = vsel %vm688, %v684, 0
    %v736 = vsel %vm688, %v685, 0
    %738 = vmatpush.msra.mxu0 0.0
    %739 = vmatpush.msra.mxu0 0.0
    %740 = vmatpush.msra.mxu0 0.0
    %741 = vmatpush.msra.mxu0 %v699
    %742 = vmatpush.msra.mxu0 %v125
    %743 = vmatpush.msra.mxu0 %v124
    %744 = vmatpush.msra.mxu0 %v123
    %745 = vmatpush.msra.mxu0 %v122
    %746 = vmatpush.msra.mxu0 %v121
    %747 = vmatpush.msra.mxu0 %v120
    %748 = vmatpush.msra.mxu0 %v119
    %749 = vmatpush.msra.mxu0 %v118
    %750 = vmatpush.msra.mxu0 %v117
    %751 = vmatpush.msra.mxu0 %v116
    %752 = vmatpush.msra.mxu0 %v115
    %753 = vmatpush.msra.mxu0 %v114
    %754 = vmatmul.f32.gmra.mxu0 %v730
    %v755 = vpop.f32.mrf.mxu0
    %v756 = vadd.f32 %v728, %v755
    %757 = vmatmul.f32.gmra.mxu0 %v733
    %v758 = vpop.f32.mrf.mxu0
    %v759 = vadd.f32 %v728, %v758
    %760 = vmatmul.f32.gmra.mxu0 %v736
    %v761 = vpop.f32.mrf.mxu0
    %v762 = vadd.f32 %v728, %v761
    %763 = vdwg.mxu0
    %s764 = scalar_lea.vmem %s0, 128
    %v765 = vld [vmem:[%s764] sm:$0xff]
    %v766 = vld [vmem:[%s764 + $0x8] sm:$0xff]
    %v767 = vld [vmem:[%s764 + $0x10] sm:$0xff]
    %v768 = vld [vmem:[%s764 + $0x18] sm:$0x3]
    %s769 = scalar_lea.vmem [#allocation2], 32
    %770 = vst.msk [vmem:[%s769] sm:$0xff] %vm143, %v765
    %771 = vst.msk [vmem:[%s769 + $0x8] sm:$0xff] %vm143, %v766
    %772 = vst.msk [vmem:[%s769 + $0x10] sm:$0xff] %vm143, %v767
    %773 = vst.msk [vmem:[%s769 + $0x18] sm:$0x3] %vm147, %v768
    %s774 = scalar_lea.vmem %s0, 160
    %v775 = vld [vmem:[%s774] sm:$0xff]
    %v776 = vld [vmem:[%s774 + $0x8] sm:$0xff]
    %v777 = vld [vmem:[%s774 + $0x10] sm:$0xff]
    %v778 = vld [vmem:[%s774 + $0x18] sm:$0x3]
    %783 = vrot.lane.b32.xlu0 %v775, 26
    %v784 = vpop.permute.xlu0 %783
    %785 = vrot.lane.b32.xlu0 %v776, 26
    %v786 = vpop.permute.xlu0 %785
    %787 = vrot.lane.b32.xlu0 %v777, 26
    %v788 = vpop.permute.xlu0 %787
    %789 = vrot.lane.b32.xlu0 %v778, 26
    %v790 = vpop.permute.xlu0 %789
    %795 = vst.msk [vmem:[%s769] sm:$0xff] %vm170, %v784
    %796 = vst.msk [vmem:[%s769 + $0x8] sm:$0xff] %vm170, %v786
    %797 = vst.msk [vmem:[%s769 + $0x10] sm:$0xff] %vm170, %v788
    %798 = vst.msk [vmem:[%s769 + $0x18] sm:$0x3] %vm174, %v790
    %s799 = scalar_lea.vmem %s0, 192
    %v800 = vld [vmem:[%s799] sm:$0xff]
    %v801 = vld [vmem:[%s799 + $0x8] sm:$0xff]
    %v802 = vld [vmem:[%s799 + $0x10] sm:$0xff]
    %v803 = vld [vmem:[%s799 + $0x18] sm:$0x3]
    %808 = vrot.lane.b32.xlu0 %v800, 52
    %v809 = vpop.permute.xlu0 %808
    %810 = vrot.lane.b32.xlu0 %v801, 52
    %v811 = vpop.permute.xlu0 %810
    %812 = vrot.lane.b32.xlu0 %v802, 52
    %v813 = vpop.permute.xlu0 %812
    %814 = vrot.lane.b32.xlu0 %v803, 52
    %v815 = vpop.permute.xlu0 %814
    %820 = vst.msk [vmem:[%s769] sm:$0xff] %vm197, %v809
    %821 = vst.msk [vmem:[%s769 + $0x8] sm:$0xff] %vm197, %v811
    %822 = vst.msk [vmem:[%s769 + $0x10] sm:$0xff] %vm197, %v813
    %823 = vst.msk [vmem:[%s769 + $0x18] sm:$0x3] %vm201, %v815
    %s824 = scalar_lea.vmem %s0, 224
    %v825 = vld [vmem:[%s824] sm:$0xff]
    %v826 = vld [vmem:[%s824 + $0x8] sm:$0xff]
    %v827 = vld [vmem:[%s824 + $0x10] sm:$0xff]
    %v828 = vld [vmem:[%s824 + $0x18] sm:$0x3]
    %833 = vrot.lane.b32.xlu0 %v825, 78
    %v834 = vpop.permute.xlu0 %833
    %835 = vrot.lane.b32.xlu0 %v826, 78
    %v836 = vpop.permute.xlu0 %835
    %837 = vrot.lane.b32.xlu0 %v827, 78
    %v838 = vpop.permute.xlu0 %837
    %839 = vrot.lane.b32.xlu0 %v828, 78
    %v840 = vpop.permute.xlu0 %839
    %845 = vst.msk [vmem:[%s769] sm:$0xff] %vm224, %v834
    %846 = vst.msk [vmem:[%s769 + $0x8] sm:$0xff] %vm224, %v836
    %847 = vst.msk [vmem:[%s769 + $0x10] sm:$0xff] %vm224, %v838
    %848 = vst.msk [vmem:[%s769 + $0x18] sm:$0x3] %vm228, %v840
    %v849 = vld [vmem:[%s769] sm:$0xff]
    %v850 = vld [vmem:[%s769 + $0x8] sm:$0xff]
    %v851 = vld [vmem:[%s769 + $0x10] sm:$0xff]
    %v852 = vld [vmem:[%s769 + $0x18] sm:$0x3]
    %v853 = vmul.f32 %v849, %v234
    %v854 = vmul.f32 %v850, %v234
    %v855 = vmul.f32 %v851, %v234
    %v856 = vadd.f32 %v853, 0.0
    %v857 = vadd.f32 %v854, 0.0
    %v858 = vadd.f32 %v855, 0.0
    %v859 = vmul.f32 %v849, %v241
    %v860 = vmul.f32 %v850, %v241
    %v861 = vmul.f32 %v851, %v241
    %v862 = vadd.f32 %v859, 0.0
    %v863 = vadd.f32 %v860, 0.0
    %v864 = vadd.f32 %v861, 0.0
    %v865 = vmul.f32 %v849, %v251
    %v866 = vmul.f32 %v850, %v251
    %v867 = vmul.f32 %v851, %v251
    %871 = vrot.lane.b32.xlu0 %v865, 127
    %v872 = vpop.permute.xlu0 %871
    %873 = vrot.lane.b32.xlu0 %v866, 127
    %v874 = vpop.permute.xlu0 %873
    %875 = vrot.lane.b32.xlu0 %v867, 127
    %v876 = vpop.permute.xlu0 %875
    %v880 = vadd.f32 %v856, %v872
    %v881 = vadd.f32 %v857, %v874
    %v882 = vadd.f32 %v858, %v876
    %v883 = vmul.f32 %v849, %v274
    %v884 = vmul.f32 %v850, %v274
    %v885 = vmul.f32 %v851, %v274
    %889 = vrot.lane.b32.xlu0 %v883, 127
    %v890 = vpop.permute.xlu0 %889
    %891 = vrot.lane.b32.xlu0 %v884, 127
    %v892 = vpop.permute.xlu0 %891
    %893 = vrot.lane.b32.xlu0 %v885, 127
    %v894 = vpop.permute.xlu0 %893
    %v898 = vadd.f32 %v862, %v890
    %v899 = vadd.f32 %v863, %v892
    %v900 = vadd.f32 %v864, %v894
    %v901 = vmul.f32 %v849, %v297
    %v902 = vmul.f32 %v850, %v297
    %v903 = vmul.f32 %v851, %v297
    %907 = vrot.lane.b32.xlu0 %v901, 126
    %v908 = vpop.permute.xlu0 %907
    %909 = vrot.lane.b32.xlu0 %v902, 126
    %v910 = vpop.permute.xlu0 %909
    %911 = vrot.lane.b32.xlu0 %v903, 126
    %v912 = vpop.permute.xlu0 %911
    %v916 = vadd.f32 %v880, %v908
    %v917 = vadd.f32 %v881, %v910
    %v918 = vadd.f32 %v882, %v912
    %v919 = vmul.f32 %v849, %v320
    %v920 = vmul.f32 %v850, %v320
    %v921 = vmul.f32 %v851, %v320
    %925 = vrot.lane.b32.xlu0 %v919, 126
    %v926 = vpop.permute.xlu0 %925
    %927 = vrot.lane.b32.xlu0 %v920, 126
    %v928 = vpop.permute.xlu0 %927
    %929 = vrot.lane.b32.xlu0 %v921, 126
    %v930 = vpop.permute.xlu0 %929
    %v934 = vadd.f32 %v898, %v926
    %v935 = vadd.f32 %v899, %v928
    %v936 = vadd.f32 %v900, %v930
    %v937 = vmul.f32 %v849, %v340
    %v938 = vmul.f32 %v850, %v340
    %v939 = vmul.f32 %v851, %v340
    %v940 = vmul.f32 %v852, %v340
    %v945 = vrot.slane %v937, 1
    %v946 = vrot.slane %v938, 1
    %v947 = vsel %vm349, %v945, %v946
    %v948 = vrot.slane %v939, 1
    %v949 = vsel %vm349, %v946, %v948
    %v950 = vrot.slane %v940, 1
    %v951 = vsel %vm349, %v948, %v950
    %v955 = vadd.f32 %v916, %v947
    %v956 = vadd.f32 %v917, %v949
    %v957 = vadd.f32 %v918, %v951
    %v958 = vmul.f32 %v849, %v363
    %v959 = vmul.f32 %v850, %v363
    %v960 = vmul.f32 %v851, %v363
    %v961 = vmul.f32 %v852, %v363
    %v966 = vrot.slane %v958, 1
    %v967 = vrot.slane %v959, 1
    %v968 = vsel %vm349, %v966, %v967
    %v969 = vrot.slane %v960, 1
    %v970 = vsel %vm349, %v967, %v969
    %v971 = vrot.slane %v961, 1
    %v972 = vsel %vm349, %v969, %v971
    %v976 = vadd.f32 %v934, %v968
    %v977 = vadd.f32 %v935, %v970
    %v978 = vadd.f32 %v936, %v972
    %v979 = vmul.f32 %v849, %v388
    %v980 = vmul.f32 %v850, %v388
    %v981 = vmul.f32 %v851, %v388
    %v982 = vmul.f32 %v852, %v388
    %v987 = vrot.slane %v979, 1
    %v988 = vrot.slane %v980, 1
    %v989 = vsel %vm349, %v987, %v988
    %v990 = vrot.slane %v981, 1
    %v991 = vsel %vm349, %v988, %v990
    %v992 = vrot.slane %v982, 1
    %v993 = vsel %vm349, %v990, %v992
    %994 = vrot.lane.b32.xlu0 %v989, 127
    %v995 = vpop.permute.xlu0 %994
    %996 = vrot.lane.b32.xlu0 %v991, 127
    %v997 = vpop.permute.xlu0 %996
    %998 = vrot.lane.b32.xlu0 %v993, 127
    %v999 = vpop.permute.xlu0 %998
    %v1003 = vadd.f32 %v955, %v995
    %v1004 = vadd.f32 %v956, %v997
    %v1005 = vadd.f32 %v957, %v999
    %v1006 = vmul.f32 %v849, %v420
    %v1007 = vmul.f32 %v850, %v420
    %v1008 = vmul.f32 %v851, %v420
    %v1009 = vmul.f32 %v852, %v420
    %v1014 = vrot.slane %v1006, 1
    %v1015 = vrot.slane %v1007, 1
    %v1016 = vsel %vm349, %v1014, %v1015
    %v1017 = vrot.slane %v1008, 1
    %v1018 = vsel %vm349, %v1015, %v1017
    %v1019 = vrot.slane %v1009, 1
    %v1020 = vsel %vm349, %v1017, %v1019
    %1021 = vrot.lane.b32.xlu0 %v1016, 127
    %v1022 = vpop.permute.xlu0 %1021
    %1023 = vrot.lane.b32.xlu0 %v1018, 127
    %v1024 = vpop.permute.xlu0 %1023
    %1025 = vrot.lane.b32.xlu0 %v1020, 127
    %v1026 = vpop.permute.xlu0 %1025
    %v1030 = vadd.f32 %v976, %v1022
    %v1031 = vadd.f32 %v977, %v1024
    %v1032 = vadd.f32 %v978, %v1026
    %v1033 = vmul.f32 %v849, %v452
    %v1034 = vmul.f32 %v850, %v452
    %v1035 = vmul.f32 %v851, %v452
    %v1036 = vmul.f32 %v852, %v452
    %v1041 = vrot.slane %v1033, 1
    %v1042 = vrot.slane %v1034, 1
    %v1043 = vsel %vm349, %v1041, %v1042
    %v1044 = vrot.slane %v1035, 1
    %v1045 = vsel %vm349, %v1042, %v1044
    %v1046 = vrot.slane %v1036, 1
    %v1047 = vsel %vm349, %v1044, %v1046
    %1048 = vrot.lane.b32.xlu0 %v1043, 126
    %v1049 = vpop.permute.xlu0 %1048
    %1050 = vrot.lane.b32.xlu0 %v1045, 126
    %v1051 = vpop.permute.xlu0 %1050
    %1052 = vrot.lane.b32.xlu0 %v1047, 126
    %v1053 = vpop.permute.xlu0 %1052
    %v1057 = vadd.f32 %v1003, %v1049
    %v1058 = vadd.f32 %v1004, %v1051
    %v1059 = vadd.f32 %v1005, %v1053
    %v1060 = vmul.f32 %v849, %v484
    %v1061 = vmul.f32 %v850, %v484
    %v1062 = vmul.f32 %v851, %v484
    %v1063 = vmul.f32 %v852, %v484
    %v1068 = vrot.slane %v1060, 1
    %v1069 = vrot.slane %v1061, 1
    %v1070 = vsel %vm349, %v1068, %v1069
    %v1071 = vrot.slane %v1062, 1
    %v1072 = vsel %vm349, %v1069, %v1071
    %v1073 = vrot.slane %v1063, 1
    %v1074 = vsel %vm349, %v1071, %v1073
    %1075 = vrot.lane.b32.xlu0 %v1070, 126
    %v1076 = vpop.permute.xlu0 %1075
    %1077 = vrot.lane.b32.xlu0 %v1072, 126
    %v1078 = vpop.permute.xlu0 %1077
    %1079 = vrot.lane.b32.xlu0 %v1074, 126
    %v1080 = vpop.permute.xlu0 %1079
    %v1084 = vadd.f32 %v1030, %v1076
    %v1085 = vadd.f32 %v1031, %v1078
    %v1086 = vadd.f32 %v1032, %v1080
    %v1087 = vmul.f32 %v849, %v513
    %v1088 = vmul.f32 %v850, %v513
    %v1089 = vmul.f32 %v851, %v513
    %v1090 = vmul.f32 %v852, %v513
    %v1095 = vrot.slane %v1087, 2
    %v1096 = vrot.slane %v1088, 2
    %v1097 = vsel %vm522, %v1095, %v1096
    %v1098 = vrot.slane %v1089, 2
    %v1099 = vsel %vm522, %v1096, %v1098
    %v1100 = vrot.slane %v1090, 2
    %v1101 = vsel %vm522, %v1098, %v1100
    %v1105 = vadd.f32 %v1057, %v1097
    %v1106 = vadd.f32 %v1058, %v1099
    %v1107 = vadd.f32 %v1059, %v1101
    %v1108 = vmul.f32 %v849, %v536
    %v1109 = vmul.f32 %v850, %v536
    %v1110 = vmul.f32 %v851, %v536
    %v1111 = vmul.f32 %v852, %v536
    %v1116 = vrot.slane %v1108, 2
    %v1117 = vrot.slane %v1109, 2
    %v1118 = vsel %vm522, %v1116, %v1117
    %v1119 = vrot.slane %v1110, 2
    %v1120 = vsel %vm522, %v1117, %v1119
    %v1121 = vrot.slane %v1111, 2
    %v1122 = vsel %vm522, %v1119, %v1121
    %v1126 = vadd.f32 %v1084, %v1118
    %v1127 = vadd.f32 %v1085, %v1120
    %v1128 = vadd.f32 %v1086, %v1122
    %v1129 = vmul.f32 %v849, %v561
    %v1130 = vmul.f32 %v850, %v561
    %v1131 = vmul.f32 %v851, %v561
    %v1132 = vmul.f32 %v852, %v561
    %v1137 = vrot.slane %v1129, 2
    %v1138 = vrot.slane %v1130, 2
    %v1139 = vsel %vm522, %v1137, %v1138
    %v1140 = vrot.slane %v1131, 2
    %v1141 = vsel %vm522, %v1138, %v1140
    %v1142 = vrot.slane %v1132, 2
    %v1143 = vsel %vm522, %v1140, %v1142
    %1144 = vrot.lane.b32.xlu0 %v1139, 127
    %v1145 = vpop.permute.xlu0 %1144
    %1146 = vrot.lane.b32.xlu0 %v1141, 127
    %v1147 = vpop.permute.xlu0 %1146
    %1148 = vrot.lane.b32.xlu0 %v1143, 127
    %v1149 = vpop.permute.xlu0 %1148
    %v1153 = vadd.f32 %v1105, %v1145
    %v1154 = vadd.f32 %v1106, %v1147
    %v1155 = vadd.f32 %v1107, %v1149
    %v1156 = vmul.f32 %v849, %v593
    %v1157 = vmul.f32 %v850, %v593
    %v1158 = vmul.f32 %v851, %v593
    %v1159 = vmul.f32 %v852, %v593
    %v1164 = vrot.slane %v1156, 2
    %v1165 = vrot.slane %v1157, 2
    %v1166 = vsel %vm522, %v1164, %v1165
    %v1167 = vrot.slane %v1158, 2
    %v1168 = vsel %vm522, %v1165, %v1167
    %v1169 = vrot.slane %v1159, 2
    %v1170 = vsel %vm522, %v1167, %v1169
    %1171 = vrot.lane.b32.xlu0 %v1166, 127
    %v1172 = vpop.permute.xlu0 %1171
    %1173 = vrot.lane.b32.xlu0 %v1168, 127
    %v1174 = vpop.permute.xlu0 %1173
    %1175 = vrot.lane.b32.xlu0 %v1170, 127
    %v1176 = vpop.permute.xlu0 %1175
    %v1180 = vadd.f32 %v1126, %v1172
    %v1181 = vadd.f32 %v1127, %v1174
    %v1182 = vadd.f32 %v1128, %v1176
    %v1183 = vmul.f32 %v849, %v625
    %v1184 = vmul.f32 %v850, %v625
    %v1185 = vmul.f32 %v851, %v625
    %v1186 = vmul.f32 %v852, %v625
    %v1191 = vrot.slane %v1183, 2
    %v1192 = vrot.slane %v1184, 2
    %v1193 = vsel %vm522, %v1191, %v1192
    %v1194 = vrot.slane %v1185, 2
    %v1195 = vsel %vm522, %v1192, %v1194
    %v1196 = vrot.slane %v1186, 2
    %v1197 = vsel %vm522, %v1194, %v1196
    %1198 = vrot.lane.b32.xlu0 %v1193, 126
    %v1199 = vpop.permute.xlu0 %1198
    %1200 = vrot.lane.b32.xlu0 %v1195, 126
    %v1201 = vpop.permute.xlu0 %1200
    %1202 = vrot.lane.b32.xlu0 %v1197, 126
    %v1203 = vpop.permute.xlu0 %1202
    %v1207 = vadd.f32 %v1153, %v1199
    %v1208 = vadd.f32 %v1154, %v1201
    %v1209 = vadd.f32 %v1155, %v1203
    %v1210 = vmul.f32 %v849, %v657
    %v1211 = vmul.f32 %v850, %v657
    %v1212 = vmul.f32 %v851, %v657
    %v1213 = vmul.f32 %v852, %v657
    %v1218 = vrot.slane %v1210, 2
    %v1219 = vrot.slane %v1211, 2
    %v1220 = vsel %vm522, %v1218, %v1219
    %v1221 = vrot.slane %v1212, 2
    %v1222 = vsel %vm522, %v1219, %v1221
    %v1223 = vrot.slane %v1213, 2
    %v1224 = vsel %vm522, %v1221, %v1223
    %1225 = vrot.lane.b32.xlu0 %v1220, 126
    %v1226 = vpop.permute.xlu0 %1225
    %1227 = vrot.lane.b32.xlu0 %v1222, 126
    %v1228 = vpop.permute.xlu0 %1227
    %1229 = vrot.lane.b32.xlu0 %v1224, 126
    %v1230 = vpop.permute.xlu0 %1229
    %v1234 = vadd.f32 %v1180, %v1226
    %v1235 = vadd.f32 %v1181, %v1228
    %v1236 = vadd.f32 %v1182, %v1230
    %s1237 = sld [smem:[#allocation4]]
    %v1238 = vstv %s1237
    %v1240 = vsel %vm688, %v1207, 0
    %v1243 = vsel %vm688, %v1208, 0
    %v1246 = vsel %vm688, %v1209, 0
    %1248 = vmatpush.msra.mxu0 0.0
    %1249 = vmatpush.msra.mxu0 0.0
    %1250 = vmatpush.msra.mxu0 0.0
    %1251 = vmatpush.msra.mxu0 %v699
    %1252 = vmatpush.msra.mxu0 %v125
    %1253 = vmatpush.msra.mxu0 %v124
    %1254 = vmatpush.msra.mxu0 %v123
    %1255 = vmatpush.msra.mxu0 %v122
    %1256 = vmatpush.msra.mxu0 %v121
    %1257 = vmatpush.msra.mxu0 %v120
    %1258 = vmatpush.msra.mxu0 %v119
    %1259 = vmatpush.msra.mxu0 %v118
    %1260 = vmatpush.msra.mxu0 %v117
    %1261 = vmatpush.msra.mxu0 %v116
    %1262 = vmatpush.msra.mxu0 %v115
    %1263 = vmatpush.msra.mxu0 %v114
    %1264 = vmatmul.f32.gmra.mxu0 %v1240
    %v1265 = vpop.f32.mrf.mxu0
    %v1266 = vadd.f32 %v1238, %v1265
    %1267 = vmatmul.f32.gmra.mxu0 %v1243
    %v1268 = vpop.f32.mrf.mxu0
    %v1269 = vadd.f32 %v1238, %v1268
    %1270 = vmatmul.f32.gmra.mxu0 %v1246
    %v1271 = vpop.f32.mrf.mxu0
    %v1272 = vadd.f32 %v1238, %v1271
    %1273 = vdwg.mxu0
    %s1274 = sld [smem:[#allocation4 + $0x1]]
    %v1275 = vstv %s1274
    %v1277 = vsel %vm688, %v1234, 0
    %v1280 = vsel %vm688, %v1235, 0
    %v1283 = vsel %vm688, %v1236, 0
    %1285 = vmatpush.msra.mxu0 0.0
    %1286 = vmatpush.msra.mxu0 0.0
    %1287 = vmatpush.msra.mxu0 0.0
    %1288 = vmatpush.msra.mxu0 %v699
    %1289 = vmatpush.msra.mxu0 %v125
    %1290 = vmatpush.msra.mxu0 %v124
    %1291 = vmatpush.msra.mxu0 %v123
    %1292 = vmatpush.msra.mxu0 %v122
    %1293 = vmatpush.msra.mxu0 %v121
    %1294 = vmatpush.msra.mxu0 %v120
    %1295 = vmatpush.msra.mxu0 %v119
    %1296 = vmatpush.msra.mxu0 %v118
    %1297 = vmatpush.msra.mxu0 %v117
    %1298 = vmatpush.msra.mxu0 %v116
    %1299 = vmatpush.msra.mxu0 %v115
    %1300 = vmatpush.msra.mxu0 %v114
    %1301 = vmatmul.f32.gmra.mxu0 %v1277
    %v1302 = vpop.f32.mrf.mxu0
    %v1303 = vadd.f32 %v1275, %v1302
    %1304 = vmatmul.f32.gmra.mxu0 %v1280
    %v1305 = vpop.f32.mrf.mxu0
    %v1306 = vadd.f32 %v1275, %v1305
    %1307 = vmatmul.f32.gmra.mxu0 %v1283
    %v1308 = vpop.f32.mrf.mxu0
    %v1309 = vadd.f32 %v1275, %v1308
    %1310 = vdwg.mxu0
    %vm1311 = vcmask 195584
    %v1312 = vsel %vm1311, %v719, 0.0
    %v1313 = vsel %vm1311, %v722, 0.0
    %v1314 = vadd.f32 %v1312, %v1313
    %v1315 = vsel %vm1311, %v725, 0.0
    %v1316 = vadd.f32 %v1314, %v1315
    %1317 = vadd.xlane.f32.xlu0 %v1316
    %v1318 = vpop.xlane.xlu0 %1317
    %v1319 = vrot.slane %v1318, 4
    %v1320 = vadd.f32 %v1318, %v1319
    %v1321 = vrot.slane %v1320, 2
    %v1322 = vadd.f32 %v1320, %v1321
    %v1323 = vrot.slane %v1322, 1
    %v1324 = vadd.f32 %v1322, %v1323
    %s1325 = vtos %v1324
    %s1326 = sadd.f32 %s1325, 0.0
    %v1327 = vsel %vm1311, %v1266, 0.0
    %v1328 = vsel %vm1311, %v1269, 0.0
    %v1329 = vadd.f32 %v1327, %v1328
    %v1330 = vsel %vm1311, %v1272, 0.0
    %v1331 = vadd.f32 %v1329, %v1330
    %1332 = vadd.xlane.f32.xlu0 %v1331
    %v1333 = vpop.xlane.xlu0 %1332
    %v1334 = vrot.slane %v1333, 4
    %v1335 = vadd.f32 %v1333, %v1334
    %v1336 = vrot.slane %v1335, 2
    %v1337 = vadd.f32 %v1335, %v1336
    %v1338 = vrot.slane %v1337, 1
    %v1339 = vadd.f32 %v1337, %v1338
    %s1340 = vtos %v1339
    %s1341 = sadd.f32 %s1326, %s1340
    %s1342 = smul.f32 %s1341, 0.00086805556
    %v1343 = vstv %s1342
    %v1344 = vsub.f32 %v719, %v1343
    %v1345 = vsub.f32 %v722, %v1343
    %v1346 = vsub.f32 %v725, %v1343
    %v1347 = vmul.f32 %v1344, %v1344
    %v1348 = vmul.f32 %v1345, %v1345
    %v1349 = vmul.f32 %v1346, %v1346
    %v1350 = vsel %vm1311, %v1347, 0.0
    %v1351 = vsel %vm1311, %v1348, 0.0
    %v1352 = vadd.f32 %v1350, %v1351
    %v1353 = vsel %vm1311, %v1349, 0.0
    %v1354 = vadd.f32 %v1352, %v1353
    %1355 = vadd.xlane.f32.xlu0 %v1354
    %v1356 = vpop.xlane.xlu0 %1355
    %v1357 = vrot.slane %v1356, 4
    %v1358 = vadd.f32 %v1356, %v1357
    %v1359 = vrot.slane %v1358, 2
    %v1360 = vadd.f32 %v1358, %v1359
    %v1361 = vrot.slane %v1360, 1
    %v1362 = vadd.f32 %v1360, %v1361
    %s1363 = vtos %v1362
    %s1364 = sadd.f32 %s1363, 0.0
    %v1365 = vsub.f32 %v1266, %v1343
    %v1366 = vsub.f32 %v1269, %v1343
    %v1367 = vsub.f32 %v1272, %v1343
    %v1368 = vmul.f32 %v1365, %v1365
    %v1369 = vmul.f32 %v1366, %v1366
    %v1370 = vmul.f32 %v1367, %v1367
    %v1371 = vsel %vm1311, %v1368, 0.0
    %v1372 = vsel %vm1311, %v1369, 0.0
    %v1373 = vadd.f32 %v1371, %v1372
    %v1374 = vsel %vm1311, %v1370, 0.0
    %v1375 = vadd.f32 %v1373, %v1374
    %1376 = vadd.xlane.f32.xlu0 %v1375
    %v1377 = vpop.xlane.xlu0 %1376
    %v1378 = vrot.slane %v1377, 4
    %v1379 = vadd.f32 %v1377, %v1378
    %v1380 = vrot.slane %v1379, 2
    %v1381 = vadd.f32 %v1379, %v1380
    %v1382 = vrot.slane %v1381, 1
    %v1383 = vadd.f32 %v1381, %v1382
    %s1384 = vtos %v1383
    %s1385 = sadd.f32 %s1364, %s1384
    %s1386 = smul.f32 %s1385, 0.00086805556
    %s1387 = sld [smem:[#allocation7]]
    %s1388 = sadd.f32 %s1386, 1e-05
    %v1389 = vstv %s1388
    %v1390 = vrsqrt.pop %v1389
    %v1391 = vmul.f32 %v1390, %v1389
    %v1392 = vmul.f32 %v1391, %v1390
    %v1393 = vmul.f32 0.5, %v1392
    %v1394 = vsub.f32 1.5, %v1393
    %v1395 = vmul.f32 %v1390, %v1394
    %vm1396 = vweird.f32 %v1389
    %vm1397 = vweird.f32 %v1390
    %vm1398 = vmor %vm1396, %vm1397
    %v1399 = vsel %vm1398, %v1390, %v1395
    %s1400 = vtos %v1399
    %s1401 = smul.f32 %s1387, %s1400
    %s1402 = sld [smem:[#allocation9]]
    %s1403 = smul.f32 %s1342, %s1401
    %s1404 = ssub.f32 %s1402, %s1403
    %v1405 = vstv %s1401
    %v1406 = vmul.f32 %v719, %v1405
    %v1407 = vmul.f32 %v722, %v1405
    %v1408 = vmul.f32 %v725, %v1405
    %v1409 = vstv %s1404
    %v1410 = vadd.f32 %v1406, %v1409
    %v1411 = vadd.f32 %v1407, %v1409
    %v1412 = vadd.f32 %v1408, %v1409
    %v1413 = vmul.f32 %v1266, %v1405
    %v1414 = vmul.f32 %v1269, %v1405
    %v1415 = vmul.f32 %v1272, %v1405
    %v1416 = vadd.f32 %v1413, %v1409
    %v1417 = vadd.f32 %v1414, %v1409
    %v1418 = vadd.f32 %v1415, %v1409
    %v1419 = vsel %vm1311, %v756, 0.0
    %v1420 = vsel %vm1311, %v759, 0.0
    %v1421 = vadd.f32 %v1419, %v1420
    %v1422 = vsel %vm1311, %v762, 0.0
    %v1423 = vadd.f32 %v1421, %v1422
    %1424 = vadd.xlane.f32.xlu0 %v1423
    %v1425 = vpop.xlane.xlu0 %1424
    %v1426 = vrot.slane %v1425, 4
    %v1427 = vadd.f32 %v1425, %v1426
    %v1428 = vrot.slane %v1427, 2
    %v1429 = vadd.f32 %v1427, %v1428
    %v1430 = vrot.slane %v1429, 1
    %v1431 = vadd.f32 %v1429, %v1430
    %s1432 = vtos %v1431
    %s1433 = sadd.f32 %s1432, 0.0
    %v1434 = vsel %vm1311, %v1303, 0.0
    %v1435 = vsel %vm1311, %v1306, 0.0
    %v1436 = vadd.f32 %v1434, %v1435
    %v1437 = vsel %vm1311, %v1309, 0.0
    %v1438 = vadd.f32 %v1436, %v1437
    %1439 = vadd.xlane.f32.xlu0 %v1438
    %v1440 = vpop.xlane.xlu0 %1439
    %v1441 = vrot.slane %v1440, 4
    %v1442 = vadd.f32 %v1440, %v1441
    %v1443 = vrot.slane %v1442, 2
    %v1444 = vadd.f32 %v1442, %v1443
    %v1445 = vrot.slane %v1444, 1
    %v1446 = vadd.f32 %v1444, %v1445
    %s1447 = vtos %v1446
    %s1448 = sadd.f32 %s1433, %s1447
    %s1449 = smul.f32 %s1448, 0.00086805556
    %v1450 = vstv %s1449
    %v1451 = vsub.f32 %v756, %v1450
    %v1452 = vsub.f32 %v759, %v1450
    %v1453 = vsub.f32 %v762, %v1450
    %v1454 = vmul.f32 %v1451, %v1451
    %v1455 = vmul.f32 %v1452, %v1452
    %v1456 = vmul.f32 %v1453, %v1453
    %v1457 = vsel %vm1311, %v1454, 0.0
    %v1458 = vsel %vm1311, %v1455, 0.0
    %v1459 = vadd.f32 %v1457, %v1458
    %v1460 = vsel %vm1311, %v1456, 0.0
    %v1461 = vadd.f32 %v1459, %v1460
    %1462 = vadd.xlane.f32.xlu0 %v1461
    %v1463 = vpop.xlane.xlu0 %1462
    %v1464 = vrot.slane %v1463, 4
    %v1465 = vadd.f32 %v1463, %v1464
    %v1466 = vrot.slane %v1465, 2
    %v1467 = vadd.f32 %v1465, %v1466
    %v1468 = vrot.slane %v1467, 1
    %v1469 = vadd.f32 %v1467, %v1468
    %s1470 = vtos %v1469
    %s1471 = sadd.f32 %s1470, 0.0
    %v1472 = vsub.f32 %v1303, %v1450
    %v1473 = vsub.f32 %v1306, %v1450
    %v1474 = vsub.f32 %v1309, %v1450
    %v1475 = vmul.f32 %v1472, %v1472
    %v1476 = vmul.f32 %v1473, %v1473
    %v1477 = vmul.f32 %v1474, %v1474
    %v1478 = vsel %vm1311, %v1475, 0.0
    %v1479 = vsel %vm1311, %v1476, 0.0
    %v1480 = vadd.f32 %v1478, %v1479
    %v1481 = vsel %vm1311, %v1477, 0.0
    %v1482 = vadd.f32 %v1480, %v1481
    %1483 = vadd.xlane.f32.xlu0 %v1482
    %v1484 = vpop.xlane.xlu0 %1483
    %v1485 = vrot.slane %v1484, 4
    %v1486 = vadd.f32 %v1484, %v1485
    %v1487 = vrot.slane %v1486, 2
    %v1488 = vadd.f32 %v1486, %v1487
    %v1489 = vrot.slane %v1488, 1
    %v1490 = vadd.f32 %v1488, %v1489
    %s1491 = vtos %v1490
    %s1492 = sadd.f32 %s1471, %s1491
    %s1493 = smul.f32 %s1492, 0.00086805556
    %s1494 = sld [smem:[#allocation7 + $0x1]]
    %s1495 = sadd.f32 %s1493, 1e-05
    %v1496 = vstv %s1495
    %v1497 = vrsqrt.pop %v1496
    %v1498 = vmul.f32 %v1497, %v1496
    %v1499 = vmul.f32 %v1498, %v1497
    %v1500 = vmul.f32 0.5, %v1499
    %v1501 = vsub.f32 1.5, %v1500
    %v1502 = vmul.f32 %v1497, %v1501
    %vm1503 = vweird.f32 %v1496
    %vm1504 = vweird.f32 %v1497
    %vm1505 = vmor %vm1503, %vm1504
    %v1506 = vsel %vm1505, %v1497, %v1502
    %s1507 = vtos %v1506
    %s1508 = smul.f32 %s1494, %s1507
    %s1509 = sld [smem:[#allocation9 + $0x1]]
    %s1510 = smul.f32 %s1449, %s1508
    %s1511 = ssub.f32 %s1509, %s1510
    %v1512 = vstv %s1508
    %v1513 = vmul.f32 %v756, %v1512
    %v1514 = vmul.f32 %v759, %v1512
    %v1515 = vmul.f32 %v762, %v1512
    %v1516 = vstv %s1511
    %v1517 = vadd.f32 %v1513, %v1516
    %v1518 = vadd.f32 %v1514, %v1516
    %v1519 = vadd.f32 %v1515, %v1516
    %v1520 = vmul.f32 %v1303, %v1512
    %v1521 = vmul.f32 %v1306, %v1512
    %v1522 = vmul.f32 %v1309, %v1512
    %v1523 = vadd.f32 %v1520, %v1516
    %v1524 = vadd.f32 %v1521, %v1516
    %v1525 = vadd.f32 %v1522, %v1516
    %v1529 = vrot.slane %v1410, 1
    %v1530 = vrot.slane %v1411, 1
    %v1531 = vsel %vm349, %v1529, %v1530
    %v1532 = vrot.slane %v1412, 1
    %v1533 = vsel %vm349, %v1530, %v1532
    %v1537 = vmax.f32 %v1410, %v1531
    %v1538 = vmax.f32 %v1411, %v1533
    %v1539 = vmax.f32 %v1412, %v1532
    %1543 = vrot.lane.b32.xlu0 %v1537, 127
    %v1544 = vpop.permute.xlu0 %1543
    %1545 = vrot.lane.b32.xlu0 %v1538, 127
    %v1546 = vpop.permute.xlu0 %1545
    %1547 = vrot.lane.b32.xlu0 %v1539, 127
    %v1548 = vpop.permute.xlu0 %1547
    %v1552 = vmax.f32 %v1537, %v1544
    %v1553 = vmax.f32 %v1538, %v1546
    %v1554 = vmax.f32 %v1539, %v1548
    %v1558 = vrot.slane %v1517, 1
    %v1559 = vrot.slane %v1518, 1
    %v1560 = vsel %vm349, %v1558, %v1559
    %v1561 = vrot.slane %v1519, 1
    %v1562 = vsel %vm349, %v1559, %v1561
    %v1566 = vmax.f32 %v1517, %v1560
    %v1567 = vmax.f32 %v1518, %v1562
    %v1568 = vmax.f32 %v1519, %v1561
    %1572 = vrot.lane.b32.xlu0 %v1566, 127
    %v1573 = vpop.permute.xlu0 %1572
    %1574 = vrot.lane.b32.xlu0 %v1567, 127
    %v1575 = vpop.permute.xlu0 %1574
    %1576 = vrot.lane.b32.xlu0 %v1568, 127
    %v1577 = vpop.permute.xlu0 %1576
    %v1581 = vmax.f32 %v1566, %v1573
    %v1582 = vmax.f32 %v1567, %v1575
    %v1583 = vmax.f32 %v1568, %v1577
    %vm1584 = vcmask 187392
    %v1586 = vsel %vm1584, %v1581, 0
    %v1589 = vsel %vm1584, %v1582, 0
    %v1592 = vsel %vm1584, %v1583, 0
    %v1595 = vsel %vm349, %v137, 0
    %1597 = vmatpush.msra.mxu0 0.0
    %1598 = vmatpush.msra.mxu0 0.0
    %1599 = vmatpush.msra.mxu0 0.0
    %1600 = vmatpush.msra.mxu0 0.0
    %1601 = vmatpush.msra.mxu0 0.0
    %1602 = vmatpush.msra.mxu0 0.0
    %1603 = vmatpush.msra.mxu0 0.0
    %1604 = vmatpush.msra.mxu0 0.0
    %1605 = vmatpush.msra.mxu0 0.0
    %1606 = vmatpush.msra.mxu0 0.0
    %1607 = vmatpush.msra.mxu0 0.0
    %1608 = vmatpush.msra.mxu0 0.0
    %1609 = vmatpush.msra.mxu0 0.0
    %1610 = vmatpush.msra.mxu0 %v1595
    %1611 = vmatpush.msra.mxu0 %v136
    %1612 = vmatpush.msra.mxu0 %v135
    %1613 = vmatmul.f32.gmra.mxu0 %v1586
    %v1614 = vpop.f32.mrf.mxu0
    %v1615 = vadd.f32 0.0, %v1614
    %1616 = vmatmul.f32.gmra.mxu0 %v1589
    %v1617 = vpop.f32.mrf.mxu0
    %v1618 = vadd.f32 0.0, %v1617
    %1619 = vmatmul.f32.gmra.mxu0 %v1592
    %v1620 = vpop.f32.mrf.mxu0
    %v1621 = vadd.f32 0.0, %v1620
    %1622 = vdwg.mxu0
    %v1624 = vsel %vm1584, %v1552, 0
    %v1627 = vsel %vm1584, %v1553, 0
    %v1630 = vsel %vm1584, %v1554, 0
    %v1633 = vsel %vm349, %v134, 0
    %1635 = vmatpush.msra.mxu0 0.0
    %1636 = vmatpush.msra.mxu0 0.0
    %1637 = vmatpush.msra.mxu0 0.0
    %1638 = vmatpush.msra.mxu0 0.0
    %1639 = vmatpush.msra.mxu0 0.0
    %1640 = vmatpush.msra.mxu0 0.0
    %1641 = vmatpush.msra.mxu0 0.0
    %1642 = vmatpush.msra.mxu0 0.0
    %1643 = vmatpush.msra.mxu0 0.0
    %1644 = vmatpush.msra.mxu0 0.0
    %1645 = vmatpush.msra.mxu0 0.0
    %1646 = vmatpush.msra.mxu0 0.0
    %1647 = vmatpush.msra.mxu0 0.0
    %1648 = vmatpush.msra.mxu0 %v1633
    %1649 = vmatpush.msra.mxu0 %v133
    %1650 = vmatpush.msra.mxu0 %v132
    %1651 = vmatmul.f32.gmra.mxu0 %v1624
    %v1652 = vpop.f32.mrf.mxu0
    %v1653 = vadd.f32 %v1615, %v1652
    %1654 = vmatmul.f32.gmra.mxu0 %v1627
    %v1655 = vpop.f32.mrf.mxu0
    %v1656 = vadd.f32 %v1618, %v1655
    %1657 = vmatmul.f32.gmra.mxu0 %v1630
    %v1658 = vpop.f32.mrf.mxu0
    %v1659 = vadd.f32 %v1621, %v1658
    %1660 = vdwg.mxu0
    %v1662 = vsel %vm1584, %v130, 0
    %v1665 = vsel %vm1584, %v131, 0
    %v1668 = vsel %vm349, %v1659, 0
    %1670 = vmatpush.msra.mxu0 0.0
    %1671 = vmatpush.msra.mxu0 0.0
    %1672 = vmatpush.msra.mxu0 0.0
    %1673 = vmatpush.msra.mxu0 0.0
    %1674 = vmatpush.msra.mxu0 0.0
    %1675 = vmatpush.msra.mxu0 0.0
    %1676 = vmatpush.msra.mxu0 0.0
    %1677 = vmatpush.msra.mxu0 0.0
    %1678 = vmatpush.msra.mxu0 0.0
    %1679 = vmatpush.msra.mxu0 0.0
    %1680 = vmatpush.msra.mxu0 0.0
    %1681 = vmatpush.msra.mxu0 0.0
    %1682 = vmatpush.msra.mxu0 0.0
    %1683 = vmatpush.msra.mxu0 %v1668
    %1684 = vmatpush.msra.mxu0 %v1656
    %1685 = vmatpush.msra.mxu0 %v1653
    %1686 = vmatmul.f32.gmra.mxu0 %v1662
    %v1687 = vpop.f32.mrf.mxu0
    %v1688 = vadd.f32 0.0, %v1687
    %1689 = vmatmul.f32.gmra.mxu0 %v1665
    %v1690 = vpop.f32.mrf.mxu0
    %v1691 = vadd.f32 0.0, %v1690
    %1692 = vdwg.mxu0
    %v1693 = vmax.f32 %v1688, 0.0
    %v1694 = vmax.f32 %v1691, 0.0
    %v1698 = vrot.slane %v1416, 1
    %v1699 = vrot.slane %v1417, 1
    %v1700 = vsel %vm349, %v1698, %v1699
    %v1701 = vrot.slane %v1418, 1
    %v1702 = vsel %vm349, %v1699, %v1701
    %v1706 = vmax.f32 %v1416, %v1700
    %v1707 = vmax.f32 %v1417, %v1702
    %v1708 = vmax.f32 %v1418, %v1701
    %1712 = vrot.lane.b32.xlu0 %v1706, 127
    %v1713 = vpop.permute.xlu0 %1712
    %1714 = vrot.lane.b32.xlu0 %v1707, 127
    %v1715 = vpop.permute.xlu0 %1714
    %1716 = vrot.lane.b32.xlu0 %v1708, 127
    %v1717 = vpop.permute.xlu0 %1716
    %v1721 = vmax.f32 %v1706, %v1713
    %v1722 = vmax.f32 %v1707, %v1715
    %v1723 = vmax.f32 %v1708, %v1717
    %v1727 = vrot.slane %v1523, 1
    %v1728 = vrot.slane %v1524, 1
    %v1729 = vsel %vm349, %v1727, %v1728
    %v1730 = vrot.slane %v1525, 1
    %v1731 = vsel %vm349, %v1728, %v1730
    %v1735 = vmax.f32 %v1523, %v1729
    %v1736 = vmax.f32 %v1524, %v1731
    %v1737 = vmax.f32 %v1525, %v1730
    %1741 = vrot.lane.b32.xlu0 %v1735, 127
    %v1742 = vpop.permute.xlu0 %1741
    %1743 = vrot.lane.b32.xlu0 %v1736, 127
    %v1744 = vpop.permute.xlu0 %1743
    %1745 = vrot.lane.b32.xlu0 %v1737, 127
    %v1746 = vpop.permute.xlu0 %1745
    %v1750 = vmax.f32 %v1735, %v1742
    %v1751 = vmax.f32 %v1736, %v1744
    %v1752 = vmax.f32 %v1737, %v1746
    %v1754 = vsel %vm1584, %v1750, 0
    %v1757 = vsel %vm1584, %v1751, 0
    %v1760 = vsel %vm1584, %v1752, 0
    %1762 = vmatpush.msra.mxu0 0.0
    %1763 = vmatpush.msra.mxu0 0.0
    %1764 = vmatpush.msra.mxu0 0.0
    %1765 = vmatpush.msra.mxu0 0.0
    %1766 = vmatpush.msra.mxu0 0.0
    %1767 = vmatpush.msra.mxu0 0.0
    %1768 = vmatpush.msra.mxu0 0.0
    %1769 = vmatpush.msra.mxu0 0.0
    %1770 = vmatpush.msra.mxu0 0.0
    %1771 = vmatpush.msra.mxu0 0.0
    %1772 = vmatpush.msra.mxu0 0.0
    %1773 = vmatpush.msra.mxu0 0.0
    %1774 = vmatpush.msra.mxu0 0.0
    %1775 = vmatpush.msra.mxu0 %v1595
    %1776 = vmatpush.msra.mxu0 %v136
    %1777 = vmatpush.msra.mxu0 %v135
    %1778 = vmatmul.f32.gmra.mxu0 %v1754
    %v1779 = vpop.f32.mrf.mxu0
    %v1780 = vadd.f32 0.0, %v1779
    %1781 = vmatmul.f32.gmra.mxu0 %v1757
    %v1782 = vpop.f32.mrf.mxu0
    %v1783 = vadd.f32 0.0, %v1782
    %1784 = vmatmul.f32.gmra.mxu0 %v1760
    %v1785 = vpop.f32.mrf.mxu0
    %v1786 = vadd.f32 0.0, %v1785
    %1787 = vdwg.mxu0
    %v1789 = vsel %vm1584, %v1721, 0
    %v1792 = vsel %vm1584, %v1722, 0
    %v1795 = vsel %vm1584, %v1723, 0
    %1797 = vmatpush.msra.mxu0 0.0
    %1798 = vmatpush.msra.mxu0 0.0
    %1799 = vmatpush.msra.mxu0 0.0
    %1800 = vmatpush.msra.mxu0 0.0
    %1801 = vmatpush.msra.mxu0 0.0
    %1802 = vmatpush.msra.mxu0 0.0
    %1803 = vmatpush.msra.mxu0 0.0
    %1804 = vmatpush.msra.mxu0 0.0
    %1805 = vmatpush.msra.mxu0 0.0
    %1806 = vmatpush.msra.mxu0 0.0
    %1807 = vmatpush.msra.mxu0 0.0
    %1808 = vmatpush.msra.mxu0 0.0
    %1809 = vmatpush.msra.mxu0 0.0
    %1810 = vmatpush.msra.mxu0 %v1633
    %1811 = vmatpush.msra.mxu0 %v133
    %1812 = vmatpush.msra.mxu0 %v132
    %1813 = vmatmul.f32.gmra.mxu0 %v1789
    %v1814 = vpop.f32.mrf.mxu0
    %v1815 = vadd.f32 %v1780, %v1814
    %1816 = vmatmul.f32.gmra.mxu0 %v1792
    %v1817 = vpop.f32.mrf.mxu0
    %v1818 = vadd.f32 %v1783, %v1817
    %1819 = vmatmul.f32.gmra.mxu0 %v1795
    %v1820 = vpop.f32.mrf.mxu0
    %v1821 = vadd.f32 %v1786, %v1820
    %1822 = vdwg.mxu0
    %v1824 = vsel %vm349, %v1821, 0
    %1826 = vmatpush.msra.mxu0 0.0
    %1827 = vmatpush.msra.mxu0 0.0
    %1828 = vmatpush.msra.mxu0 0.0
    %1829 = vmatpush.msra.mxu0 0.0
    %1830 = vmatpush.msra.mxu0 0.0
    %1831 = vmatpush.msra.mxu0 0.0
    %1832 = vmatpush.msra.mxu0 0.0
    %1833 = vmatpush.msra.mxu0 0.0
    %1834 = vmatpush.msra.mxu0 0.0
    %1835 = vmatpush.msra.mxu0 0.0
    %1836 = vmatpush.msra.mxu0 0.0
    %1837 = vmatpush.msra.mxu0 0.0
    %1838 = vmatpush.msra.mxu0 0.0
    %1839 = vmatpush.msra.mxu0 %v1824
    %1840 = vmatpush.msra.mxu0 %v1818
    %1841 = vmatpush.msra.mxu0 %v1815
    %1842 = vmatmul.f32.gmra.mxu0 %v1662
    %v1843 = vpop.f32.mrf.mxu0
    %v1844 = vadd.f32 0.0, %v1843
    %1845 = vmatmul.f32.gmra.mxu0 %v1665
    %v1846 = vpop.f32.mrf.mxu0
    %v1847 = vadd.f32 0.0, %v1846
    %1848 = vdwg.mxu0
    %v1849 = vmax.f32 %v1844, 0.0
    %v1850 = vmax.f32 %v1847, 0.0
    %v1851 = vperm.slane %v108, 0
    %v1852 = vmul.f32 %v1693, %v1851
    %v1853 = vmul.f32 %v1694, %v1851
    %v1854 = vadd.f32 %v1852, 0.0
    %v1855 = vadd.f32 %v1853, 0.0
    %v1856 = vperm.slane %v110, 0
    %v1857 = vmul.f32 %v1693, %v1856
    %v1858 = vmul.f32 %v1694, %v1856
    %v1859 = vadd.f32 %v1857, 0.0
    %v1860 = vadd.f32 %v1858, 0.0
    %v1861 = vperm.slane %v112, 0
    %v1862 = vmul.f32 %v1693, %v1861
    %v1863 = vmul.f32 %v1694, %v1861
    %v1864 = vadd.f32 %v1862, 0.0
    %v1865 = vadd.f32 %v1863, 0.0
    %v1866 = vperm.slane %v108, 1
    %1868 = vrot.lane.b32.xlu0 %v1866, 1
    %v1869 = vpop.permute.xlu0 %1868
    %v1871 = vmul.f32 %v1693, %v1869
    %v1872 = vmul.f32 %v1694, %v1869
    %1875 = vrot.lane.b32.xlu0 %v1871, 127
    %v1876 = vpop.permute.xlu0 %1875
    %1877 = vrot.lane.b32.xlu0 %v1872, 127
    %v1878 = vpop.permute.xlu0 %1877
    %v1881 = vadd.f32 %v1854, %v1876
    %v1882 = vadd.f32 %v1855, %v1878
    %v1883 = vperm.slane %v110, 1
    %1885 = vrot.lane.b32.xlu0 %v1883, 1
    %v1886 = vpop.permute.xlu0 %1885
    %v1888 = vmul.f32 %v1693, %v1886
    %v1889 = vmul.f32 %v1694, %v1886
    %1892 = vrot.lane.b32.xlu0 %v1888, 127
    %v1893 = vpop.permute.xlu0 %1892
    %1894 = vrot.lane.b32.xlu0 %v1889, 127
    %v1895 = vpop.permute.xlu0 %1894
    %v1898 = vadd.f32 %v1859, %v1893
    %v1899 = vadd.f32 %v1860, %v1895
    %v1900 = vperm.slane %v112, 1
    %1902 = vrot.lane.b32.xlu0 %v1900, 1
    %v1903 = vpop.permute.xlu0 %1902
    %v1905 = vmul.f32 %v1693, %v1903
    %v1906 = vmul.f32 %v1694, %v1903
    %1909 = vrot.lane.b32.xlu0 %v1905, 127
    %v1910 = vpop.permute.xlu0 %1909
    %1911 = vrot.lane.b32.xlu0 %v1906, 127
    %v1912 = vpop.permute.xlu0 %1911
    %v1915 = vadd.f32 %v1864, %v1910
    %v1916 = vadd.f32 %v1865, %v1912
    %v1917 = vperm.slane %v108, 2
    %1919 = vrot.lane.b32.xlu0 %v1917, 2
    %v1920 = vpop.permute.xlu0 %1919
    %v1922 = vmul.f32 %v1693, %v1920
    %v1923 = vmul.f32 %v1694, %v1920
    %1926 = vrot.lane.b32.xlu0 %v1922, 126
    %v1927 = vpop.permute.xlu0 %1926
    %1928 = vrot.lane.b32.xlu0 %v1923, 126
    %v1929 = vpop.permute.xlu0 %1928
    %v1932 = vadd.f32 %v1881, %v1927
    %v1933 = vadd.f32 %v1882, %v1929
    %v1934 = vperm.slane %v110, 2
    %1936 = vrot.lane.b32.xlu0 %v1934, 2
    %v1937 = vpop.permute.xlu0 %1936
    %v1939 = vmul.f32 %v1693, %v1937
    %v1940 = vmul.f32 %v1694, %v1937
    %1943 = vrot.lane.b32.xlu0 %v1939, 126
    %v1944 = vpop.permute.xlu0 %1943
    %1945 = vrot.lane.b32.xlu0 %v1940, 126
    %v1946 = vpop.permute.xlu0 %1945
    %v1949 = vadd.f32 %v1898, %v1944
    %v1950 = vadd.f32 %v1899, %v1946
    %v1951 = vperm.slane %v112, 2
    %1953 = vrot.lane.b32.xlu0 %v1951, 2
    %v1954 = vpop.permute.xlu0 %1953
    %v1956 = vmul.f32 %v1693, %v1954
    %v1957 = vmul.f32 %v1694, %v1954
    %1960 = vrot.lane.b32.xlu0 %v1956, 126
    %v1961 = vpop.permute.xlu0 %1960
    %1962 = vrot.lane.b32.xlu0 %v1957, 126
    %v1963 = vpop.permute.xlu0 %1962
    %v1966 = vadd.f32 %v1915, %v1961
    %v1967 = vadd.f32 %v1916, %v1963
    %v1968 = vperm.slane %v108, 3
    %1970 = vrot.lane.b32.xlu0 %v1968, 3
    %v1971 = vpop.permute.xlu0 %1970
    %v1973 = vmul.f32 %v1693, %v1971
    %v1974 = vmul.f32 %v1694, %v1971
    %1977 = vrot.lane.b32.xlu0 %v1973, 125
    %v1978 = vpop.permute.xlu0 %1977
    %1979 = vrot.lane.b32.xlu0 %v1974, 125
    %v1980 = vpop.permute.xlu0 %1979
    %v1983 = vadd.f32 %v1932, %v1978
    %v1984 = vadd.f32 %v1933, %v1980
    %v1985 = vperm.slane %v110, 3
    %1987 = vrot.lane.b32.xlu0 %v1985, 3
    %v1988 = vpop.permute.xlu0 %1987
    %v1990 = vmul.f32 %v1693, %v1988
    %v1991 = vmul.f32 %v1694, %v1988
    %1994 = vrot.lane.b32.xlu0 %v1990, 125
    %v1995 = vpop.permute.xlu0 %1994
    %1996 = vrot.lane.b32.xlu0 %v1991, 125
    %v1997 = vpop.permute.xlu0 %1996
    %v2000 = vadd.f32 %v1949, %v1995
    %v2001 = vadd.f32 %v1950, %v1997
    %v2002 = vperm.slane %v112, 3
    %2004 = vrot.lane.b32.xlu0 %v2002, 3
    %v2005 = vpop.permute.xlu0 %2004
    %v2007 = vmul.f32 %v1693, %v2005
    %v2008 = vmul.f32 %v1694, %v2005
    %2011 = vrot.lane.b32.xlu0 %v2007, 125
    %v2012 = vpop.permute.xlu0 %2011
    %2013 = vrot.lane.b32.xlu0 %v2008, 125
    %v2014 = vpop.permute.xlu0 %2013
    %v2017 = vadd.f32 %v1966, %v2012
    %v2018 = vadd.f32 %v1967, %v2014
    %v2019 = vperm.slane %v108, 4
    %v2020 = vmul.f32 %v1693, %v2019
    %v2021 = vmul.f32 %v1694, %v2019
    %v2024 = vrot.slane %v2020, 1
    %v2025 = vrot.slane %v2021, 1
    %v2026 = vsel %vm349, %v2024, %v2025
    %v2029 = vadd.f32 %v1983, %v2026
    %v2030 = vadd.f32 %v1984, %v2025
    %v2031 = vperm.slane %v110, 4
    %v2032 = vmul.f32 %v1693, %v2031
    %v2033 = vmul.f32 %v1694, %v2031
    %v2036 = vrot.slane %v2032, 1
    %v2037 = vrot.slane %v2033, 1
    %v2038 = vsel %vm349, %v2036, %v2037
    %v2041 = vadd.f32 %v2000, %v2038
    %v2042 = vadd.f32 %v2001, %v2037
    %v2043 = vperm.slane %v112, 4
    %v2044 = vmul.f32 %v1693, %v2043
    %v2045 = vmul.f32 %v1694, %v2043
    %v2048 = vrot.slane %v2044, 1
    %v2049 = vrot.slane %v2045, 1
    %v2050 = vsel %vm349, %v2048, %v2049
    %v2053 = vadd.f32 %v2017, %v2050
    %v2054 = vadd.f32 %v2018, %v2049
    %v2055 = vperm.slane %v108, 5
    %2057 = vrot.lane.b32.xlu0 %v2055, 1
    %v2058 = vpop.permute.xlu0 %2057
    %v2060 = vmul.f32 %v1693, %v2058
    %v2061 = vmul.f32 %v1694, %v2058
    %v2064 = vrot.slane %v2060, 1
    %v2065 = vrot.slane %v2061, 1
    %v2066 = vsel %vm349, %v2064, %v2065
    %2067 = vrot.lane.b32.xlu0 %v2066, 127
    %v2068 = vpop.permute.xlu0 %2067
    %2069 = vrot.lane.b32.xlu0 %v2065, 127
    %v2070 = vpop.permute.xlu0 %2069
    %v2073 = vadd.f32 %v2029, %v2068
    %v2074 = vadd.f32 %v2030, %v2070
    %v2075 = vperm.slane %v110, 5
    %2077 = vrot.lane.b32.xlu0 %v2075, 1
    %v2078 = vpop.permute.xlu0 %2077
    %v2080 = vmul.f32 %v1693, %v2078
    %v2081 = vmul.f32 %v1694, %v2078
    %v2084 = vrot.slane %v2080, 1
    %v2085 = vrot.slane %v2081, 1
    %v2086 = vsel %vm349, %v2084, %v2085
    %2087 = vrot.lane.b32.xlu0 %v2086, 127
    %v2088 = vpop.permute.xlu0 %2087
    %2089 = vrot.lane.b32.xlu0 %v2085, 127
    %v2090 = vpop.permute.xlu0 %2089
    %v2093 = vadd.f32 %v2041, %v2088
    %v2094 = vadd.f32 %v2042, %v2090
    %v2095 = vperm.slane %v112, 5
    %2097 = vrot.lane.b32.xlu0 %v2095, 1
    %v2098 = vpop.permute.xlu0 %2097
    %v2100 = vmul.f32 %v1693, %v2098
    %v2101 = vmul.f32 %v1694, %v2098
    %v2104 = vrot.slane %v2100, 1
    %v2105 = vrot.slane %v2101, 1
    %v2106 = vsel %vm349, %v2104, %v2105
    %2107 = vrot.lane.b32.xlu0 %v2106, 127
    %v2108 = vpop.permute.xlu0 %2107
    %2109 = vrot.lane.b32.xlu0 %v2105, 127
    %v2110 = vpop.permute.xlu0 %2109
    %v2113 = vadd.f32 %v2053, %v2108
    %v2114 = vadd.f32 %v2054, %v2110
    %v2115 = vperm.slane %v108, 6
    %2117 = vrot.lane.b32.xlu0 %v2115, 2
    %v2118 = vpop.permute.xlu0 %2117
    %v2120 = vmul.f32 %v1693, %v2118
    %v2121 = vmul.f32 %v1694, %v2118
    %v2124 = vrot.slane %v2120, 1
    %v2125 = vrot.slane %v2121, 1
    %v2126 = vsel %vm349, %v2124, %v2125
    %2127 = vrot.lane.b32.xlu0 %v2126, 126
    %v2128 = vpop.permute.xlu0 %2127
    %2129 = vrot.lane.b32.xlu0 %v2125, 126
    %v2130 = vpop.permute.xlu0 %2129
    %v2133 = vadd.f32 %v2073, %v2128
    %v2134 = vadd.f32 %v2074, %v2130
    %v2135 = vperm.slane %v110, 6
    %2137 = vrot.lane.b32.xlu0 %v2135, 2
    %v2138 = vpop.permute.xlu0 %2137
    %v2140 = vmul.f32 %v1693, %v2138
    %v2141 = vmul.f32 %v1694, %v2138
    %v2144 = vrot.slane %v2140, 1
    %v2145 = vrot.slane %v2141, 1
    %v2146 = vsel %vm349, %v2144, %v2145
    %2147 = vrot.lane.b32.xlu0 %v2146, 126
    %v2148 = vpop.permute.xlu0 %2147
    %2149 = vrot.lane.b32.xlu0 %v2145, 126
    %v2150 = vpop.permute.xlu0 %2149
    %v2153 = vadd.f32 %v2093, %v2148
    %v2154 = vadd.f32 %v2094, %v2150
    %v2155 = vperm.slane %v112, 6
    %2157 = vrot.lane.b32.xlu0 %v2155, 2
    %v2158 = vpop.permute.xlu0 %2157
    %v2160 = vmul.f32 %v1693, %v2158
    %v2161 = vmul.f32 %v1694, %v2158
    %v2164 = vrot.slane %v2160, 1
    %v2165 = vrot.slane %v2161, 1
    %v2166 = vsel %vm349, %v2164, %v2165
    %2167 = vrot.lane.b32.xlu0 %v2166, 126
    %v2168 = vpop.permute.xlu0 %2167
    %2169 = vrot.lane.b32.xlu0 %v2165, 126
    %v2170 = vpop.permute.xlu0 %2169
    %v2173 = vadd.f32 %v2113, %v2168
    %v2174 = vadd.f32 %v2114, %v2170
    %v2175 = vperm.slane %v108, 7
    %2177 = vrot.lane.b32.xlu0 %v2175, 3
    %v2178 = vpop.permute.xlu0 %2177
    %v2180 = vmul.f32 %v1693, %v2178
    %v2181 = vmul.f32 %v1694, %v2178
    %v2184 = vrot.slane %v2180, 1
    %v2185 = vrot.slane %v2181, 1
    %v2186 = vsel %vm349, %v2184, %v2185
    %2187 = vrot.lane.b32.xlu0 %v2186, 125
    %v2188 = vpop.permute.xlu0 %2187
    %2189 = vrot.lane.b32.xlu0 %v2185, 125
    %v2190 = vpop.permute.xlu0 %2189
    %v2193 = vadd.f32 %v2133, %v2188
    %v2194 = vadd.f32 %v2134, %v2190
    %v2195 = vperm.slane %v110, 7
    %2197 = vrot.lane.b32.xlu0 %v2195, 3
    %v2198 = vpop.permute.xlu0 %2197
    %v2200 = vmul.f32 %v1693, %v2198
    %v2201 = vmul.f32 %v1694, %v2198
    %v2204 = vrot.slane %v2200, 1
    %v2205 = vrot.slane %v2201, 1
    %v2206 = vsel %vm349, %v2204, %v2205
    %2207 = vrot.lane.b32.xlu0 %v2206, 125
    %v2208 = vpop.permute.xlu0 %2207
    %2209 = vrot.lane.b32.xlu0 %v2205, 125
    %v2210 = vpop.permute.xlu0 %2209
    %v2213 = vadd.f32 %v2153, %v2208
    %v2214 = vadd.f32 %v2154, %v2210
    %v2215 = vperm.slane %v112, 7
    %2217 = vrot.lane.b32.xlu0 %v2215, 3
    %v2218 = vpop.permute.xlu0 %2217
    %v2220 = vmul.f32 %v1693, %v2218
    %v2221 = vmul.f32 %v1694, %v2218
    %v2224 = vrot.slane %v2220, 1
    %v2225 = vrot.slane %v2221, 1
    %v2226 = vsel %vm349, %v2224, %v2225
    %2227 = vrot.lane.b32.xlu0 %v2226, 125
    %v2228 = vpop.permute.xlu0 %2227
    %2229 = vrot.lane.b32.xlu0 %v2225, 125
    %v2230 = vpop.permute.xlu0 %2229
    %v2233 = vadd.f32 %v2173, %v2228
    %v2234 = vadd.f32 %v2174, %v2230
    %v2235 = vperm.slane %v109, 0
    %v2236 = vmul.f32 %v1693, %v2235
    %v2237 = vmul.f32 %v1694, %v2235
    %v2240 = vrot.slane %v2236, 2
    %v2241 = vrot.slane %v2237, 2
    %v2242 = vsel %vm522, %v2240, %v2241
    %v2245 = vadd.f32 %v2193, %v2242
    %v2246 = vadd.f32 %v2194, %v2241
    %v2247 = vperm.slane %v111, 0
    %v2248 = vmul.f32 %v1693, %v2247
    %v2249 = vmul.f32 %v1694, %v2247
    %v2252 = vrot.slane %v2248, 2
    %v2253 = vrot.slane %v2249, 2
    %v2254 = vsel %vm522, %v2252, %v2253
    %v2257 = vadd.f32 %v2213, %v2254
    %v2258 = vadd.f32 %v2214, %v2253
    %v2259 = vperm.slane %v113, 0
    %v2260 = vmul.f32 %v1693, %v2259
    %v2261 = vmul.f32 %v1694, %v2259
    %v2264 = vrot.slane %v2260, 2
    %v2265 = vrot.slane %v2261, 2
    %v2266 = vsel %vm522, %v2264, %v2265
    %v2269 = vadd.f32 %v2233, %v2266
    %v2270 = vadd.f32 %v2234, %v2265
    %v2271 = vperm.slane %v109, 1
    %2273 = vrot.lane.b32.xlu0 %v2271, 1
    %v2274 = vpop.permute.xlu0 %2273
    %v2276 = vmul.f32 %v1693, %v2274
    %v2277 = vmul.f32 %v1694, %v2274
    %v2280 = vrot.slane %v2276, 2
    %v2281 = vrot.slane %v2277, 2
    %v2282 = vsel %vm522, %v2280, %v2281
    %2283 = vrot.lane.b32.xlu0 %v2282, 127
    %v2284 = vpop.permute.xlu0 %2283
    %2285 = vrot.lane.b32.xlu0 %v2281, 127
    %v2286 = vpop.permute.xlu0 %2285
    %v2289 = vadd.f32 %v2245, %v2284
    %v2290 = vadd.f32 %v2246, %v2286
    %v2291 = vperm.slane %v111, 1
    %2293 = vrot.lane.b32.xlu0 %v2291, 1
    %v2294 = vpop.permute.xlu0 %2293
    %v2296 = vmul.f32 %v1693, %v2294
    %v2297 = vmul.f32 %v1694, %v2294
    %v2300 = vrot.slane %v2296, 2
    %v2301 = vrot.slane %v2297, 2
    %v2302 = vsel %vm522, %v2300, %v2301
    %2303 = vrot.lane.b32.xlu0 %v2302, 127
    %v2304 = vpop.permute.xlu0 %2303
    %2305 = vrot.lane.b32.xlu0 %v2301, 127
    %v2306 = vpop.permute.xlu0 %2305
    %v2309 = vadd.f32 %v2257, %v2304
    %v2310 = vadd.f32 %v2258, %v2306
    %v2311 = vperm.slane %v113, 1
    %2313 = vrot.lane.b32.xlu0 %v2311, 1
    %v2314 = vpop.permute.xlu0 %2313
    %v2316 = vmul.f32 %v1693, %v2314
    %v2317 = vmul.f32 %v1694, %v2314
    %v2320 = vrot.slane %v2316, 2
    %v2321 = vrot.slane %v2317, 2
    %v2322 = vsel %vm522, %v2320, %v2321
    %2323 = vrot.lane.b32.xlu0 %v2322, 127
    %v2324 = vpop.permute.xlu0 %2323
    %2325 = vrot.lane.b32.xlu0 %v2321, 127
    %v2326 = vpop.permute.xlu0 %2325
    %v2329 = vadd.f32 %v2269, %v2324
    %v2330 = vadd.f32 %v2270, %v2326
    %v2331 = vperm.slane %v109, 2
    %2333 = vrot.lane.b32.xlu0 %v2331, 2
    %v2334 = vpop.permute.xlu0 %2333
    %v2336 = vmul.f32 %v1693, %v2334
    %v2337 = vmul.f32 %v1694, %v2334
    %v2340 = vrot.slane %v2336, 2
    %v2341 = vrot.slane %v2337, 2
    %v2342 = vsel %vm522, %v2340, %v2341
    %2343 = vrot.lane.b32.xlu0 %v2342, 126
    %v2344 = vpop.permute.xlu0 %2343
    %2345 = vrot.lane.b32.xlu0 %v2341, 126
    %v2346 = vpop.permute.xlu0 %2345
    %v2349 = vadd.f32 %v2289, %v2344
    %v2350 = vadd.f32 %v2290, %v2346
    %v2351 = vperm.slane %v111, 2
    %2353 = vrot.lane.b32.xlu0 %v2351, 2
    %v2354 = vpop.permute.xlu0 %2353
    %v2356 = vmul.f32 %v1693, %v2354
    %v2357 = vmul.f32 %v1694, %v2354
    %v2360 = vrot.slane %v2356, 2
    %v2361 = vrot.slane %v2357, 2
    %v2362 = vsel %vm522, %v2360, %v2361
    %2363 = vrot.lane.b32.xlu0 %v2362, 126
    %v2364 = vpop.permute.xlu0 %2363
    %2365 = vrot.lane.b32.xlu0 %v2361, 126
    %v2366 = vpop.permute.xlu0 %2365
    %v2369 = vadd.f32 %v2309, %v2364
    %v2370 = vadd.f32 %v2310, %v2366
    %v2371 = vperm.slane %v113, 2
    %2373 = vrot.lane.b32.xlu0 %v2371, 2
    %v2374 = vpop.permute.xlu0 %2373
    %v2376 = vmul.f32 %v1693, %v2374
    %v2377 = vmul.f32 %v1694, %v2374
    %v2380 = vrot.slane %v2376, 2
    %v2381 = vrot.slane %v2377, 2
    %v2382 = vsel %vm522, %v2380, %v2381
    %2383 = vrot.lane.b32.xlu0 %v2382, 126
    %v2384 = vpop.permute.xlu0 %2383
    %2385 = vrot.lane.b32.xlu0 %v2381, 126
    %v2386 = vpop.permute.xlu0 %2385
    %v2389 = vadd.f32 %v2329, %v2384
    %v2390 = vadd.f32 %v2330, %v2386
    %v2391 = vperm.slane %v109, 3
    %2393 = vrot.lane.b32.xlu0 %v2391, 3
    %v2394 = vpop.permute.xlu0 %2393
    %v2396 = vmul.f32 %v1693, %v2394
    %v2397 = vmul.f32 %v1694, %v2394
    %v2400 = vrot.slane %v2396, 2
    %v2401 = vrot.slane %v2397, 2
    %v2402 = vsel %vm522, %v2400, %v2401
    %2403 = vrot.lane.b32.xlu0 %v2402, 125
    %v2404 = vpop.permute.xlu0 %2403
    %2405 = vrot.lane.b32.xlu0 %v2401, 125
    %v2406 = vpop.permute.xlu0 %2405
    %v2409 = vadd.f32 %v2349, %v2404
    %v2410 = vadd.f32 %v2350, %v2406
    %v2411 = vperm.slane %v111, 3
    %2413 = vrot.lane.b32.xlu0 %v2411, 3
    %v2414 = vpop.permute.xlu0 %2413
    %v2416 = vmul.f32 %v1693, %v2414
    %v2417 = vmul.f32 %v1694, %v2414
    %v2420 = vrot.slane %v2416, 2
    %v2421 = vrot.slane %v2417, 2
    %v2422 = vsel %vm522, %v2420, %v2421
    %2423 = vrot.lane.b32.xlu0 %v2422, 125
    %v2424 = vpop.permute.xlu0 %2423
    %2425 = vrot.lane.b32.xlu0 %v2421, 125
    %v2426 = vpop.permute.xlu0 %2425
    %v2429 = vadd.f32 %v2369, %v2424
    %v2430 = vadd.f32 %v2370, %v2426
    %v2431 = vperm.slane %v113, 3
    %2433 = vrot.lane.b32.xlu0 %v2431, 3
    %v2434 = vpop.permute.xlu0 %2433
    %v2436 = vmul.f32 %v1693, %v2434
    %v2437 = vmul.f32 %v1694, %v2434
    %v2440 = vrot.slane %v2436, 2
    %v2441 = vrot.slane %v2437, 2
    %v2442 = vsel %vm522, %v2440, %v2441
    %2443 = vrot.lane.b32.xlu0 %v2442, 125
    %v2444 = vpop.permute.xlu0 %2443
    %2445 = vrot.lane.b32.xlu0 %v2441, 125
    %v2446 = vpop.permute.xlu0 %2445
    %v2449 = vadd.f32 %v2389, %v2444
    %v2450 = vadd.f32 %v2390, %v2446
    %v2451 = vperm.slane %v109, 4
    %v2452 = vmul.f32 %v1693, %v2451
    %v2453 = vmul.f32 %v1694, %v2451
    %vm2456 = vcmask 1044480
    %v2457 = vrot.slane %v2452, 3
    %v2458 = vrot.slane %v2453, 3
    %v2459 = vsel %vm2456, %v2457, %v2458
    %v2462 = vadd.f32 %v2409, %v2459
    %v2463 = vadd.f32 %v2410, %v2458
    %v2464 = vperm.slane %v111, 4
    %v2465 = vmul.f32 %v1693, %v2464
    %v2466 = vmul.f32 %v1694, %v2464
    %v2469 = vrot.slane %v2465, 3
    %v2470 = vrot.slane %v2466, 3
    %v2471 = vsel %vm2456, %v2469, %v2470
    %v2474 = vadd.f32 %v2429, %v2471
    %v2475 = vadd.f32 %v2430, %v2470
    %v2476 = vperm.slane %v113, 4
    %v2477 = vmul.f32 %v1693, %v2476
    %v2478 = vmul.f32 %v1694, %v2476
    %v2481 = vrot.slane %v2477, 3
    %v2482 = vrot.slane %v2478, 3
    %v2483 = vsel %vm2456, %v2481, %v2482
    %v2486 = vadd.f32 %v2449, %v2483
    %v2487 = vadd.f32 %v2450, %v2482
    %v2488 = vperm.slane %v109, 5
    %2490 = vrot.lane.b32.xlu0 %v2488, 1
    %v2491 = vpop.permute.xlu0 %2490
    %v2493 = vmul.f32 %v1693, %v2491
    %v2494 = vmul.f32 %v1694, %v2491
    %v2497 = vrot.slane %v2493, 3
    %v2498 = vrot.slane %v2494, 3
    %v2499 = vsel %vm2456, %v2497, %v2498
    %2500 = vrot.lane.b32.xlu0 %v2499, 127
    %v2501 = vpop.permute.xlu0 %2500
    %2502 = vrot.lane.b32.xlu0 %v2498, 127
    %v2503 = vpop.permute.xlu0 %2502
    %v2506 = vadd.f32 %v2462, %v2501
    %v2507 = vadd.f32 %v2463, %v2503
    %v2508 = vperm.slane %v111, 5
    %2510 = vrot.lane.b32.xlu0 %v2508, 1
    %v2511 = vpop.permute.xlu0 %2510
    %v2513 = vmul.f32 %v1693, %v2511
    %v2514 = vmul.f32 %v1694, %v2511
    %v2517 = vrot.slane %v2513, 3
    %v2518 = vrot.slane %v2514, 3
    %v2519 = vsel %vm2456, %v2517, %v2518
    %2520 = vrot.lane.b32.xlu0 %v2519, 127
    %v2521 = vpop.permute.xlu0 %2520
    %2522 = vrot.lane.b32.xlu0 %v2518, 127
    %v2523 = vpop.permute.xlu0 %2522
    %v2526 = vadd.f32 %v2474, %v2521
    %v2527 = vadd.f32 %v2475, %v2523
    %v2528 = vperm.slane %v113, 5
    %2530 = vrot.lane.b32.xlu0 %v2528, 1
    %v2531 = vpop.permute.xlu0 %2530
    %v2533 = vmul.f32 %v1693, %v2531
    %v2534 = vmul.f32 %v1694, %v2531
    %v2537 = vrot.slane %v2533, 3
    %v2538 = vrot.slane %v2534, 3
    %v2539 = vsel %vm2456, %v2537, %v2538
    %2540 = vrot.lane.b32.xlu0 %v2539, 127
    %v2541 = vpop.permute.xlu0 %2540
    %2542 = vrot.lane.b32.xlu0 %v2538, 127
    %v2543 = vpop.permute.xlu0 %2542
    %v2546 = vadd.f32 %v2486, %v2541
    %v2547 = vadd.f32 %v2487, %v2543
    %v2548 = vperm.slane %v109, 6
    %2550 = vrot.lane.b32.xlu0 %v2548, 2
    %v2551 = vpop.permute.xlu0 %2550
    %v2553 = vmul.f32 %v1693, %v2551
    %v2554 = vmul.f32 %v1694, %v2551
    %v2557 = vrot.slane %v2553, 3
    %v2558 = vrot.slane %v2554, 3
    %v2559 = vsel %vm2456, %v2557, %v2558
    %2560 = vrot.lane.b32.xlu0 %v2559, 126
    %v2561 = vpop.permute.xlu0 %2560
    %2562 = vrot.lane.b32.xlu0 %v2558, 126
    %v2563 = vpop.permute.xlu0 %2562
    %v2566 = vadd.f32 %v2506, %v2561
    %v2567 = vadd.f32 %v2507, %v2563
    %v2568 = vperm.slane %v111, 6
    %2570 = vrot.lane.b32.xlu0 %v2568, 2
    %v2571 = vpop.permute.xlu0 %2570
    %v2573 = vmul.f32 %v1693, %v2571
    %v2574 = vmul.f32 %v1694, %v2571
    %v2577 = vrot.slane %v2573, 3
    %v2578 = vrot.slane %v2574, 3
    %v2579 = vsel %vm2456, %v2577, %v2578
    %2580 = vrot.lane.b32.xlu0 %v2579, 126
    %v2581 = vpop.permute.xlu0 %2580
    %2582 = vrot.lane.b32.xlu0 %v2578, 126
    %v2583 = vpop.permute.xlu0 %2582
    %v2586 = vadd.f32 %v2526, %v2581
    %v2587 = vadd.f32 %v2527, %v2583
    %v2588 = vperm.slane %v113, 6
    %2590 = vrot.lane.b32.xlu0 %v2588, 2
    %v2591 = vpop.permute.xlu0 %2590
    %v2593 = vmul.f32 %v1693, %v2591
    %v2594 = vmul.f32 %v1694, %v2591
    %v2597 = vrot.slane %v2593, 3
    %v2598 = vrot.slane %v2594, 3
    %v2599 = vsel %vm2456, %v2597, %v2598
    %2600 = vrot.lane.b32.xlu0 %v2599, 126
    %v2601 = vpop.permute.xlu0 %2600
    %2602 = vrot.lane.b32.xlu0 %v2598, 126
    %v2603 = vpop.permute.xlu0 %2602
    %v2606 = vadd.f32 %v2546, %v2601
    %v2607 = vadd.f32 %v2547, %v2603
    %v2608 = vperm.slane %v109, 7
    %2610 = vrot.lane.b32.xlu0 %v2608, 3
    %v2611 = vpop.permute.xlu0 %2610
    %v2613 = vmul.f32 %v1693, %v2611
    %v2614 = vmul.f32 %v1694, %v2611
    %v2617 = vrot.slane %v2613, 3
    %v2618 = vrot.slane %v2614, 3
    %v2619 = vsel %vm2456, %v2617, %v2618
    %2620 = vrot.lane.b32.xlu0 %v2619, 125
    %v2621 = vpop.permute.xlu0 %2620
    %2622 = vrot.lane.b32.xlu0 %v2618, 125
    %v2623 = vpop.permute.xlu0 %2622
    %v2626 = vadd.f32 %v2566, %v2621
    %v2627 = vadd.f32 %v2567, %v2623
    %v2628 = vperm.slane %v111, 7
    %2630 = vrot.lane.b32.xlu0 %v2628, 3
    %v2631 = vpop.permute.xlu0 %2630
    %v2633 = vmul.f32 %v1693, %v2631
    %v2634 = vmul.f32 %v1694, %v2631
    %v2637 = vrot.slane %v2633, 3
    %v2638 = vrot.slane %v2634, 3
    %v2639 = vsel %vm2456, %v2637, %v2638
    %2640 = vrot.lane.b32.xlu0 %v2639, 125
    %v2641 = vpop.permute.xlu0 %2640
    %2642 = vrot.lane.b32.xlu0 %v2638, 125
    %v2643 = vpop.permute.xlu0 %2642
    %v2646 = vadd.f32 %v2586, %v2641
    %v2647 = vadd.f32 %v2587, %v2643
    %v2648 = vperm.slane %v113, 7
    %2650 = vrot.lane.b32.xlu0 %v2648, 3
    %v2651 = vpop.permute.xlu0 %2650
    %v2653 = vmul.f32 %v1693, %v2651
    %v2654 = vmul.f32 %v1694, %v2651
    %v2657 = vrot.slane %v2653, 3
    %v2658 = vrot.slane %v2654, 3
    %v2659 = vsel %vm2456, %v2657, %v2658
    %2660 = vrot.lane.b32.xlu0 %v2659, 125
    %v2661 = vpop.permute.xlu0 %2660
    %2662 = vrot.lane.b32.xlu0 %v2658, 125
    %v2663 = vpop.permute.xlu0 %2662
    %v2666 = vadd.f32 %v2606, %v2661
    %v2667 = vadd.f32 %v2607, %v2663
    %s2668 = sld [smem:[#allocation10]]
    %v2669 = vstv %s2668
    %vm2670 = vcmask 171008
    %v2672 = vsel %vm2670, %v2626, 0
    %v2675 = vsel %vm2670, %v2627, 0
    %v2678 = vsel %vm2456, %v129, 0
    %2680 = vmatpush.msra.mxu0 0.0
    %2681 = vmatpush.msra.mxu0 0.0
    %2682 = vmatpush.msra.mxu0 0.0
    %2683 = vmatpush.msra.mxu0 0.0
    %2684 = vmatpush.msra.mxu0 0.0
    %2685 = vmatpush.msra.mxu0 0.0
    %2686 = vmatpush.msra.mxu0 0.0
    %2687 = vmatpush.msra.mxu0 0.0
    %2688 = vmatpush.msra.mxu0 0.0
    %2689 = vmatpush.msra.mxu0 0.0
    %2690 = vmatpush.msra.mxu0 0.0
    %2691 = vmatpush.msra.mxu0 0.0
    %2692 = vmatpush.msra.mxu0 0.0
    %2693 = vmatpush.msra.mxu0 %v2678
    %2694 = vmatpush.msra.mxu0 %v128
    %2695 = vmatpush.msra.mxu0 %v127
    %2696 = vmatmul.f32.gmra.mxu0 %v2672
    %v2697 = vpop.f32.mrf.mxu0
    %v2698 = vadd.f32 %v2669, %v2697
    %2699 = vmatmul.f32.gmra.mxu0 %v2675
    %v2700 = vpop.f32.mrf.mxu0
    %v2701 = vadd.f32 %v2669, %v2700
    %2702 = vdwg.mxu0
    %v2703 = vmax.f32 %v2698, 0.0
    %v2704 = vmax.f32 %v2701, 0.0
    %v2707 = vrot.slane %v2703, 1
    %v2708 = vrot.slane %v2704, 1
    %v2709 = vsel %vm349, %v2707, %v2708
    %v2711 = vmax.f32 %v2703, %v2709
    %2713 = vrot.lane.b32.xlu0 %v2711, 127
    %v2714 = vpop.permute.xlu0 %2713
    %v2716 = vmax.f32 %v2711, %v2714
    %vm2717 = vcmask 64512
    %v2719 = vsel %vm2717, %v2716, 0
    %2721 = vmatpush.msra.mxu0 0.0
    %2722 = vmatpush.msra.mxu0 0.0
    %2723 = vmatpush.msra.mxu0 0.0
    %2724 = vmatpush.msra.mxu0 0.0
    %2725 = vmatpush.msra.mxu0 0.0
    %2726 = vmatpush.msra.mxu0 0.0
    %2727 = vmatpush.msra.mxu0 0.0
    %2728 = vmatpush.msra.mxu0 0.0
    %2729 = vmatpush.msra.mxu0 0.0
    %2730 = vmatpush.msra.mxu0 0.0
    %2731 = vmatpush.msra.mxu0 0.0
    %2732 = vmatpush.msra.mxu0 0.0
    %2733 = vmatpush.msra.mxu0 0.0
    %2734 = vmatpush.msra.mxu0 0.0
    %2735 = vmatpush.msra.mxu0 0.0
    %2736 = vmatpush.msra.mxu0 %v138
    %2737 = vmatmul.f32.gmra.mxu0 %v2719
    %v2738 = vpop.f32.mrf.mxu0
    %v2739 = vadd.f32 0.0, %v2738
    %2740 = vdwg.mxu0
    %vm2741 = vcmask 24576
    %2742 = vst.msk [vmem:[#allocation3] sm:$0x1] %vm2741, %v2739
    %2744 = vrot.lane.b32.xlu0 %v2739, 4
    %v2745 = vpop.permute.xlu0 %2744
    %vm2747 = vcmask 59426
    %2748 = vst.msk [vmem:[#allocation3 - $0x2] sm:$0x4] %vm2747, %v2745
    %2749 = vrot.lane.b32.xlu0 %v2739, 8
    %v2750 = vpop.permute.xlu0 %2749
    %vm2752 = vcmask 94276
    %2753 = vst.msk [vmem:[#allocation3 - $0x4] sm:$0x10] %vm2752, %v2750
    %2754 = vrot.lane.b32.xlu0 %v2739, 12
    %v2755 = vpop.permute.xlu0 %2754
    %vm2757 = vcmask 129126
    %2758 = vst.msk [vmem:[#allocation3 - $0x6] sm:$0x40] %vm2757, %v2755
    %s2759 = sld [smem:[#allocation10 + $0x1]]
    %v2760 = vstv %s2759
    %v2762 = vsel %vm2670, %v2646, 0
    %v2765 = vsel %vm2670, %v2647, 0
    %2767 = vmatpush.msra.mxu0 0.0
    %2768 = vmatpush.msra.mxu0 0.0
    %2769 = vmatpush.msra.mxu0 0.0
    %2770 = vmatpush.msra.mxu0 0.0
    %2771 = vmatpush.msra.mxu0 0.0
    %2772 = vmatpush.msra.mxu0 0.0
    %2773 = vmatpush.msra.mxu0 0.0
    %2774 = vmatpush.msra.mxu0 0.0
    %2775 = vmatpush.msra.mxu0 0.0
    %2776 = vmatpush.msra.mxu0 0.0
    %2777 = vmatpush.msra.mxu0 0.0
    %2778 = vmatpush.msra.mxu0 0.0
    %2779 = vmatpush.msra.mxu0 0.0
    %2780 = vmatpush.msra.mxu0 %v2678
    %2781 = vmatpush.msra.mxu0 %v128
    %2782 = vmatpush.msra.mxu0 %v127
    %2783 = vmatmul.f32.gmra.mxu0 %v2762
    %v2784 = vpop.f32.mrf.mxu0
    %v2785 = vadd.f32 %v2760, %v2784
    %2786 = vmatmul.f32.gmra.mxu0 %v2765
    %v2787 = vpop.f32.mrf.mxu0
    %v2788 = vadd.f32 %v2760, %v2787
    %2789 = vdwg.mxu0
    %v2790 = vmax.f32 %v2785, 0.0
    %v2791 = vmax.f32 %v2788, 0.0
    %v2794 = vrot.slane %v2790, 1
    %v2795 = vrot.slane %v2791, 1
    %v2796 = vsel %vm349, %v2794, %v2795
    %v2798 = vmax.f32 %v2790, %v2796
    %2800 = vrot.lane.b32.xlu0 %v2798, 127
    %v2801 = vpop.permute.xlu0 %2800
    %v2803 = vmax.f32 %v2798, %v2801
    %v2805 = vsel %vm2717, %v2803, 0
    %2807 = vmatpush.msra.mxu0 0.0
    %2808 = vmatpush.msra.mxu0 0.0
    %2809 = vmatpush.msra.mxu0 0.0
    %2810 = vmatpush.msra.mxu0 0.0
    %2811 = vmatpush.msra.mxu0 0.0
    %2812 = vmatpush.msra.mxu0 0.0
    %2813 = vmatpush.msra.mxu0 0.0
    %2814 = vmatpush.msra.mxu0 0.0
    %2815 = vmatpush.msra.mxu0 0.0
    %2816 = vmatpush.msra.mxu0 0.0
    %2817 = vmatpush.msra.mxu0 0.0
    %2818 = vmatpush.msra.mxu0 0.0
    %2819 = vmatpush.msra.mxu0 0.0
    %2820 = vmatpush.msra.mxu0 0.0
    %2821 = vmatpush.msra.mxu0 0.0
    %2822 = vmatpush.msra.mxu0 %v138
    %2823 = vmatmul.f32.gmra.mxu0 %v2805
    %v2824 = vpop.f32.mrf.mxu0
    %v2825 = vadd.f32 0.0, %v2824
    %2826 = vdwg.mxu0
    %2828 = vrot.lane.b32.xlu0 %v2825, 16
    %v2829 = vpop.permute.xlu0 %2828
    %vm2831 = vcmask 155776
    %2832 = vst.msk [vmem:[#allocation3] sm:$0x1] %vm2831, %v2829
    %2833 = vrot.lane.b32.xlu0 %v2825, 20
    %v2834 = vpop.permute.xlu0 %2833
    %vm2836 = vcmask 190626
    %2837 = vst.msk [vmem:[#allocation3 - $0x2] sm:$0x4] %vm2836, %v2834
    %2838 = vrot.lane.b32.xlu0 %v2825, 24
    %v2839 = vpop.permute.xlu0 %2838
    %vm2841 = vcmask 225476
    %2842 = vst.msk [vmem:[#allocation3 - $0x4] sm:$0x10] %vm2841, %v2839
    %2843 = vrot.lane.b32.xlu0 %v2825, 28
    %v2844 = vpop.permute.xlu0 %2843
    %vm2846 = vcmask 260326
    %2847 = vst.msk [vmem:[#allocation3 - $0x6] sm:$0x40] %vm2846, %v2844
    %s2848 = sld [smem:[#allocation10 + $0x2]]
    %v2849 = vstv %s2848
    %v2851 = vsel %vm2670, %v2666, 0
    %v2854 = vsel %vm2670, %v2667, 0
    %2856 = vmatpush.msra.mxu0 0.0
    %2857 = vmatpush.msra.mxu0 0.0
    %2858 = vmatpush.msra.mxu0 0.0
    %2859 = vmatpush.msra.mxu0 0.0
    %2860 = vmatpush.msra.mxu0 0.0
    %2861 = vmatpush.msra.mxu0 0.0
    %2862 = vmatpush.msra.mxu0 0.0
    %2863 = vmatpush.msra.mxu0 0.0
    %2864 = vmatpush.msra.mxu0 0.0
    %2865 = vmatpush.msra.mxu0 0.0
    %2866 = vmatpush.msra.mxu0 0.0
    %2867 = vmatpush.msra.mxu0 0.0
    %2868 = vmatpush.msra.mxu0 0.0
    %2869 = vmatpush.msra.mxu0 %v2678
    %2870 = vmatpush.msra.mxu0 %v128
    %2871 = vmatpush.msra.mxu0 %v127
    %2872 = vmatmul.f32.gmra.mxu0 %v2851
    %v2873 = vpop.f32.mrf.mxu0
    %v2874 = vadd.f32 %v2849, %v2873
    %2875 = vmatmul.f32.gmra.mxu0 %v2854
    %v2876 = vpop.f32.mrf.mxu0
    %v2877 = vadd.f32 %v2849, %v2876
    %2878 = vdwg.mxu0
    %v2879 = vmax.f32 %v2874, 0.0
    %v2880 = vmax.f32 %v2877, 0.0
    %v2883 = vrot.slane %v2879, 1
    %v2884 = vrot.slane %v2880, 1
    %v2885 = vsel %vm349, %v2883, %v2884
    %v2887 = vmax.f32 %v2879, %v2885
    %2889 = vrot.lane.b32.xlu0 %v2887, 127
    %v2890 = vpop.permute.xlu0 %2889
    %v2892 = vmax.f32 %v2887, %v2890
    %v2894 = vsel %vm2717, %v2892, 0
    %2896 = vmatpush.msra.mxu0 0.0
    %2897 = vmatpush.msra.mxu0 0.0
    %2898 = vmatpush.msra.mxu0 0.0
    %2899 = vmatpush.msra.mxu0 0.0
    %2900 = vmatpush.msra.mxu0 0.0
    %2901 = vmatpush.msra.mxu0 0.0
    %2902 = vmatpush.msra.mxu0 0.0
    %2903 = vmatpush.msra.mxu0 0.0
    %2904 = vmatpush.msra.mxu0 0.0
    %2905 = vmatpush.msra.mxu0 0.0
    %2906 = vmatpush.msra.mxu0 0.0
    %2907 = vmatpush.msra.mxu0 0.0
    %2908 = vmatpush.msra.mxu0 0.0
    %2909 = vmatpush.msra.mxu0 0.0
    %2910 = vmatpush.msra.mxu0 0.0
    %2911 = vmatpush.msra.mxu0 %v138
    %2912 = vmatmul.f32.gmra.mxu0 %v2894
    %v2913 = vpop.f32.mrf.mxu0
    %v2914 = vadd.f32 0.0, %v2913
    %2915 = vdwg.mxu0
    %2917 = vrot.lane.b32.xlu0 %v2914, 32
    %v2918 = vpop.permute.xlu0 %2917
    %vm2920 = vcmask 286976
    %2921 = vst.msk [vmem:[#allocation3] sm:$0x1] %vm2920, %v2918
    %2922 = vrot.lane.b32.xlu0 %v2914, 36
    %v2923 = vpop.permute.xlu0 %2922
    %vm2925 = vcmask 321826
    %2926 = vst.msk [vmem:[#allocation3 - $0x2] sm:$0x4] %vm2925, %v2923
    %2927 = vrot.lane.b32.xlu0 %v2914, 40
    %v2928 = vpop.permute.xlu0 %2927
    %vm2930 = vcmask 356676
    %2931 = vst.msk [vmem:[#allocation3 - $0x4] sm:$0x10] %vm2930, %v2928
    %2932 = vrot.lane.b32.xlu0 %v2914, 44
    %v2933 = vpop.permute.xlu0 %2932
    %vm2935 = vcmask 391526
    %2936 = vst.msk [vmem:[#allocation3 - $0x6] sm:$0x40] %vm2935, %v2933
    %v2937 = vmul.f32 %v1849, %v1851
    %v2938 = vmul.f32 %v1850, %v1851
    %v2939 = vadd.f32 %v2937, 0.0
    %v2940 = vadd.f32 %v2938, 0.0
    %v2941 = vmul.f32 %v1849, %v1856
    %v2942 = vmul.f32 %v1850, %v1856
    %v2943 = vadd.f32 %v2941, 0.0
    %v2944 = vadd.f32 %v2942, 0.0
    %v2945 = vmul.f32 %v1849, %v1861
    %v2946 = vmul.f32 %v1850, %v1861
    %v2947 = vadd.f32 %v2945, 0.0
    %v2948 = vadd.f32 %v2946, 0.0
    %v2949 = vmul.f32 %v1849, %v1869
    %v2950 = vmul.f32 %v1850, %v1869
    %2953 = vrot.lane.b32.xlu0 %v2949, 127
    %v2954 = vpop.permute.xlu0 %2953
    %2955 = vrot.lane.b32.xlu0 %v2950, 127
    %v2956 = vpop.permute.xlu0 %2955
    %v2959 = vadd.f32 %v2939, %v2954
    %v2960 = vadd.f32 %v2940, %v2956
    %v2961 = vmul.f32 %v1849, %v1886
    %v2962 = vmul.f32 %v1850, %v1886
    %2965 = vrot.lane.b32.xlu0 %v2961, 127
    %v2966 = vpop.permute.xlu0 %2965
    %2967 = vrot.lane.b32.xlu0 %v2962, 127
    %v2968 = vpop.permute.xlu0 %2967
    %v2971 = vadd.f32 %v2943, %v2966
    %v2972 = vadd.f32 %v2944, %v2968
    %v2973 = vmul.f32 %v1849, %v1903
    %v2974 = vmul.f32 %v1850, %v1903
    %2977 = vrot.lane.b32.xlu0 %v2973, 127
    %v2978 = vpop.permute.xlu0 %2977
    %2979 = vrot.lane.b32.xlu0 %v2974, 127
    %v2980 = vpop.permute.xlu0 %2979
    %v2983 = vadd.f32 %v2947, %v2978
    %v2984 = vadd.f32 %v2948, %v2980
    %v2985 = vmul.f32 %v1849, %v1920
    %v2986 = vmul.f32 %v1850, %v1920
    %2989 = vrot.lane.b32.xlu0 %v2985, 126
    %v2990 = vpop.permute.xlu0 %2989
    %2991 = vrot.lane.b32.xlu0 %v2986, 126
    %v2992 = vpop.permute.xlu0 %2991
    %v2995 = vadd.f32 %v2959, %v2990
    %v2996 = vadd.f32 %v2960, %v2992
    %v2997 = vmul.f32 %v1849, %v1937
    %v2998 = vmul.f32 %v1850, %v1937
    %3001 = vrot.lane.b32.xlu0 %v2997, 126
    %v3002 = vpop.permute.xlu0 %3001
    %3003 = vrot.lane.b32.xlu0 %v2998, 126
    %v3004 = vpop.permute.xlu0 %3003
    %v3007 = vadd.f32 %v2971, %v3002
    %v3008 = vadd.f32 %v2972, %v3004
    %v3009 = vmul.f32 %v1849, %v1954
    %v3010 = vmul.f32 %v1850, %v1954
    %3013 = vrot.lane.b32.xlu0 %v3009, 126
    %v3014 = vpop.permute.xlu0 %3013
    %3015 = vrot.lane.b32.xlu0 %v3010, 126
    %v3016 = vpop.permute.xlu0 %3015
    %v3019 = vadd.f32 %v2983, %v3014
    %v3020 = vadd.f32 %v2984, %v3016
    %v3021 = vmul.f32 %v1849, %v1971
    %v3022 = vmul.f32 %v1850, %v1971
    %3025 = vrot.lane.b32.xlu0 %v3021, 125
    %v3026 = vpop.permute.xlu0 %3025
    %3027 = vrot.lane.b32.xlu0 %v3022, 125
    %v3028 = vpop.permute.xlu0 %3027
    %v3031 = vadd.f32 %v2995, %v3026
    %v3032 = vadd.f32 %v2996, %v3028
    %v3033 = vmul.f32 %v1849, %v1988
    %v3034 = vmul.f32 %v1850, %v1988
    %3037 = vrot.lane.b32.xlu0 %v3033, 125
    %v3038 = vpop.permute.xlu0 %3037
    %3039 = vrot.lane.b32.xlu0 %v3034, 125
    %v3040 = vpop.permute.xlu0 %3039
    %v3043 = vadd.f32 %v3007, %v3038
    %v3044 = vadd.f32 %v3008, %v3040
    %v3045 = vmul.f32 %v1849, %v2005
    %v3046 = vmul.f32 %v1850, %v2005
    %3049 = vrot.lane.b32.xlu0 %v3045, 125
    %v3050 = vpop.permute.xlu0 %3049
    %3051 = vrot.lane.b32.xlu0 %v3046, 125
    %v3052 = vpop.permute.xlu0 %3051
    %v3055 = vadd.f32 %v3019, %v3050
    %v3056 = vadd.f32 %v3020, %v3052
    %v3057 = vmul.f32 %v1849, %v2019
    %v3058 = vmul.f32 %v1850, %v2019
    %v3061 = vrot.slane %v3057, 1
    %v3062 = vrot.slane %v3058, 1
    %v3063 = vsel %vm349, %v3061, %v3062
    %v3066 = vadd.f32 %v3031, %v3063
    %v3067 = vadd.f32 %v3032, %v3062
    %v3068 = vmul.f32 %v1849, %v2031
    %v3069 = vmul.f32 %v1850, %v2031
    %v3072 = vrot.slane %v3068, 1
    %v3073 = vrot.slane %v3069, 1
    %v3074 = vsel %vm349, %v3072, %v3073
    %v3077 = vadd.f32 %v3043, %v3074
    %v3078 = vadd.f32 %v3044, %v3073
    %v3079 = vmul.f32 %v1849, %v2043
    %v3080 = vmul.f32 %v1850, %v2043
    %v3083 = vrot.slane %v3079, 1
    %v3084 = vrot.slane %v3080, 1
    %v3085 = vsel %vm349, %v3083, %v3084
    %v3088 = vadd.f32 %v3055, %v3085
    %v3089 = vadd.f32 %v3056, %v3084
    %v3090 = vmul.f32 %v1849, %v2058
    %v3091 = vmul.f32 %v1850, %v2058
    %v3094 = vrot.slane %v3090, 1
    %v3095 = vrot.slane %v3091, 1
    %v3096 = vsel %vm349, %v3094, %v3095
    %3097 = vrot.lane.b32.xlu0 %v3096, 127
    %v3098 = vpop.permute.xlu0 %3097
    %3099 = vrot.lane.b32.xlu0 %v3095, 127
    %v3100 = vpop.permute.xlu0 %3099
    %v3103 = vadd.f32 %v3066, %v3098
    %v3104 = vadd.f32 %v3067, %v3100
    %v3105 = vmul.f32 %v1849, %v2078
    %v3106 = vmul.f32 %v1850, %v2078
    %v3109 = vrot.slane %v3105, 1
    %v3110 = vrot.slane %v3106, 1
    %v3111 = vsel %vm349, %v3109, %v3110
    %3112 = vrot.lane.b32.xlu0 %v3111, 127
    %v3113 = vpop.permute.xlu0 %3112
    %3114 = vrot.lane.b32.xlu0 %v3110, 127
    %v3115 = vpop.permute.xlu0 %3114
    %v3118 = vadd.f32 %v3077, %v3113
    %v3119 = vadd.f32 %v3078, %v3115
    %v3120 = vmul.f32 %v1849, %v2098
    %v3121 = vmul.f32 %v1850, %v2098
    %v3124 = vrot.slane %v3120, 1
    %v3125 = vrot.slane %v3121, 1
    %v3126 = vsel %vm349, %v3124, %v3125
    %3127 = vrot.lane.b32.xlu0 %v3126, 127
    %v3128 = vpop.permute.xlu0 %3127
    %3129 = vrot.lane.b32.xlu0 %v3125, 127
    %v3130 = vpop.permute.xlu0 %3129
    %v3133 = vadd.f32 %v3088, %v3128
    %v3134 = vadd.f32 %v3089, %v3130
    %v3135 = vmul.f32 %v1849, %v2118
    %v3136 = vmul.f32 %v1850, %v2118
    %v3139 = vrot.slane %v3135, 1
    %v3140 = vrot.slane %v3136, 1
    %v3141 = vsel %vm349, %v3139, %v3140
    %3142 = vrot.lane.b32.xlu0 %v3141, 126
    %v3143 = vpop.permute.xlu0 %3142
    %3144 = vrot.lane.b32.xlu0 %v3140, 126
    %v3145 = vpop.permute.xlu0 %3144
    %v3148 = vadd.f32 %v3103, %v3143
    %v3149 = vadd.f32 %v3104, %v3145
    %v3150 = vmul.f32 %v1849, %v2138
    %v3151 = vmul.f32 %v1850, %v2138
    %v3154 = vrot.slane %v3150, 1
    %v3155 = vrot.slane %v3151, 1
    %v3156 = vsel %vm349, %v3154, %v3155
    %3157 = vrot.lane.b32.xlu0 %v3156, 126
    %v3158 = vpop.permute.xlu0 %3157
    %3159 = vrot.lane.b32.xlu0 %v3155, 126
    %v3160 = vpop.permute.xlu0 %3159
    %v3163 = vadd.f32 %v3118, %v3158
    %v3164 = vadd.f32 %v3119, %v3160
    %v3165 = vmul.f32 %v1849, %v2158
    %v3166 = vmul.f32 %v1850, %v2158
    %v3169 = vrot.slane %v3165, 1
    %v3170 = vrot.slane %v3166, 1
    %v3171 = vsel %vm349, %v3169, %v3170
    %3172 = vrot.lane.b32.xlu0 %v3171, 126
    %v3173 = vpop.permute.xlu0 %3172
    %3174 = vrot.lane.b32.xlu0 %v3170, 126
    %v3175 = vpop.permute.xlu0 %3174
    %v3178 = vadd.f32 %v3133, %v3173
    %v3179 = vadd.f32 %v3134, %v3175
    %v3180 = vmul.f32 %v1849, %v2178
    %v3181 = vmul.f32 %v1850, %v2178
    %v3184 = vrot.slane %v3180, 1
    %v3185 = vrot.slane %v3181, 1
    %v3186 = vsel %vm349, %v3184, %v3185
    %3187 = vrot.lane.b32.xlu0 %v3186, 125
    %v3188 = vpop.permute.xlu0 %3187
    %3189 = vrot.lane.b32.xlu0 %v3185, 125
    %v3190 = vpop.permute.xlu0 %3189
    %v3193 = vadd.f32 %v3148, %v3188
    %v3194 = vadd.f32 %v3149, %v3190
    %v3195 = vmul.f32 %v1849, %v2198
    %v3196 = vmul.f32 %v1850, %v2198
    %v3199 = vrot.slane %v3195, 1
    %v3200 = vrot.slane %v3196, 1
    %v3201 = vsel %vm349, %v3199, %v3200
    %3202 = vrot.lane.b32.xlu0 %v3201, 125
    %v3203 = vpop.permute.xlu0 %3202
    %3204 = vrot.lane.b32.xlu0 %v3200, 125
    %v3205 = vpop.permute.xlu0 %3204
    %v3208 = vadd.f32 %v3163, %v3203
    %v3209 = vadd.f32 %v3164, %v3205
    %v3210 = vmul.f32 %v1849, %v2218
    %v3211 = vmul.f32 %v1850, %v2218
    %v3214 = vrot.slane %v3210, 1
    %v3215 = vrot.slane %v3211, 1
    %v3216 = vsel %vm349, %v3214, %v3215
    %3217 = vrot.lane.b32.xlu0 %v3216, 125
    %v3218 = vpop.permute.xlu0 %3217
    %3219 = vrot.lane.b32.xlu0 %v3215, 125
    %v3220 = vpop.permute.xlu0 %3219
    %v3223 = vadd.f32 %v3178, %v3218
    %v3224 = vadd.f32 %v3179, %v3220
    %v3225 = vmul.f32 %v1849, %v2235
    %v3226 = vmul.f32 %v1850, %v2235
    %v3229 = vrot.slane %v3225, 2
    %v3230 = vrot.slane %v3226, 2
    %v3231 = vsel %vm522, %v3229, %v3230
    %v3234 = vadd.f32 %v3193, %v3231
    %v3235 = vadd.f32 %v3194, %v3230
    %v3236 = vmul.f32 %v1849, %v2247
    %v3237 = vmul.f32 %v1850, %v2247
    %v3240 = vrot.slane %v3236, 2
    %v3241 = vrot.slane %v3237, 2
    %v3242 = vsel %vm522, %v3240, %v3241
    %v3245 = vadd.f32 %v3208, %v3242
    %v3246 = vadd.f32 %v3209, %v3241
    %v3247 = vmul.f32 %v1849, %v2259
    %v3248 = vmul.f32 %v1850, %v2259
    %v3251 = vrot.slane %v3247, 2
    %v3252 = vrot.slane %v3248, 2
    %v3253 = vsel %vm522, %v3251, %v3252
    %v3256 = vadd.f32 %v3223, %v3253
    %v3257 = vadd.f32 %v3224, %v3252
    %v3258 = vmul.f32 %v1849, %v2274
    %v3259 = vmul.f32 %v1850, %v2274
    %v3262 = vrot.slane %v3258, 2
    %v3263 = vrot.slane %v3259, 2
    %v3264 = vsel %vm522, %v3262, %v3263
    %3265 = vrot.lane.b32.xlu0 %v3264, 127
    %v3266 = vpop.permute.xlu0 %3265
    %3267 = vrot.lane.b32.xlu0 %v3263, 127
    %v3268 = vpop.permute.xlu0 %3267
    %v3271 = vadd.f32 %v3234, %v3266
    %v3272 = vadd.f32 %v3235, %v3268
    %v3273 = vmul.f32 %v1849, %v2294
    %v3274 = vmul.f32 %v1850, %v2294
    %v3277 = vrot.slane %v3273, 2
    %v3278 = vrot.slane %v3274, 2
    %v3279 = vsel %vm522, %v3277, %v3278
    %3280 = vrot.lane.b32.xlu0 %v3279, 127
    %v3281 = vpop.permute.xlu0 %3280
    %3282 = vrot.lane.b32.xlu0 %v3278, 127
    %v3283 = vpop.permute.xlu0 %3282
    %v3286 = vadd.f32 %v3245, %v3281
    %v3287 = vadd.f32 %v3246, %v3283
    %v3288 = vmul.f32 %v1849, %v2314
    %v3289 = vmul.f32 %v1850, %v2314
    %v3292 = vrot.slane %v3288, 2
    %v3293 = vrot.slane %v3289, 2
    %v3294 = vsel %vm522, %v3292, %v3293
    %3295 = vrot.lane.b32.xlu0 %v3294, 127
    %v3296 = vpop.permute.xlu0 %3295
    %3297 = vrot.lane.b32.xlu0 %v3293, 127
    %v3298 = vpop.permute.xlu0 %3297
    %v3301 = vadd.f32 %v3256, %v3296
    %v3302 = vadd.f32 %v3257, %v3298
    %v3303 = vmul.f32 %v1849, %v2334
    %v3304 = vmul.f32 %v1850, %v2334
    %v3307 = vrot.slane %v3303, 2
    %v3308 = vrot.slane %v3304, 2
    %v3309 = vsel %vm522, %v3307, %v3308
    %3310 = vrot.lane.b32.xlu0 %v3309, 126
    %v3311 = vpop.permute.xlu0 %3310
    %3312 = vrot.lane.b32.xlu0 %v3308, 126
    %v3313 = vpop.permute.xlu0 %3312
    %v3316 = vadd.f32 %v3271, %v3311
    %v3317 = vadd.f32 %v3272, %v3313
    %v3318 = vmul.f32 %v1849, %v2354
    %v3319 = vmul.f32 %v1850, %v2354
    %v3322 = vrot.slane %v3318, 2
    %v3323 = vrot.slane %v3319, 2
    %v3324 = vsel %vm522, %v3322, %v3323
    %3325 = vrot.lane.b32.xlu0 %v3324, 126
    %v3326 = vpop.permute.xlu0 %3325
    %3327 = vrot.lane.b32.xlu0 %v3323, 126
    %v3328 = vpop.permute.xlu0 %3327
    %v3331 = vadd.f32 %v3286, %v3326
    %v3332 = vadd.f32 %v3287, %v3328
    %v3333 = vmul.f32 %v1849, %v2374
    %v3334 = vmul.f32 %v1850, %v2374
    %v3337 = vrot.slane %v3333, 2
    %v3338 = vrot.slane %v3334, 2
    %v3339 = vsel %vm522, %v3337, %v3338
    %3340 = vrot.lane.b32.xlu0 %v3339, 126
    %v3341 = vpop.permute.xlu0 %3340
    %3342 = vrot.lane.b32.xlu0 %v3338, 126
    %v3343 = vpop.permute.xlu0 %3342
    %v3346 = vadd.f32 %v3301, %v3341
    %v3347 = vadd.f32 %v3302, %v3343
    %v3348 = vmul.f32 %v1849, %v2394
    %v3349 = vmul.f32 %v1850, %v2394
    %v3352 = vrot.slane %v3348, 2
    %v3353 = vrot.slane %v3349, 2
    %v3354 = vsel %vm522, %v3352, %v3353
    %3355 = vrot.lane.b32.xlu0 %v3354, 125
    %v3356 = vpop.permute.xlu0 %3355
    %3357 = vrot.lane.b32.xlu0 %v3353, 125
    %v3358 = vpop.permute.xlu0 %3357
    %v3361 = vadd.f32 %v3316, %v3356
    %v3362 = vadd.f32 %v3317, %v3358
    %v3363 = vmul.f32 %v1849, %v2414
    %v3364 = vmul.f32 %v1850, %v2414
    %v3367 = vrot.slane %v3363, 2
    %v3368 = vrot.slane %v3364, 2
    %v3369 = vsel %vm522, %v3367, %v3368
    %3370 = vrot.lane.b32.xlu0 %v3369, 125
    %v3371 = vpop.permute.xlu0 %3370
    %3372 = vrot.lane.b32.xlu0 %v3368, 125
    %v3373 = vpop.permute.xlu0 %3372
    %v3376 = vadd.f32 %v3331, %v3371
    %v3377 = vadd.f32 %v3332, %v3373
    %v3378 = vmul.f32 %v1849, %v2434
    %v3379 = vmul.f32 %v1850, %v2434
    %v3382 = vrot.slane %v3378, 2
    %v3383 = vrot.slane %v3379, 2
    %v3384 = vsel %vm522, %v3382, %v3383
    %3385 = vrot.lane.b32.xlu0 %v3384, 125
    %v3386 = vpop.permute.xlu0 %3385
    %3387 = vrot.lane.b32.xlu0 %v3383, 125
    %v3388 = vpop.permute.xlu0 %3387
    %v3391 = vadd.f32 %v3346, %v3386
    %v3392 = vadd.f32 %v3347, %v3388
    %v3393 = vmul.f32 %v1849, %v2451
    %v3394 = vmul.f32 %v1850, %v2451
    %v3397 = vrot.slane %v3393, 3
    %v3398 = vrot.slane %v3394, 3
    %v3399 = vsel %vm2456, %v3397, %v3398
    %v3402 = vadd.f32 %v3361, %v3399
    %v3403 = vadd.f32 %v3362, %v3398
    %v3404 = vmul.f32 %v1849, %v2464
    %v3405 = vmul.f32 %v1850, %v2464
    %v3408 = vrot.slane %v3404, 3
    %v3409 = vrot.slane %v3405, 3
    %v3410 = vsel %vm2456, %v3408, %v3409
    %v3413 = vadd.f32 %v3376, %v3410
    %v3414 = vadd.f32 %v3377, %v3409
    %v3415 = vmul.f32 %v1849, %v2476
    %v3416 = vmul.f32 %v1850, %v2476
    %v3419 = vrot.slane %v3415, 3
    %v3420 = vrot.slane %v3416, 3
    %v3421 = vsel %vm2456, %v3419, %v3420
    %v3424 = vadd.f32 %v3391, %v3421
    %v3425 = vadd.f32 %v3392, %v3420
    %v3426 = vmul.f32 %v1849, %v2491
    %v3427 = vmul.f32 %v1850, %v2491
    %v3430 = vrot.slane %v3426, 3
    %v3431 = vrot.slane %v3427, 3
    %v3432 = vsel %vm2456, %v3430, %v3431
    %3433 = vrot.lane.b32.xlu0 %v3432, 127
    %v3434 = vpop.permute.xlu0 %3433
    %3435 = vrot.lane.b32.xlu0 %v3431, 127
    %v3436 = vpop.permute.xlu0 %3435
    %v3439 = vadd.f32 %v3402, %v3434
    %v3440 = vadd.f32 %v3403, %v3436
    %v3441 = vmul.f32 %v1849, %v2511
    %v3442 = vmul.f32 %v1850, %v2511
    %v3445 = vrot.slane %v3441, 3
    %v3446 = vrot.slane %v3442, 3
    %v3447 = vsel %vm2456, %v3445, %v3446
    %3448 = vrot.lane.b32.xlu0 %v3447, 127
    %v3449 = vpop.permute.xlu0 %3448
    %3450 = vrot.lane.b32.xlu0 %v3446, 127
    %v3451 = vpop.permute.xlu0 %3450
    %v3454 = vadd.f32 %v3413, %v3449
    %v3455 = vadd.f32 %v3414, %v3451
    %v3456 = vmul.f32 %v1849, %v2531
    %v3457 = vmul.f32 %v1850, %v2531
    %v3460 = vrot.slane %v3456, 3
    %v3461 = vrot.slane %v3457, 3
    %v3462 = vsel %vm2456, %v3460, %v3461
    %3463 = vrot.lane.b32.xlu0 %v3462, 127
    %v3464 = vpop.permute.xlu0 %3463
    %3465 = vrot.lane.b32.xlu0 %v3461, 127
    %v3466 = vpop.permute.xlu0 %3465
    %v3469 = vadd.f32 %v3424, %v3464
    %v3470 = vadd.f32 %v3425, %v3466
    %v3471 = vmul.f32 %v1849, %v2551
    %v3472 = vmul.f32 %v1850, %v2551
    %v3475 = vrot.slane %v3471, 3
    %v3476 = vrot.slane %v3472, 3
    %v3477 = vsel %vm2456, %v3475, %v3476
    %3478 = vrot.lane.b32.xlu0 %v3477, 126
    %v3479 = vpop.permute.xlu0 %3478
    %3480 = vrot.lane.b32.xlu0 %v3476, 126
    %v3481 = vpop.permute.xlu0 %3480
    %v3484 = vadd.f32 %v3439, %v3479
    %v3485 = vadd.f32 %v3440, %v3481
    %v3486 = vmul.f32 %v1849, %v2571
    %v3487 = vmul.f32 %v1850, %v2571
    %v3490 = vrot.slane %v3486, 3
    %v3491 = vrot.slane %v3487, 3
    %v3492 = vsel %vm2456, %v3490, %v3491
    %3493 = vrot.lane.b32.xlu0 %v3492, 126
    %v3494 = vpop.permute.xlu0 %3493
    %3495 = vrot.lane.b32.xlu0 %v3491, 126
    %v3496 = vpop.permute.xlu0 %3495
    %v3499 = vadd.f32 %v3454, %v3494
    %v3500 = vadd.f32 %v3455, %v3496
    %v3501 = vmul.f32 %v1849, %v2591
    %v3502 = vmul.f32 %v1850, %v2591
    %v3505 = vrot.slane %v3501, 3
    %v3506 = vrot.slane %v3502, 3
    %v3507 = vsel %vm2456, %v3505, %v3506
    %3508 = vrot.lane.b32.xlu0 %v3507, 126
    %v3509 = vpop.permute.xlu0 %3508
    %3510 = vrot.lane.b32.xlu0 %v3506, 126
    %v3511 = vpop.permute.xlu0 %3510
    %v3514 = vadd.f32 %v3469, %v3509
    %v3515 = vadd.f32 %v3470, %v3511
    %v3516 = vmul.f32 %v1849, %v2611
    %v3517 = vmul.f32 %v1850, %v2611
    %v3520 = vrot.slane %v3516, 3
    %v3521 = vrot.slane %v3517, 3
    %v3522 = vsel %vm2456, %v3520, %v3521
    %3523 = vrot.lane.b32.xlu0 %v3522, 125
    %v3524 = vpop.permute.xlu0 %3523
    %3525 = vrot.lane.b32.xlu0 %v3521, 125
    %v3526 = vpop.permute.xlu0 %3525
    %v3529 = vadd.f32 %v3484, %v3524
    %v3530 = vadd.f32 %v3485, %v3526
    %v3531 = vmul.f32 %v1849, %v2631
    %v3532 = vmul.f32 %v1850, %v2631
    %v3535 = vrot.slane %v3531, 3
    %v3536 = vrot.slane %v3532, 3
    %v3537 = vsel %vm2456, %v3535, %v3536
    %3538 = vrot.lane.b32.xlu0 %v3537, 125
    %v3539 = vpop.permute.xlu0 %3538
    %3540 = vrot.lane.b32.xlu0 %v3536, 125
    %v3541 = vpop.permute.xlu0 %3540
    %v3544 = vadd.f32 %v3499, %v3539
    %v3545 = vadd.f32 %v3500, %v3541
    %v3546 = vmul.f32 %v1849, %v2651
    %v3547 = vmul.f32 %v1850, %v2651
    %v3550 = vrot.slane %v3546, 3
    %v3551 = vrot.slane %v3547, 3
    %v3552 = vsel %vm2456, %v3550, %v3551
    %3553 = vrot.lane.b32.xlu0 %v3552, 125
    %v3554 = vpop.permute.xlu0 %3553
    %3555 = vrot.lane.b32.xlu0 %v3551, 125
    %v3556 = vpop.permute.xlu0 %3555
    %v3559 = vadd.f32 %v3514, %v3554
    %v3560 = vadd.f32 %v3515, %v3556
    %s3561 = sld [smem:[#allocation10]]
    %v3562 = vstv %s3561
    %v3564 = vsel %vm2670, %v3529, 0
    %v3567 = vsel %vm2670, %v3530, 0
    %3569 = vmatpush.msra.mxu0 0.0
    %3570 = vmatpush.msra.mxu0 0.0
    %3571 = vmatpush.msra.mxu0 0.0
    %3572 = vmatpush.msra.mxu0 0.0
    %3573 = vmatpush.msra.mxu0 0.0
    %3574 = vmatpush.msra.mxu0 0.0
    %3575 = vmatpush.msra.mxu0 0.0
    %3576 = vmatpush.msra.mxu0 0.0
    %3577 = vmatpush.msra.mxu0 0.0
    %3578 = vmatpush.msra.mxu0 0.0
    %3579 = vmatpush.msra.mxu0 0.0
    %3580 = vmatpush.msra.mxu0 0.0
    %3581 = vmatpush.msra.mxu0 0.0
    %3582 = vmatpush.msra.mxu0 %v2678
    %3583 = vmatpush.msra.mxu0 %v128
    %3584 = vmatpush.msra.mxu0 %v127
    %3585 = vmatmul.f32.gmra.mxu0 %v3564
    %v3586 = vpop.f32.mrf.mxu0
    %v3587 = vadd.f32 %v3562, %v3586
    %3588 = vmatmul.f32.gmra.mxu0 %v3567
    %v3589 = vpop.f32.mrf.mxu0
    %v3590 = vadd.f32 %v3562, %v3589
    %3591 = vdwg.mxu0
    %v3592 = vmax.f32 %v3587, 0.0
    %v3593 = vmax.f32 %v3590, 0.0
    %v3596 = vrot.slane %v3592, 1
    %v3597 = vrot.slane %v3593, 1
    %v3598 = vsel %vm349, %v3596, %v3597
    %v3600 = vmax.f32 %v3592, %v3598
    %3602 = vrot.lane.b32.xlu0 %v3600, 127
    %v3603 = vpop.permute.xlu0 %3602
    %v3605 = vmax.f32 %v3600, %v3603
    %v3607 = vsel %vm2717, %v3605, 0
    %3609 = vmatpush.msra.mxu0 0.0
    %3610 = vmatpush.msra.mxu0 0.0
    %3611 = vmatpush.msra.mxu0 0.0
    %3612 = vmatpush.msra.mxu0 0.0
    %3613 = vmatpush.msra.mxu0 0.0
    %3614 = vmatpush.msra.mxu0 0.0
    %3615 = vmatpush.msra.mxu0 0.0
    %3616 = vmatpush.msra.mxu0 0.0
    %3617 = vmatpush.msra.mxu0 0.0
    %3618 = vmatpush.msra.mxu0 0.0
    %3619 = vmatpush.msra.mxu0 0.0
    %3620 = vmatpush.msra.mxu0 0.0
    %3621 = vmatpush.msra.mxu0 0.0
    %3622 = vmatpush.msra.mxu0 0.0
    %3623 = vmatpush.msra.mxu0 0.0
    %3624 = vmatpush.msra.mxu0 %v138
    %3625 = vmatmul.f32.gmra.mxu0 %v3607
    %v3626 = vpop.f32.mrf.mxu0
    %v3627 = vadd.f32 0.0, %v3626
    %3628 = vdwg.mxu0
    %3629 = vst.msk [vmem:[#allocation3 + $0x1] sm:$0x1] %vm2741, %v3627
    %3631 = vrot.lane.b32.xlu0 %v3627, 4
    %v3632 = vpop.permute.xlu0 %3631
    %3634 = vst.msk [vmem:[#allocation3 - $0x1] sm:$0x4] %vm2747, %v3632
    %3635 = vrot.lane.b32.xlu0 %v3627, 8
    %v3636 = vpop.permute.xlu0 %3635
    %3638 = vst.msk [vmem:[#allocation3 - $0x3] sm:$0x10] %vm2752, %v3636
    %3639 = vrot.lane.b32.xlu0 %v3627, 12
    %v3640 = vpop.permute.xlu0 %3639
    %3642 = vst.msk [vmem:[#allocation3 - $0x5] sm:$0x40] %vm2757, %v3640
    %s3643 = sld [smem:[#allocation10 + $0x1]]
    %v3644 = vstv %s3643
    %v3646 = vsel %vm2670, %v3544, 0
    %v3649 = vsel %vm2670, %v3545, 0
    %3651 = vmatpush.msra.mxu0 0.0
    %3652 = vmatpush.msra.mxu0 0.0
    %3653 = vmatpush.msra.mxu0 0.0
    %3654 = vmatpush.msra.mxu0 0.0
    %3655 = vmatpush.msra.mxu0 0.0
    %3656 = vmatpush.msra.mxu0 0.0
    %3657 = vmatpush.msra.mxu0 0.0
    %3658 = vmatpush.msra.mxu0 0.0
    %3659 = vmatpush.msra.mxu0 0.0
    %3660 = vmatpush.msra.mxu0 0.0
    %3661 = vmatpush.msra.mxu0 0.0
    %3662 = vmatpush.msra.mxu0 0.0
    %3663 = vmatpush.msra.mxu0 0.0
    %3664 = vmatpush.msra.mxu0 %v2678
    %3665 = vmatpush.msra.mxu0 %v128
    %3666 = vmatpush.msra.mxu0 %v127
    %3667 = vmatmul.f32.gmra.mxu0 %v3646
    %v3668 = vpop.f32.mrf.mxu0
    %v3669 = vadd.f32 %v3644, %v3668
    %3670 = vmatmul.f32.gmra.mxu0 %v3649
    %v3671 = vpop.f32.mrf.mxu0
    %v3672 = vadd.f32 %v3644, %v3671
    %3673 = vdwg.mxu0
    %v3674 = vmax.f32 %v3669, 0.0
    %v3675 = vmax.f32 %v3672, 0.0
    %v3678 = vrot.slane %v3674, 1
    %v3679 = vrot.slane %v3675, 1
    %v3680 = vsel %vm349, %v3678, %v3679
    %v3682 = vmax.f32 %v3674, %v3680
    %3684 = vrot.lane.b32.xlu0 %v3682, 127
    %v3685 = vpop.permute.xlu0 %3684
    %v3687 = vmax.f32 %v3682, %v3685
    %v3689 = vsel %vm2717, %v3687, 0
    %3691 = vmatpush.msra.mxu0 0.0
    %3692 = vmatpush.msra.mxu0 0.0
    %3693 = vmatpush.msra.mxu0 0.0
    %3694 = vmatpush.msra.mxu0 0.0
    %3695 = vmatpush.msra.mxu0 0.0
    %3696 = vmatpush.msra.mxu0 0.0
    %3697 = vmatpush.msra.mxu0 0.0
    %3698 = vmatpush.msra.mxu0 0.0
    %3699 = vmatpush.msra.mxu0 0.0
    %3700 = vmatpush.msra.mxu0 0.0
    %3701 = vmatpush.msra.mxu0 0.0
    %3702 = vmatpush.msra.mxu0 0.0
    %3703 = vmatpush.msra.mxu0 0.0
    %3704 = vmatpush.msra.mxu0 0.0
    %3705 = vmatpush.msra.mxu0 0.0
    %3706 = vmatpush.msra.mxu0 %v138
    %3707 = vmatmul.f32.gmra.mxu0 %v3689
    %v3708 = vpop.f32.mrf.mxu0
    %v3709 = vadd.f32 0.0, %v3708
    %3710 = vdwg.mxu0
    %3712 = vrot.lane.b32.xlu0 %v3709, 16
    %v3713 = vpop.permute.xlu0 %3712
    %3715 = vst.msk [vmem:[#allocation3 + $0x1] sm:$0x1] %vm2831, %v3713
    %3716 = vrot.lane.b32.xlu0 %v3709, 20
    %v3717 = vpop.permute.xlu0 %3716
    %3719 = vst.msk [vmem:[#allocation3 - $0x1] sm:$0x4] %vm2836, %v3717
    %3720 = vrot.lane.b32.xlu0 %v3709, 24
    %v3721 = vpop.permute.xlu0 %3720
    %3723 = vst.msk [vmem:[#allocation3 - $0x3] sm:$0x10] %vm2841, %v3721
    %3724 = vrot.lane.b32.xlu0 %v3709, 28
    %v3725 = vpop.permute.xlu0 %3724
    %3727 = vst.msk [vmem:[#allocation3 - $0x5] sm:$0x40] %vm2846, %v3725
    %s3728 = sld [smem:[#allocation10 + $0x2]]
    %v3729 = vstv %s3728
    %v3731 = vsel %vm2670, %v3559, 0
    %v3734 = vsel %vm2670, %v3560, 0
    %3736 = vmatpush.msra.mxu0 0.0
    %3737 = vmatpush.msra.mxu0 0.0
    %3738 = vmatpush.msra.mxu0 0.0
    %3739 = vmatpush.msra.mxu0 0.0
    %3740 = vmatpush.msra.mxu0 0.0
    %3741 = vmatpush.msra.mxu0 0.0
    %3742 = vmatpush.msra.mxu0 0.0
    %3743 = vmatpush.msra.mxu0 0.0
    %3744 = vmatpush.msra.mxu0 0.0
    %3745 = vmatpush.msra.mxu0 0.0
    %3746 = vmatpush.msra.mxu0 0.0
    %3747 = vmatpush.msra.mxu0 0.0
    %3748 = vmatpush.msra.mxu0 0.0
    %3749 = vmatpush.msra.mxu0 %v2678
    %3750 = vmatpush.msra.mxu0 %v128
    %3751 = vmatpush.msra.mxu0 %v127
    %3752 = vmatmul.f32.gmra.mxu0 %v3731
    %v3753 = vpop.f32.mrf.mxu0
    %v3754 = vadd.f32 %v3729, %v3753
    %3755 = vmatmul.f32.gmra.mxu0 %v3734
    %v3756 = vpop.f32.mrf.mxu0
    %v3757 = vadd.f32 %v3729, %v3756
    %3758 = vdwg.mxu0
    %v3759 = vmax.f32 %v3754, 0.0
    %v3760 = vmax.f32 %v3757, 0.0
    %v3763 = vrot.slane %v3759, 1
    %v3764 = vrot.slane %v3760, 1
    %v3765 = vsel %vm349, %v3763, %v3764
    %v3767 = vmax.f32 %v3759, %v3765
    %3769 = vrot.lane.b32.xlu0 %v3767, 127
    %v3770 = vpop.permute.xlu0 %3769
    %v3772 = vmax.f32 %v3767, %v3770
    %v3774 = vsel %vm2717, %v3772, 0
    %3776 = vmatpush.msra.mxu0 0.0
    %3777 = vmatpush.msra.mxu0 0.0
    %3778 = vmatpush.msra.mxu0 0.0
    %3779 = vmatpush.msra.mxu0 0.0
    %3780 = vmatpush.msra.mxu0 0.0
    %3781 = vmatpush.msra.mxu0 0.0
    %3782 = vmatpush.msra.mxu0 0.0
    %3783 = vmatpush.msra.mxu0 0.0
    %3784 = vmatpush.msra.mxu0 0.0
    %3785 = vmatpush.msra.mxu0 0.0
    %3786 = vmatpush.msra.mxu0 0.0
    %3787 = vmatpush.msra.mxu0 0.0
    %3788 = vmatpush.msra.mxu0 0.0
    %3789 = vmatpush.msra.mxu0 0.0
    %3790 = vmatpush.msra.mxu0 0.0
    %3791 = vmatpush.msra.mxu0 %v138
    %3792 = vmatmul.f32.gmra.mxu0 %v3774
    %v3793 = vpop.f32.mrf.mxu0
    %v3794 = vadd.f32 0.0, %v3793
    %3795 = vdwg.mxu0
    %3797 = vrot.lane.b32.xlu0 %v3794, 32
    %v3798 = vpop.permute.xlu0 %3797
    %3800 = vst.msk [vmem:[#allocation3 + $0x1] sm:$0x1] %vm2920, %v3798
    %3801 = vrot.lane.b32.xlu0 %v3794, 36
    %v3802 = vpop.permute.xlu0 %3801
    %3804 = vst.msk [vmem:[#allocation3 - $0x1] sm:$0x4] %vm2925, %v3802
    %3805 = vrot.lane.b32.xlu0 %v3794, 40
    %v3806 = vpop.permute.xlu0 %3805
    %3808 = vst.msk [vmem:[#allocation3 - $0x3] sm:$0x10] %vm2930, %v3806
    %3809 = vrot.lane.b32.xlu0 %v3794, 44
    %v3810 = vpop.permute.xlu0 %3809
    %3812 = vst.msk [vmem:[#allocation3 - $0x5] sm:$0x40] %vm2935, %v3810
    %v3813 = vld [vmem:[#allocation3] sm:$0x3]
    %v3814 = vld [vmem:[%s9] sm:$0xff]
    %v3815 = vld [vmem:[%s9 + $0x8] sm:$0xff]
    %v3816 = vld [vmem:[%s9 + $0x10] sm:$0xff]
    %v3817 = vld [vmem:[%s9 + $0x18] sm:$0xff]
    %v3818 = vld [vmem:[%s9 + $0x20] sm:$0xff]
    %v3819 = vld [vmem:[%s9 + $0x28] sm:$0xff]
    %v3820 = vld [vmem:[%s10] sm:$0x1]
    %v3822 = vperm.slane %v3820, 0
    %vm3824 = vcmask 392192
    %v3826 = vsel %vm3824, %v3813, 0
    %3828 = vmatpush.msra.mxu0 0.0
    %3829 = vmatpush.msra.mxu0 0.0
    %3830 = vmatpush.msra.mxu0 0.0
    %3831 = vmatpush.msra.mxu0 0.0
    %3832 = vmatpush.msra.mxu0 0.0
    %3833 = vmatpush.msra.mxu0 0.0
    %3834 = vmatpush.msra.mxu0 0.0
    %3835 = vmatpush.msra.mxu0 0.0
    %3836 = vmatpush.msra.mxu0 0.0
    %3837 = vmatpush.msra.mxu0 0.0
    %3838 = vmatpush.msra.mxu0 %v3819
    %3839 = vmatpush.msra.mxu0 %v3818
    %3840 = vmatpush.msra.mxu0 %v3817
    %3841 = vmatpush.msra.mxu0 %v3816
    %3842 = vmatpush.msra.mxu0 %v3815
    %3843 = vmatpush.msra.mxu0 %v3814
    %3844 = vmatmul.f32.gmra.mxu0 %v3826
    %v3845 = vpop.f32.mrf.mxu0
    %v3846 = vadd.f32 %v3822, %v3845
    %3847 = vdwg.mxu0
    %v3848 = vmax.f32 %v3846, 0.0
    %v3849 = vld [vmem:[%s11] sm:$0xff]
    %v3850 = vld [vmem:[%s12] sm:$0x1]
    %v3852 = vperm.slane %v3850, 0
    %v3855 = vsel %vm2717, %v3848, 0
    %3857 = vmatpush.msra.mxu0 0.0
    %3858 = vmatpush.msra.mxu0 0.0
    %3859 = vmatpush.msra.mxu0 0.0
    %3860 = vmatpush.msra.mxu0 0.0
    %3861 = vmatpush.msra.mxu0 0.0
    %3862 = vmatpush.msra.mxu0 0.0
    %3863 = vmatpush.msra.mxu0 0.0
    %3864 = vmatpush.msra.mxu0 0.0
    %3865 = vmatpush.msra.mxu0 0.0
    %3866 = vmatpush.msra.mxu0 0.0
    %3867 = vmatpush.msra.mxu0 0.0
    %3868 = vmatpush.msra.mxu0 0.0
    %3869 = vmatpush.msra.mxu0 0.0
    %3870 = vmatpush.msra.mxu0 0.0
    %3871 = vmatpush.msra.mxu0 0.0
    %3872 = vmatpush.msra.mxu0 %v3849
    %3873 = vmatmul.f32.gmra.mxu0 %v3855
    %v3874 = vpop.f32.mrf.mxu0
    %v3875 = vadd.f32 %v3852, %v3874
    %3876 = vdwg.mxu0
    %vm3877 = vcmask 74752
    %3878 = vst.msk [vmem:[#allocation12] sm:$0x3] %vm3877, %v3875
    // Predicated region
    $region86: #{convbn_forward.1} parent=1 // pred_check
      _
    $region87: #{convbn_forward.1} parent=1 // pred_check_branch
      %3880 = sbr.rel (0) target = $region89
    $region88: #{convbn_forward.1} parent=1 // pred_region
      %3882 = vsyncadd [#allocation5], 0
      %s3884 = sshll.u32 [#allocation12], 4
      %s3885 = int_to_ptr.vmem [resolvable:$true] %s3884
      %s3886 = sshll.u32 %s17, 4
      %s3887 = int_to_ptr.hbm [resolvable:$true] %s3886
      %3889 = dma.vmem_to_hbm [thread:$0]  %s3885, 32, %s3887, [#allocation5]
    $region89: #{convbn_forward.1} parent=1 // pred_fallthru
      _
    // Predicated region
    $region90: #{convbn_forward.1} parent=1 // pred_check
      _
    $region91: #{convbn_forward.1} parent=1 // pred_check_branch
      %3891 = sbr.rel (0) target = $region93
    $region92: #{convbn_forward.1} parent=1 // pred_region
      %3893 = dma.done [#allocation5], 32
    $region93: #{convbn_forward.1} parent=1 // pred_fallthru
      _
    %3894 = vsyncpa [#allocation5], 1
    %3895 = vsyncpa [#allocation6], 1
    %3896 = vsyncpa [#allocation8], 1
    %3897 = vsyncpa [#allocation11], 1

</llo_original>
